<compile_context>
chip_gen: v6e
topology: v6e:2x2x1
jax: 0.10.0
libtpu: 0.0.40
codegen_flags: <defaults>
</compile_context>

<pallas_src>
import functools

import jax
import jax.numpy as jnp
from jax.experimental import pallas as pl
from jax.experimental.pallas import tpu as pltpu


LANE = 128  # TPU lane width; channel dims are padded to this for dense loads/stores.


def _round_up(x, m):
    return (x + m - 1) // m * m


# ----------------------------- Pallas kernel --------------------------------

def _custom_block_kernel(xc_ref, w0_ref, p_ref, w1_ref, w2_ref, bn_ref, o_ref,
                         *, hw, skip):
    """Fully fused CustomBlock forward for one image.

    xc_ref : (1, 4*hw, K0p) bf16  im2col of the input; rows grouped by the four
                                  2x2 maxpool offsets (group p = rows [p*hw,(p+1)*hw)).
    w0_ref : (K0p, Cp)      bf16  conv0 weight as a matmul operand.
    p_ref  : (9, hw, hw)    bf16  0/1 gather matrices: p_ref[3*a+b] @ v is the (a, b)
                                  tap of a 3x3 / pad-1 conv on the row-major flattened
                                  (Ho, Wo) image v (zero padding baked into the rows).
    w1_ref : (9, Cp, Cp)    bf16  BasicBlock conv1 weight, per tap.
    w2_ref : (9, Cp, Cp)    bf16  BasicBlock conv2 weight, per tap.
    bn_ref : (6, 1, Cp)     f32   folded BN [s0, b0, s1, b1, s2, b2].
    o_ref  : (1, hw, Cp)    f32   output (lane-dense, Cp = 128-padded channels).
    """
    # --- self.conv: Conv3x3 (one bf16 MXU matmul) -> MaxPool2 -> BN -> ReLU ----
    y = jnp.dot(xc_ref[0], w0_ref[...], preferred_element_type=jnp.float32)   # (4*hw, Cp)
    y = jnp.maximum(jnp.maximum(y[0 * hw:1 * hw], y[1 * hw:2 * hw]),
                    jnp.maximum(y[2 * hw:3 * hw], y[3 * hw:4 * hw]))           # (hw, Cp)
    x1 = jnp.maximum(y * bn_ref[0] + bn_ref[1], 0.0)                           # f32

    if not skip:
        o_ref[0] = x1.astype(o_ref.dtype)
        return

    def conv3x3(v, w_ref):
        """3x3 / pad-1 conv of the in-VMEM image v (hw, Cp) via gather matmuls."""
        v_bf = v.astype(jnp.bfloat16)
        acc = jnp.zeros_like(v)                                                # f32
        for t in range(9):
            # 0/1 gather is exact in bf16/f32, so the cast back to bf16 is lossless.
            patch = jnp.dot(p_ref[t], v_bf,
                            preferred_element_type=jnp.float32).astype(jnp.bfloat16)
            acc = acc + jnp.dot(patch, w_ref[t], preferred_element_type=jnp.float32)
        return acc

    # --- BasicBlock: h = relu(bn1(conv1(x1))); out = x1 + relu(bn2(conv2(h)) + x1)
    h = jnp.maximum(conv3x3(x1, w1_ref) * bn_ref[2] + bn_ref[3], 0.0)
    y2 = conv3x3(h, w2_ref) * bn_ref[4] + bn_ref[5]
    o_ref[0] = (x1 + jnp.maximum(y2 + x1, 0.0)).astype(o_ref.dtype)


# ----------------------------- pallas_call wrapper ---------------------------

def _fused_call(xc, w0, pmats, w1, w2, bn, *, hw, cp, skip):
    n = xc.shape[0]
    kernel = functools.partial(_custom_block_kernel, hw=hw, skip=skip)
    return pl.pallas_call(
        kernel,
        out_shape=jax.ShapeDtypeStruct((n, hw, cp), jnp.float32),
        grid=(n,),
        in_specs=[
            pl.BlockSpec((1, 4 * hw, xc.shape[-1]), lambda i: (i, 0, 0)),
            pl.BlockSpec(w0.shape, lambda i: (0, 0)),
            pl.BlockSpec(pmats.shape, lambda i: (0, 0, 0)),
            pl.BlockSpec(w1.shape, lambda i: (0, 0, 0)),
            pl.BlockSpec(w2.shape, lambda i: (0, 0, 0)),
            pl.BlockSpec(bn.shape, lambda i: (0, 0, 0)),
        ],
        out_specs=pl.BlockSpec((1, hw, cp), lambda i: (i, 0, 0)),
        compiler_params=pltpu.CompilerParams(
            dimension_semantics=("parallel",),
            # Explicit, ample headroom (~1 MiB of blocks used here); safe on
            # v5e/v6e/v7x.  Revisit when spatially tiling larger images.
            vmem_limit_bytes=32 * 1024 * 1024),
    )(xc, w0, pmats, w1, w2, bn)


# ----------------------------- JAX glue --------------------------------------

def _im2col_3x3(x):
    """(N, H, W, C) -> (N, H, W, 9*C), pad=1, patch order (kh, kw, c)."""
    n, h, w, c = x.shape
    xp = jnp.pad(x, ((0, 0), (1, 1), (1, 1), (0, 0)))
    cols = [xp[:, kh:kh + h, kw:kw + w, :] for kh in range(3) for kw in range(3)]
    return jnp.concatenate(cols, axis=-1)


def _pool_groups(col):
    """(N, H, W, K) -> (N, 4, Ho*Wo, K): rows for each 2x2 maxpool offset."""
    n, h, w, k = col.shape
    ho, wo = h // 2, w // 2
    groups = [col[:, dh::2, dw::2, :].reshape(n, 1, ho * wo, k)
              for dh in (0, 1) for dw in (0, 1)]
    return jnp.concatenate(groups, axis=1)


def _shift_gather_mats(ho, wo):
    """(9, hw, hw) 0/1 matrices implementing the 9 taps of a 3x3/pad-1 conv on a
    row-major flattened (ho, wo) image (zero padding baked in)."""
    hw = ho * wo
    k = jnp.arange(hw)
    i, j = k // wo, k % wo
    mats = []
    for a in range(3):
        for b in range(3):
            src = k + (a - 1) * wo + (b - 1)
            valid = ((i + a - 1 >= 0) & (i + a - 1 < ho) &
                     (j + b - 1 >= 0) & (j + b - 1 < wo))
            mats.append((src[:, None] == k[None, :]) & valid[:, None])
    return jnp.stack(mats).astype(jnp.bfloat16)


def custom_block_forward(x_nchw, params, skip_connection=True):
    """Pallas implementation of CustomBlock.forward (stride=1, eval-mode BN)."""
    x = jnp.transpose(x_nchw, (0, 2, 3, 1))            # NCHW -> NHWC
    n, h, w, cin = x.shape
    planes = params["w0"].shape[-1]
    ho, wo = h // 2, w // 2
    hw = ho * wo
    k0 = 9 * cin
    k0p = _round_up(k0, LANE)                           # lane-dense im2col operand
    cp = _round_up(planes, LANE)                        # lane-dense channels

    # im2col (+ 2x2 pool-offset grouping) is done only for the small Cin-channel
    # input of the first conv; the wide BasicBlock intermediates are never expanded
    # or written to HBM at all.
    xc = _pool_groups(_im2col_3x3(x)).reshape(n, 4 * hw, k0)
    xc = jnp.pad(xc, ((0, 0), (0, 0), (0, k0p - k0))).astype(jnp.bfloat16)

    w0 = jnp.pad(params["w0"].reshape(k0, planes),
                 ((0, k0p - k0), (0, cp - planes))).astype(jnp.bfloat16)

    def prep_w(name):  # (3,3,planes,planes) -> (9, Cp, Cp) bf16, zero-padded channels
        wv = params[name].reshape(9, planes, planes)
        return jnp.pad(wv, ((0, 0), (0, cp - planes), (0, cp - planes))).astype(jnp.bfloat16)

    w1, w2 = prep_w("w1"), prep_w("w2")

    def pad_c(v):
        return jnp.pad(v.reshape(-1), (0, cp - planes))

    bn = jnp.stack([pad_c(params["s0"]), pad_c(params["b0"]),
                    pad_c(params["s1"]), pad_c(params["b1"]),
                    pad_c(params["s2"]), pad_c(params["b2"])])
    bn = bn.reshape(6, 1, cp).astype(jnp.float32)

    pmats = _shift_gather_mats(ho, wo)

    out = _fused_call(xc, w0, pmats, w1, w2, bn, hw=hw, cp=cp, skip=skip_connection)
    out = out[..., :planes].reshape(n, ho, wo, planes)
    return jnp.transpose(out, (0, 3, 1, 2))             # back to NCHW


# ----------------------------- reference (pure JAX) ---------------------------

def reference_forward(x_nchw, params, skip_connection=True):
    """Pure-JAX reference with the same numerics policy as the kernel
    (bf16 conv inputs, f32 accumulation; BN/ReLU/residual in f32)."""
    x = jnp.transpose(x_nchw, (0, 2, 3, 1))

    def conv(t, w):
        return jax.lax.conv_general_dilated(
            t.astype(jnp.bfloat16), w.astype(jnp.bfloat16), (1, 1), ((1, 1), (1, 1)),
            dimension_numbers=("NHWC", "HWIO", "NHWC"),
            preferred_element_type=jnp.float32)

    def bn(t, s, b):
        return t * s.reshape(1, 1, 1, -1) + b.reshape(1, 1, 1, -1)

    y = conv(x, params["w0"])
    y = jax.lax.reduce_window(y, -jnp.inf, jax.lax.max,
                              (1, 2, 2, 1), (1, 2, 2, 1), "VALID")
    x1 = jax.nn.relu(bn(y, params["s0"], params["b0"]))
    if skip_connection:
        h = jax.nn.relu(bn(conv(x1, params["w1"]), params["s1"], params["b1"]))
        bb = jax.nn.relu(bn(conv(h, params["w2"]), params["s2"], params["b2"]) + x1)
        x1 = x1 + bb
    return jnp.transpose(x1, (0, 3, 1, 2))


# ----------------------------- parameter init ---------------------------------

def make_params(key, in_planes, planes):
    ks = jax.random.split(key, 6)

    def conv_w(k, cin, cout):
        return jax.random.normal(k, (3, 3, cin, cout), jnp.float32) / jnp.sqrt(9.0 * cin)

    def bn_fold(k, c):
        kg, kb, km, kv = jax.random.split(k, 4)
        gamma = 1.0 + 0.1 * jax.random.normal(kg, (c,), jnp.float32)
        beta = 0.1 * jax.random.normal(kb, (c,), jnp.float32)
        rmean = 0.1 * jax.random.normal(km, (c,), jnp.float32)
        rvar = 1.0 + jax.random.uniform(kv, (c,), jnp.float32)
        scale = gamma / jnp.sqrt(rvar + 1e-5)
        bias = beta - rmean * scale
        return scale.reshape(1, c), bias.reshape(1, c)

    s0, b0 = bn_fold(ks[1], planes)
    s1, b1 = bn_fold(ks[3], planes)
    s2, b2 = bn_fold(ks[5], planes)
    return dict(
        w0=conv_w(ks[0], in_planes, planes), s0=s0, b0=b0,
        w1=conv_w(ks[2], planes, planes), s1=s1, b1=b1,
        w2=conv_w(ks[4], planes, planes), s2=s2, b2=b2,
    )


# ----------------------------- main -------------------------------------------

if __name__ == "__main__":
    key = jax.random.PRNGKey(0)
    k_x, k_p = jax.random.split(key)

    N, in_planes, planes, H, W = 2, 4, 8, 16, 16
    x = jax.random.normal(k_x, (N, in_planes, H, W), jnp.float32)   # NCHW like PyTorch
    params = make_params(k_p, in_planes, planes)

    fwd = jax.jit(functools.partial(custom_block_forward, skip_connection=True))
    ref_fwd = jax.jit(functools.partial(reference_forward, skip_connection=True))

    out = jax.block_until_ready(fwd(x, params))
    ref = jax.block_until_ready(ref_fwd(x, params))

    assert out.shape == (N, planes, H // 2, W // 2), out.shape
    max_err = float(jnp.max(jnp.abs(out - ref)))
    # bf16 matmul inputs (f32 accumulation) => allow a small tolerance.
    assert jnp.allclose(out, ref, atol=2e-2, rtol=2e-2), max_err

    print("KERNEL_OK")
</pallas_src>

<mosaic_0001>
module attributes {stable_mosaic.version = 11 : i64} {
  func.func @_custom_block_kernel(%arg0: i32, %arg1: memref<1x256x128xbf16, #tpu.memory_space<vmem>>, %arg2: memref<128x128xbf16, #tpu.memory_space<vmem>>, %arg3: memref<9x64x64xbf16, #tpu.memory_space<vmem>>, %arg4: memref<9x128x128xbf16, #tpu.memory_space<vmem>>, %arg5: memref<9x128x128xbf16, #tpu.memory_space<vmem>>, %arg6: memref<6x1x128xf32, #tpu.memory_space<vmem>>, %arg7: memref<1x64x128xf32, #tpu.memory_space<vmem>>) attributes {dimension_semantics = [#tpu.dimension_semantics<parallel>], iteration_bounds = array<i64: 2>, scalar_prefetch = 0 : i64, scratch_operands = 0 : i64, tpu.core_type = #tpu.core_type<tc>, window_params = [{transform_indices = @transform_0, window_bounds = array<i64: 1, 256, 128>}, {pipeline_mode = #tpu.pipeline_mode<synchronous>, transform_indices = @transform_1, window_bounds = array<i64: 128, 128>}, {pipeline_mode = #tpu.pipeline_mode<synchronous>, transform_indices = @transform_2, window_bounds = array<i64: 9, 64, 64>}, {pipeline_mode = #tpu.pipeline_mode<synchronous>, transform_indices = @transform_3, window_bounds = array<i64: 9, 128, 128>}, {pipeline_mode = #tpu.pipeline_mode<synchronous>, transform_indices = @transform_4, window_bounds = array<i64: 9, 128, 128>}, {pipeline_mode = #tpu.pipeline_mode<synchronous>, transform_indices = @transform_5, window_bounds = array<i64: 6, 1, 128>}, {transform_indices = @transform_6, window_bounds = array<i64: 1, 64, 128>}]} {
    %c0 = arith.constant 0 : index
    %c0_0 = arith.constant 0 : index
    %c0_1 = arith.constant 0 : index
    %0 = vector.load %arg1[%c0, %c0_0, %c0_1] : memref<1x256x128xbf16, #tpu.memory_space<vmem>>, vector<1x256x128xbf16>
    %1 = vector.shape_cast %0 : vector<1x256x128xbf16> to vector<256x128xbf16>
    %c0_2 = arith.constant 0 : index
    %c0_3 = arith.constant 0 : index
    %2 = vector.load %arg2[%c0_2, %c0_3] : memref<128x128xbf16, #tpu.memory_space<vmem>>, vector<128x128xbf16>
    %cst = arith.constant dense<0.000000e+00> : vector<256x128xf32>
    %3 = tpu.matmul %1, %2, %cst {dimension_numbers = #tpu.dot_dimension_numbers<[1], [0], [0], [1], [0, 0, 1, 1], [], []>} : vector<256x128xbf16>, vector<128x128xbf16>, vector<256x128xf32> -> vector<256x128xf32>
    %4 = vector.extract_strided_slice %3 {offsets = [0, 0], sizes = [64, 128], strides = [1, 1]} : vector<256x128xf32> to vector<64x128xf32>
    %5 = vector.extract_strided_slice %3 {offsets = [64, 0], sizes = [64, 128], strides = [1, 1]} : vector<256x128xf32> to vector<64x128xf32>
    %6 = arith.maximumf %4, %5 : vector<64x128xf32>
    %7 = vector.extract_strided_slice %3 {offsets = [128, 0], sizes = [64, 128], strides = [1, 1]} : vector<256x128xf32> to vector<64x128xf32>
    %8 = vector.extract_strided_slice %3 {offsets = [192, 0], sizes = [64, 128], strides = [1, 1]} : vector<256x128xf32> to vector<64x128xf32>
    %9 = arith.maximumf %7, %8 : vector<64x128xf32>
    %10 = arith.maximumf %6, %9 : vector<64x128xf32>
    %c0_4 = arith.constant 0 : index
    %c0_5 = arith.constant 0 : index
    %c0_6 = arith.constant 0 : index
    %11 = vector.load %arg6[%c0_4, %c0_5, %c0_6] : memref<6x1x128xf32, #tpu.memory_space<vmem>>, vector<1x1x128xf32>
    %12 = vector.shape_cast %11 : vector<1x1x128xf32> to vector<1x128xf32>
    %13 = vector.broadcast %12 : vector<1x128xf32> to vector<64x128xf32>
    %14 = arith.mulf %10, %13 : vector<64x128xf32>
    %c1 = arith.constant 1 : index
    %c0_7 = arith.constant 0 : index
    %c0_8 = arith.constant 0 : index
    %15 = vector.load %arg6[%c1, %c0_7, %c0_8] : memref<6x1x128xf32, #tpu.memory_space<vmem>>, vector<1x1x128xf32>
    %16 = vector.shape_cast %15 : vector<1x1x128xf32> to vector<1x128xf32>
    %17 = vector.broadcast %16 : vector<1x128xf32> to vector<64x128xf32>
    %18 = arith.addf %14, %17 : vector<64x128xf32>
    %cst_9 = arith.constant 0.000000e+00 : f32
    %19 = vector.broadcast %cst_9 : f32 to vector<64x128xf32>
    %20 = arith.maximumf %18, %19 : vector<64x128xf32>
    %21 = arith.truncf %20 : vector<64x128xf32> to vector<64x128xbf16>
    %cst_10 = arith.constant 0.000000e+00 : f32
    %22 = vector.broadcast %cst_10 : f32 to vector<64x128xf32>
    %c0_11 = arith.constant 0 : index
    %c0_12 = arith.constant 0 : index
    %c0_13 = arith.constant 0 : index
    %23 = vector.load %arg3[%c0_11, %c0_12, %c0_13] : memref<9x64x64xbf16, #tpu.memory_space<vmem>>, vector<1x64x64xbf16>
    %24 = vector.shape_cast %23 : vector<1x64x64xbf16> to vector<64x64xbf16>
    %cst_14 = arith.constant dense<0.000000e+00> : vector<64x128xf32>
    %25 = tpu.matmul %24, %21, %cst_14 {dimension_numbers = #tpu.dot_dimension_numbers<[1], [0], [0], [1], [0, 0, 1, 1], [], []>} : vector<64x64xbf16>, vector<64x128xbf16>, vector<64x128xf32> -> vector<64x128xf32>
    %26 = arith.truncf %25 : vector<64x128xf32> to vector<64x128xbf16>
    %c0_15 = arith.constant 0 : index
    %c0_16 = arith.constant 0 : index
    %c0_17 = arith.constant 0 : index
    %27 = vector.load %arg4[%c0_15, %c0_16, %c0_17] : memref<9x128x128xbf16, #tpu.memory_space<vmem>>, vector<1x128x128xbf16>
    %28 = vector.shape_cast %27 : vector<1x128x128xbf16> to vector<128x128xbf16>
    %cst_18 = arith.constant dense<0.000000e+00> : vector<64x128xf32>
    %29 = tpu.matmul %26, %28, %cst_18 {dimension_numbers = #tpu.dot_dimension_numbers<[1], [0], [0], [1], [0, 0, 1, 1], [], []>} : vector<64x128xbf16>, vector<128x128xbf16>, vector<64x128xf32> -> vector<64x128xf32>
    %30 = arith.addf %22, %29 : vector<64x128xf32>
    %c1_19 = arith.constant 1 : index
    %c0_20 = arith.constant 0 : index
    %c0_21 = arith.constant 0 : index
    %31 = vector.load %arg3[%c1_19, %c0_20, %c0_21] : memref<9x64x64xbf16, #tpu.memory_space<vmem>>, vector<1x64x64xbf16>
    %32 = vector.shape_cast %31 : vector<1x64x64xbf16> to vector<64x64xbf16>
    %cst_22 = arith.constant dense<0.000000e+00> : vector<64x128xf32>
    %33 = tpu.matmul %32, %21, %cst_22 {dimension_numbers = #tpu.dot_dimension_numbers<[1], [0], [0], [1], [0, 0, 1, 1], [], []>} : vector<64x64xbf16>, vector<64x128xbf16>, vector<64x128xf32> -> vector<64x128xf32>
    %34 = arith.truncf %33 : vector<64x128xf32> to vector<64x128xbf16>
    %c1_23 = arith.constant 1 : index
    %c0_24 = arith.constant 0 : index
    %c0_25 = arith.constant 0 : index
    %35 = vector.load %arg4[%c1_23, %c0_24, %c0_25] : memref<9x128x128xbf16, #tpu.memory_space<vmem>>, vector<1x128x128xbf16>
    %36 = vector.shape_cast %35 : vector<1x128x128xbf16> to vector<128x128xbf16>
    %cst_26 = arith.constant dense<0.000000e+00> : vector<64x128xf32>
    %37 = tpu.matmul %34, %36, %cst_26 {dimension_numbers = #tpu.dot_dimension_numbers<[1], [0], [0], [1], [0, 0, 1, 1], [], []>} : vector<64x128xbf16>, vector<128x128xbf16>, vector<64x128xf32> -> vector<64x128xf32>
    %38 = arith.addf %30, %37 : vector<64x128xf32>
    %c2 = arith.constant 2 : index
    %c0_27 = arith.constant 0 : index
    %c0_28 = arith.constant 0 : index
    %39 = vector.load %arg3[%c2, %c0_27, %c0_28] : memref<9x64x64xbf16, #tpu.memory_space<vmem>>, vector<1x64x64xbf16>
    %40 = vector.shape_cast %39 : vector<1x64x64xbf16> to vector<64x64xbf16>
    %cst_29 = arith.constant dense<0.000000e+00> : vector<64x128xf32>
    %41 = tpu.matmul %40, %21, %cst_29 {dimension_numbers = #tpu.dot_dimension_numbers<[1], [0], [0], [1], [0, 0, 1, 1], [], []>} : vector<64x64xbf16>, vector<64x128xbf16>, vector<64x128xf32> -> vector<64x128xf32>
    %42 = arith.truncf %41 : vector<64x128xf32> to vector<64x128xbf16>
    %c2_30 = arith.constant 2 : index
    %c0_31 = arith.constant 0 : index
    %c0_32 = arith.constant 0 : index
    %43 = vector.load %arg4[%c2_30, %c0_31, %c0_32] : memref<9x128x128xbf16, #tpu.memory_space<vmem>>, vector<1x128x128xbf16>
    %44 = vector.shape_cast %43 : vector<1x128x128xbf16> to vector<128x128xbf16>
    %cst_33 = arith.constant dense<0.000000e+00> : vector<64x128xf32>
    %45 = tpu.matmul %42, %44, %cst_33 {dimension_numbers = #tpu.dot_dimension_numbers<[1], [0], [0], [1], [0, 0, 1, 1], [], []>} : vector<64x128xbf16>, vector<128x128xbf16>, vector<64x128xf32> -> vector<64x128xf32>
    %46 = arith.addf %38, %45 : vector<64x128xf32>
    %c3 = arith.constant 3 : index
    %c0_34 = arith.constant 0 : index
    %c0_35 = arith.constant 0 : index
    %47 = vector.load %arg3[%c3, %c0_34, %c0_35] : memref<9x64x64xbf16, #tpu.memory_space<vmem>>, vector<1x64x64xbf16>
    %48 = vector.shape_cast %47 : vector<1x64x64xbf16> to vector<64x64xbf16>
    %cst_36 = arith.constant dense<0.000000e+00> : vector<64x128xf32>
    %49 = tpu.matmul %48, %21, %cst_36 {dimension_numbers = #tpu.dot_dimension_numbers<[1], [0], [0], [1], [0, 0, 1, 1], [], []>} : vector<64x64xbf16>, vector<64x128xbf16>, vector<64x128xf32> -> vector<64x128xf32>
    %50 = arith.truncf %49 : vector<64x128xf32> to vector<64x128xbf16>
    %c3_37 = arith.constant 3 : index
    %c0_38 = arith.constant 0 : index
    %c0_39 = arith.constant 0 : index
    %51 = vector.load %arg4[%c3_37, %c0_38, %c0_39] : memref<9x128x128xbf16, #tpu.memory_space<vmem>>, vector<1x128x128xbf16>
    %52 = vector.shape_cast %51 : vector<1x128x128xbf16> to vector<128x128xbf16>
    %cst_40 = arith.constant dense<0.000000e+00> : vector<64x128xf32>
    %53 = tpu.matmul %50, %52, %cst_40 {dimension_numbers = #tpu.dot_dimension_numbers<[1], [0], [0], [1], [0, 0, 1, 1], [], []>} : vector<64x128xbf16>, vector<128x128xbf16>, vector<64x128xf32> -> vector<64x128xf32>
    %54 = arith.addf %46, %53 : vector<64x128xf32>
    %c4 = arith.constant 4 : index
    %c0_41 = arith.constant 0 : index
    %c0_42 = arith.constant 0 : index
    %55 = vector.load %arg3[%c4, %c0_41, %c0_42] : memref<9x64x64xbf16, #tpu.memory_space<vmem>>, vector<1x64x64xbf16>
    %56 = vector.shape_cast %55 : vector<1x64x64xbf16> to vector<64x64xbf16>
    %cst_43 = arith.constant dense<0.000000e+00> : vector<64x128xf32>
    %57 = tpu.matmul %56, %21, %cst_43 {dimension_numbers = #tpu.dot_dimension_numbers<[1], [0], [0], [1], [0, 0, 1, 1], [], []>} : vector<64x64xbf16>, vector<64x128xbf16>, vector<64x128xf32> -> vector<64x128xf32>
    %58 = arith.truncf %57 : vector<64x128xf32> to vector<64x128xbf16>
    %c4_44 = arith.constant 4 : index
    %c0_45 = arith.constant 0 : index
    %c0_46 = arith.constant 0 : index
    %59 = vector.load %arg4[%c4_44, %c0_45, %c0_46] : memref<9x128x128xbf16, #tpu.memory_space<vmem>>, vector<1x128x128xbf16>
    %60 = vector.shape_cast %59 : vector<1x128x128xbf16> to vector<128x128xbf16>
    %cst_47 = arith.constant dense<0.000000e+00> : vector<64x128xf32>
    %61 = tpu.matmul %58, %60, %cst_47 {dimension_numbers = #tpu.dot_dimension_numbers<[1], [0], [0], [1], [0, 0, 1, 1], [], []>} : vector<64x128xbf16>, vector<128x128xbf16>, vector<64x128xf32> -> vector<64x128xf32>
    %62 = arith.addf %54, %61 : vector<64x128xf32>
    %c5 = arith.constant 5 : index
    %c0_48 = arith.constant 0 : index
    %c0_49 = arith.constant 0 : index
    %63 = vector.load %arg3[%c5, %c0_48, %c0_49] : memref<9x64x64xbf16, #tpu.memory_space<vmem>>, vector<1x64x64xbf16>
    %64 = vector.shape_cast %63 : vector<1x64x64xbf16> to vector<64x64xbf16>
    %cst_50 = arith.constant dense<0.000000e+00> : vector<64x128xf32>
    %65 = tpu.matmul %64, %21, %cst_50 {dimension_numbers = #tpu.dot_dimension_numbers<[1], [0], [0], [1], [0, 0, 1, 1], [], []>} : vector<64x64xbf16>, vector<64x128xbf16>, vector<64x128xf32> -> vector<64x128xf32>
    %66 = arith.truncf %65 : vector<64x128xf32> to vector<64x128xbf16>
    %c5_51 = arith.constant 5 : index
    %c0_52 = arith.constant 0 : index
    %c0_53 = arith.constant 0 : index
    %67 = vector.load %arg4[%c5_51, %c0_52, %c0_53] : memref<9x128x128xbf16, #tpu.memory_space<vmem>>, vector<1x128x128xbf16>
    %68 = vector.shape_cast %67 : vector<1x128x128xbf16> to vector<128x128xbf16>
    %cst_54 = arith.constant dense<0.000000e+00> : vector<64x128xf32>
    %69 = tpu.matmul %66, %68, %cst_54 {dimension_numbers = #tpu.dot_dimension_numbers<[1], [0], [0], [1], [0, 0, 1, 1], [], []>} : vector<64x128xbf16>, vector<128x128xbf16>, vector<64x128xf32> -> vector<64x128xf32>
    %70 = arith.addf %62, %69 : vector<64x128xf32>
    %c6 = arith.constant 6 : index
    %c0_55 = arith.constant 0 : index
    %c0_56 = arith.constant 0 : index
    %71 = vector.load %arg3[%c6, %c0_55, %c0_56] : memref<9x64x64xbf16, #tpu.memory_space<vmem>>, vector<1x64x64xbf16>
    %72 = vector.shape_cast %71 : vector<1x64x64xbf16> to vector<64x64xbf16>
    %cst_57 = arith.constant dense<0.000000e+00> : vector<64x128xf32>
    %73 = tpu.matmul %72, %21, %cst_57 {dimension_numbers = #tpu.dot_dimension_numbers<[1], [0], [0], [1], [0, 0, 1, 1], [], []>} : vector<64x64xbf16>, vector<64x128xbf16>, vector<64x128xf32> -> vector<64x128xf32>
    %74 = arith.truncf %73 : vector<64x128xf32> to vector<64x128xbf16>
    %c6_58 = arith.constant 6 : index
    %c0_59 = arith.constant 0 : index
    %c0_60 = arith.constant 0 : index
    %75 = vector.load %arg4[%c6_58, %c0_59, %c0_60] : memref<9x128x128xbf16, #tpu.memory_space<vmem>>, vector<1x128x128xbf16>
    %76 = vector.shape_cast %75 : vector<1x128x128xbf16> to vector<128x128xbf16>
    %cst_61 = arith.constant dense<0.000000e+00> : vector<64x128xf32>
    %77 = tpu.matmul %74, %76, %cst_61 {dimension_numbers = #tpu.dot_dimension_numbers<[1], [0], [0], [1], [0, 0, 1, 1], [], []>} : vector<64x128xbf16>, vector<128x128xbf16>, vector<64x128xf32> -> vector<64x128xf32>
    %78 = arith.addf %70, %77 : vector<64x128xf32>
    %c7 = arith.constant 7 : index
    %c0_62 = arith.constant 0 : index
    %c0_63 = arith.constant 0 : index
    %79 = vector.load %arg3[%c7, %c0_62, %c0_63] : memref<9x64x64xbf16, #tpu.memory_space<vmem>>, vector<1x64x64xbf16>
    %80 = vector.shape_cast %79 : vector<1x64x64xbf16> to vector<64x64xbf16>
    %cst_64 = arith.constant dense<0.000000e+00> : vector<64x128xf32>
    %81 = tpu.matmul %80, %21, %cst_64 {dimension_numbers = #tpu.dot_dimension_numbers<[1], [0], [0], [1], [0, 0, 1, 1], [], []>} : vector<64x64xbf16>, vector<64x128xbf16>, vector<64x128xf32> -> vector<64x128xf32>
    %82 = arith.truncf %81 : vector<64x128xf32> to vector<64x128xbf16>
    %c7_65 = arith.constant 7 : index
    %c0_66 = arith.constant 0 : index
    %c0_67 = arith.constant 0 : index
    %83 = vector.load %arg4[%c7_65, %c0_66, %c0_67] : memref<9x128x128xbf16, #tpu.memory_space<vmem>>, vector<1x128x128xbf16>
    %84 = vector.shape_cast %83 : vector<1x128x128xbf16> to vector<128x128xbf16>
    %cst_68 = arith.constant dense<0.000000e+00> : vector<64x128xf32>
    %85 = tpu.matmul %82, %84, %cst_68 {dimension_numbers = #tpu.dot_dimension_numbers<[1], [0], [0], [1], [0, 0, 1, 1], [], []>} : vector<64x128xbf16>, vector<128x128xbf16>, vector<64x128xf32> -> vector<64x128xf32>
    %86 = arith.addf %78, %85 : vector<64x128xf32>
    %c8 = arith.constant 8 : index
    %c0_69 = arith.constant 0 : index
    %c0_70 = arith.constant 0 : index
    %87 = vector.load %arg3[%c8, %c0_69, %c0_70] : memref<9x64x64xbf16, #tpu.memory_space<vmem>>, vector<1x64x64xbf16>
    %88 = vector.shape_cast %87 : vector<1x64x64xbf16> to vector<64x64xbf16>
    %cst_71 = arith.constant dense<0.000000e+00> : vector<64x128xf32>
    %89 = tpu.matmul %88, %21, %cst_71 {dimension_numbers = #tpu.dot_dimension_numbers<[1], [0], [0], [1], [0, 0, 1, 1], [], []>} : vector<64x64xbf16>, vector<64x128xbf16>, vector<64x128xf32> -> vector<64x128xf32>
    %90 = arith.truncf %89 : vector<64x128xf32> to vector<64x128xbf16>
    %c8_72 = arith.constant 8 : index
    %c0_73 = arith.constant 0 : index
    %c0_74 = arith.constant 0 : index
    %91 = vector.load %arg4[%c8_72, %c0_73, %c0_74] : memref<9x128x128xbf16, #tpu.memory_space<vmem>>, vector<1x128x128xbf16>
    %92 = vector.shape_cast %91 : vector<1x128x128xbf16> to vector<128x128xbf16>
    %cst_75 = arith.constant dense<0.000000e+00> : vector<64x128xf32>
    %93 = tpu.matmul %90, %92, %cst_75 {dimension_numbers = #tpu.dot_dimension_numbers<[1], [0], [0], [1], [0, 0, 1, 1], [], []>} : vector<64x128xbf16>, vector<128x128xbf16>, vector<64x128xf32> -> vector<64x128xf32>
    %94 = arith.addf %86, %93 : vector<64x128xf32>
    %c2_76 = arith.constant 2 : index
    %c0_77 = arith.constant 0 : index
    %c0_78 = arith.constant 0 : index
    %95 = vector.load %arg6[%c2_76, %c0_77, %c0_78] : memref<6x1x128xf32, #tpu.memory_space<vmem>>, vector<1x1x128xf32>
    %96 = vector.shape_cast %95 : vector<1x1x128xf32> to vector<1x128xf32>
    %97 = vector.broadcast %96 : vector<1x128xf32> to vector<64x128xf32>
    %98 = arith.mulf %94, %97 : vector<64x128xf32>
    %c3_79 = arith.constant 3 : index
    %c0_80 = arith.constant 0 : index
    %c0_81 = arith.constant 0 : index
    %99 = vector.load %arg6[%c3_79, %c0_80, %c0_81] : memref<6x1x128xf32, #tpu.memory_space<vmem>>, vector<1x1x128xf32>
    %100 = vector.shape_cast %99 : vector<1x1x128xf32> to vector<1x128xf32>
    %101 = vector.broadcast %100 : vector<1x128xf32> to vector<64x128xf32>
    %102 = arith.addf %98, %101 : vector<64x128xf32>
    %cst_82 = arith.constant 0.000000e+00 : f32
    %103 = vector.broadcast %cst_82 : f32 to vector<64x128xf32>
    %104 = arith.maximumf %102, %103 : vector<64x128xf32>
    %105 = arith.truncf %104 : vector<64x128xf32> to vector<64x128xbf16>
    %cst_83 = arith.constant 0.000000e+00 : f32
    %106 = vector.broadcast %cst_83 : f32 to vector<64x128xf32>
    %c0_84 = arith.constant 0 : index
    %c0_85 = arith.constant 0 : index
    %c0_86 = arith.constant 0 : index
    %107 = vector.load %arg3[%c0_84, %c0_85, %c0_86] : memref<9x64x64xbf16, #tpu.memory_space<vmem>>, vector<1x64x64xbf16>
    %108 = vector.shape_cast %107 : vector<1x64x64xbf16> to vector<64x64xbf16>
    %cst_87 = arith.constant dense<0.000000e+00> : vector<64x128xf32>
    %109 = tpu.matmul %108, %105, %cst_87 {dimension_numbers = #tpu.dot_dimension_numbers<[1], [0], [0], [1], [0, 0, 1, 1], [], []>} : vector<64x64xbf16>, vector<64x128xbf16>, vector<64x128xf32> -> vector<64x128xf32>
    %110 = arith.truncf %109 : vector<64x128xf32> to vector<64x128xbf16>
    %c0_88 = arith.constant 0 : index
    %c0_89 = arith.constant 0 : index
    %c0_90 = arith.constant 0 : index
    %111 = vector.load %arg5[%c0_88, %c0_89, %c0_90] : memref<9x128x128xbf16, #tpu.memory_space<vmem>>, vector<1x128x128xbf16>
    %112 = vector.shape_cast %111 : vector<1x128x128xbf16> to vector<128x128xbf16>
    %cst_91 = arith.constant dense<0.000000e+00> : vector<64x128xf32>
    %113 = tpu.matmul %110, %112, %cst_91 {dimension_numbers = #tpu.dot_dimension_numbers<[1], [0], [0], [1], [0, 0, 1, 1], [], []>} : vector<64x128xbf16>, vector<128x128xbf16>, vector<64x128xf32> -> vector<64x128xf32>
    %114 = arith.addf %106, %113 : vector<64x128xf32>
    %c1_92 = arith.constant 1 : index
    %c0_93 = arith.constant 0 : index
    %c0_94 = arith.constant 0 : index
    %115 = vector.load %arg3[%c1_92, %c0_93, %c0_94] : memref<9x64x64xbf16, #tpu.memory_space<vmem>>, vector<1x64x64xbf16>
    %116 = vector.shape_cast %115 : vector<1x64x64xbf16> to vector<64x64xbf16>
    %cst_95 = arith.constant dense<0.000000e+00> : vector<64x128xf32>
    %117 = tpu.matmul %116, %105, %cst_95 {dimension_numbers = #tpu.dot_dimension_numbers<[1], [0], [0], [1], [0, 0, 1, 1], [], []>} : vector<64x64xbf16>, vector<64x128xbf16>, vector<64x128xf32> -> vector<64x128xf32>
    %118 = arith.truncf %117 : vector<64x128xf32> to vector<64x128xbf16>
    %c1_96 = arith.constant 1 : index
    %c0_97 = arith.constant 0 : index
    %c0_98 = arith.constant 0 : index
    %119 = vector.load %arg5[%c1_96, %c0_97, %c0_98] : memref<9x128x128xbf16, #tpu.memory_space<vmem>>, vector<1x128x128xbf16>
    %120 = vector.shape_cast %119 : vector<1x128x128xbf16> to vector<128x128xbf16>
    %cst_99 = arith.constant dense<0.000000e+00> : vector<64x128xf32>
    %121 = tpu.matmul %118, %120, %cst_99 {dimension_numbers = #tpu.dot_dimension_numbers<[1], [0], [0], [1], [0, 0, 1, 1], [], []>} : vector<64x128xbf16>, vector<128x128xbf16>, vector<64x128xf32> -> vector<64x128xf32>
    %122 = arith.addf %114, %121 : vector<64x128xf32>
    %c2_100 = arith.constant 2 : index
    %c0_101 = arith.constant 0 : index
    %c0_102 = arith.constant 0 : index
    %123 = vector.load %arg3[%c2_100, %c0_101, %c0_102] : memref<9x64x64xbf16, #tpu.memory_space<vmem>>, vector<1x64x64xbf16>
    %124 = vector.shape_cast %123 : vector<1x64x64xbf16> to vector<64x64xbf16>
    %cst_103 = arith.constant dense<0.000000e+00> : vector<64x128xf32>
    %125 = tpu.matmul %124, %105, %cst_103 {dimension_numbers = #tpu.dot_dimension_numbers<[1], [0], [0], [1], [0, 0, 1, 1], [], []>} : vector<64x64xbf16>, vector<64x128xbf16>, vector<64x128xf32> -> vector<64x128xf32>
    %126 = arith.truncf %125 : vector<64x128xf32> to vector<64x128xbf16>
    %c2_104 = arith.constant 2 : index
    %c0_105 = arith.constant 0 : index
    %c0_106 = arith.constant 0 : index
    %127 = vector.load %arg5[%c2_104, %c0_105, %c0_106] : memref<9x128x128xbf16, #tpu.memory_space<vmem>>, vector<1x128x128xbf16>
    %128 = vector.shape_cast %127 : vector<1x128x128xbf16> to vector<128x128xbf16>
    %cst_107 = arith.constant dense<0.000000e+00> : vector<64x128xf32>
    %129 = tpu.matmul %126, %128, %cst_107 {dimension_numbers = #tpu.dot_dimension_numbers<[1], [0], [0], [1], [0, 0, 1, 1], [], []>} : vector<64x128xbf16>, vector<128x128xbf16>, vector<64x128xf32> -> vector<64x128xf32>
    %130 = arith.addf %122, %129 : vector<64x128xf32>
    %c3_108 = arith.constant 3 : index
    %c0_109 = arith.constant 0 : index
    %c0_110 = arith.constant 0 : index
    %131 = vector.load %arg3[%c3_108, %c0_109, %c0_110] : memref<9x64x64xbf16, #tpu.memory_space<vmem>>, vector<1x64x64xbf16>
    %132 = vector.shape_cast %131 : vector<1x64x64xbf16> to vector<64x64xbf16>
    %cst_111 = arith.constant dense<0.000000e+00> : vector<64x128xf32>
    %133 = tpu.matmul %132, %105, %cst_111 {dimension_numbers = #tpu.dot_dimension_numbers<[1], [0], [0], [1], [0, 0, 1, 1], [], []>} : vector<64x64xbf16>, vector<64x128xbf16>, vector<64x128xf32> -> vector<64x128xf32>
    %134 = arith.truncf %133 : vector<64x128xf32> to vector<64x128xbf16>
    %c3_112 = arith.constant 3 : index
    %c0_113 = arith.constant 0 : index
    %c0_114 = arith.constant 0 : index
    %135 = vector.load %arg5[%c3_112, %c0_113, %c0_114] : memref<9x128x128xbf16, #tpu.memory_space<vmem>>, vector<1x128x128xbf16>
    %136 = vector.shape_cast %135 : vector<1x128x128xbf16> to vector<128x128xbf16>
    %cst_115 = arith.constant dense<0.000000e+00> : vector<64x128xf32>
    %137 = tpu.matmul %134, %136, %cst_115 {dimension_numbers = #tpu.dot_dimension_numbers<[1], [0], [0], [1], [0, 0, 1, 1], [], []>} : vector<64x128xbf16>, vector<128x128xbf16>, vector<64x128xf32> -> vector<64x128xf32>
    %138 = arith.addf %130, %137 : vector<64x128xf32>
    %c4_116 = arith.constant 4 : index
    %c0_117 = arith.constant 0 : index
    %c0_118 = arith.constant 0 : index
    %139 = vector.load %arg3[%c4_116, %c0_117, %c0_118] : memref<9x64x64xbf16, #tpu.memory_space<vmem>>, vector<1x64x64xbf16>
    %140 = vector.shape_cast %139 : vector<1x64x64xbf16> to vector<64x64xbf16>
    %cst_119 = arith.constant dense<0.000000e+00> : vector<64x128xf32>
    %141 = tpu.matmul %140, %105, %cst_119 {dimension_numbers = #tpu.dot_dimension_numbers<[1], [0], [0], [1], [0, 0, 1, 1], [], []>} : vector<64x64xbf16>, vector<64x128xbf16>, vector<64x128xf32> -> vector<64x128xf32>
    %142 = arith.truncf %141 : vector<64x128xf32> to vector<64x128xbf16>
    %c4_120 = arith.constant 4 : index
    %c0_121 = arith.constant 0 : index
    %c0_122 = arith.constant 0 : index
    %143 = vector.load %arg5[%c4_120, %c0_121, %c0_122] : memref<9x128x128xbf16, #tpu.memory_space<vmem>>, vector<1x128x128xbf16>
    %144 = vector.shape_cast %143 : vector<1x128x128xbf16> to vector<128x128xbf16>
    %cst_123 = arith.constant dense<0.000000e+00> : vector<64x128xf32>
    %145 = tpu.matmul %142, %144, %cst_123 {dimension_numbers = #tpu.dot_dimension_numbers<[1], [0], [0], [1], [0, 0, 1, 1], [], []>} : vector<64x128xbf16>, vector<128x128xbf16>, vector<64x128xf32> -> vector<64x128xf32>
    %146 = arith.addf %138, %145 : vector<64x128xf32>
    %c5_124 = arith.constant 5 : index
    %c0_125 = arith.constant 0 : index
    %c0_126 = arith.constant 0 : index
    %147 = vector.load %arg3[%c5_124, %c0_125, %c0_126] : memref<9x64x64xbf16, #tpu.memory_space<vmem>>, vector<1x64x64xbf16>
    %148 = vector.shape_cast %147 : vector<1x64x64xbf16> to vector<64x64xbf16>
    %cst_127 = arith.constant dense<0.000000e+00> : vector<64x128xf32>
    %149 = tpu.matmul %148, %105, %cst_127 {dimension_numbers = #tpu.dot_dimension_numbers<[1], [0], [0], [1], [0, 0, 1, 1], [], []>} : vector<64x64xbf16>, vector<64x128xbf16>, vector<64x128xf32> -> vector<64x128xf32>
    %150 = arith.truncf %149 : vector<64x128xf32> to vector<64x128xbf16>
    %c5_128 = arith.constant 5 : index
    %c0_129 = arith.constant 0 : index
    %c0_130 = arith.constant 0 : index
    %151 = vector.load %arg5[%c5_128, %c0_129, %c0_130] : memref<9x128x128xbf16, #tpu.memory_space<vmem>>, vector<1x128x128xbf16>
    %152 = vector.shape_cast %151 : vector<1x128x128xbf16> to vector<128x128xbf16>
    %cst_131 = arith.constant dense<0.000000e+00> : vector<64x128xf32>
    %153 = tpu.matmul %150, %152, %cst_131 {dimension_numbers = #tpu.dot_dimension_numbers<[1], [0], [0], [1], [0, 0, 1, 1], [], []>} : vector<64x128xbf16>, vector<128x128xbf16>, vector<64x128xf32> -> vector<64x128xf32>
    %154 = arith.addf %146, %153 : vector<64x128xf32>
    %c6_132 = arith.constant 6 : index
    %c0_133 = arith.constant 0 : index
    %c0_134 = arith.constant 0 : index
    %155 = vector.load %arg3[%c6_132, %c0_133, %c0_134] : memref<9x64x64xbf16, #tpu.memory_space<vmem>>, vector<1x64x64xbf16>
    %156 = vector.shape_cast %155 : vector<1x64x64xbf16> to vector<64x64xbf16>
    %cst_135 = arith.constant dense<0.000000e+00> : vector<64x128xf32>
    %157 = tpu.matmul %156, %105, %cst_135 {dimension_numbers = #tpu.dot_dimension_numbers<[1], [0], [0], [1], [0, 0, 1, 1], [], []>} : vector<64x64xbf16>, vector<64x128xbf16>, vector<64x128xf32> -> vector<64x128xf32>
    %158 = arith.truncf %157 : vector<64x128xf32> to vector<64x128xbf16>
    %c6_136 = arith.constant 6 : index
    %c0_137 = arith.constant 0 : index
    %c0_138 = arith.constant 0 : index
    %159 = vector.load %arg5[%c6_136, %c0_137, %c0_138] : memref<9x128x128xbf16, #tpu.memory_space<vmem>>, vector<1x128x128xbf16>
    %160 = vector.shape_cast %159 : vector<1x128x128xbf16> to vector<128x128xbf16>
    %cst_139 = arith.constant dense<0.000000e+00> : vector<64x128xf32>
    %161 = tpu.matmul %158, %160, %cst_139 {dimension_numbers = #tpu.dot_dimension_numbers<[1], [0], [0], [1], [0, 0, 1, 1], [], []>} : vector<64x128xbf16>, vector<128x128xbf16>, vector<64x128xf32> -> vector<64x128xf32>
    %162 = arith.addf %154, %161 : vector<64x128xf32>
    %c7_140 = arith.constant 7 : index
    %c0_141 = arith.constant 0 : index
    %c0_142 = arith.constant 0 : index
    %163 = vector.load %arg3[%c7_140, %c0_141, %c0_142] : memref<9x64x64xbf16, #tpu.memory_space<vmem>>, vector<1x64x64xbf16>
    %164 = vector.shape_cast %163 : vector<1x64x64xbf16> to vector<64x64xbf16>
    %cst_143 = arith.constant dense<0.000000e+00> : vector<64x128xf32>
    %165 = tpu.matmul %164, %105, %cst_143 {dimension_numbers = #tpu.dot_dimension_numbers<[1], [0], [0], [1], [0, 0, 1, 1], [], []>} : vector<64x64xbf16>, vector<64x128xbf16>, vector<64x128xf32> -> vector<64x128xf32>
    %166 = arith.truncf %165 : vector<64x128xf32> to vector<64x128xbf16>
    %c7_144 = arith.constant 7 : index
    %c0_145 = arith.constant 0 : index
    %c0_146 = arith.constant 0 : index
    %167 = vector.load %arg5[%c7_144, %c0_145, %c0_146] : memref<9x128x128xbf16, #tpu.memory_space<vmem>>, vector<1x128x128xbf16>
    %168 = vector.shape_cast %167 : vector<1x128x128xbf16> to vector<128x128xbf16>
    %cst_147 = arith.constant dense<0.000000e+00> : vector<64x128xf32>
    %169 = tpu.matmul %166, %168, %cst_147 {dimension_numbers = #tpu.dot_dimension_numbers<[1], [0], [0], [1], [0, 0, 1, 1], [], []>} : vector<64x128xbf16>, vector<128x128xbf16>, vector<64x128xf32> -> vector<64x128xf32>
    %170 = arith.addf %162, %169 : vector<64x128xf32>
    %c8_148 = arith.constant 8 : index
    %c0_149 = arith.constant 0 : index
    %c0_150 = arith.constant 0 : index
    %171 = vector.load %arg3[%c8_148, %c0_149, %c0_150] : memref<9x64x64xbf16, #tpu.memory_space<vmem>>, vector<1x64x64xbf16>
    %172 = vector.shape_cast %171 : vector<1x64x64xbf16> to vector<64x64xbf16>
    %cst_151 = arith.constant dense<0.000000e+00> : vector<64x128xf32>
    %173 = tpu.matmul %172, %105, %cst_151 {dimension_numbers = #tpu.dot_dimension_numbers<[1], [0], [0], [1], [0, 0, 1, 1], [], []>} : vector<64x64xbf16>, vector<64x128xbf16>, vector<64x128xf32> -> vector<64x128xf32>
    %174 = arith.truncf %173 : vector<64x128xf32> to vector<64x128xbf16>
    %c8_152 = arith.constant 8 : index
    %c0_153 = arith.constant 0 : index
    %c0_154 = arith.constant 0 : index
    %175 = vector.load %arg5[%c8_152, %c0_153, %c0_154] : memref<9x128x128xbf16, #tpu.memory_space<vmem>>, vector<1x128x128xbf16>
    %176 = vector.shape_cast %175 : vector<1x128x128xbf16> to vector<128x128xbf16>
    %cst_155 = arith.constant dense<0.000000e+00> : vector<64x128xf32>
    %177 = tpu.matmul %174, %176, %cst_155 {dimension_numbers = #tpu.dot_dimension_numbers<[1], [0], [0], [1], [0, 0, 1, 1], [], []>} : vector<64x128xbf16>, vector<128x128xbf16>, vector<64x128xf32> -> vector<64x128xf32>
    %178 = arith.addf %170, %177 : vector<64x128xf32>
    %c4_156 = arith.constant 4 : index
    %c0_157 = arith.constant 0 : index
    %c0_158 = arith.constant 0 : index
    %179 = vector.load %arg6[%c4_156, %c0_157, %c0_158] : memref<6x1x128xf32, #tpu.memory_space<vmem>>, vector<1x1x128xf32>
    %180 = vector.shape_cast %179 : vector<1x1x128xf32> to vector<1x128xf32>
    %181 = vector.broadcast %180 : vector<1x128xf32> to vector<64x128xf32>
    %182 = arith.mulf %178, %181 : vector<64x128xf32>
    %c5_159 = arith.constant 5 : index
    %c0_160 = arith.constant 0 : index
    %c0_161 = arith.constant 0 : index
    %183 = vector.load %arg6[%c5_159, %c0_160, %c0_161] : memref<6x1x128xf32, #tpu.memory_space<vmem>>, vector<1x1x128xf32>
    %184 = vector.shape_cast %183 : vector<1x1x128xf32> to vector<1x128xf32>
    %185 = vector.broadcast %184 : vector<1x128xf32> to vector<64x128xf32>
    %186 = arith.addf %182, %185 : vector<64x128xf32>
    %187 = arith.addf %186, %20 : vector<64x128xf32>
    %cst_162 = arith.constant 0.000000e+00 : f32
    %188 = vector.broadcast %cst_162 : f32 to vector<64x128xf32>
    %189 = arith.maximumf %187, %188 : vector<64x128xf32>
    %190 = arith.addf %20, %189 : vector<64x128xf32>
    %c0_163 = arith.constant 0 : index
    %c0_164 = arith.constant 0 : index
    %c0_165 = arith.constant 0 : index
    %191 = vector.load %arg7[%c0_163, %c0_164, %c0_165] : memref<1x64x128xf32, #tpu.memory_space<vmem>>, vector<1x64x128xf32>
    %192 = vector.shape_cast %191 : vector<1x64x128xf32> to vector<64x128xf32>
    %193 = vector.shape_cast %190 : vector<64x128xf32> to vector<1x64x128xf32>
    tpu.vector_store %arg7[%c0_163, %c0_164, %c0_165], %193 {strides = array<i32>} : memref<1x64x128xf32, #tpu.memory_space<vmem>>, vector<1x64x128xf32>,
    return
  }
  func.func @transform_0(%arg0: i32) -> (i32, i32, i32) {
    %c0_i32 = arith.constant 0 : i32
    %c0_i32_0 = arith.constant 0 : i32
    %c0_i32_1 = arith.constant 0 : i32
    return %arg0, %c0_i32, %c0_i32_0 : i32, i32, i32
  }
  func.func @transform_1(%arg0: i32) -> (i32, i32) {
    %c0_i32 = arith.constant 0 : i32
    %c0_i32_0 = arith.constant 0 : i32
    %c0_i32_1 = arith.constant 0 : i32
    return %c0_i32, %c0_i32_0 : i32, i32
  }
  func.func @transform_2(%arg0: i32) -> (i32, i32, i32) {
    %c0_i32 = arith.constant 0 : i32
    %c0_i32_0 = arith.constant 0 : i32
    %c0_i32_1 = arith.constant 0 : i32
    %c0_i32_2 = arith.constant 0 : i32
    return %c0_i32, %c0_i32_0, %c0_i32_1 : i32, i32, i32
  }
  func.func @transform_3(%arg0: i32) -> (i32, i32, i32) {
    %c0_i32 = arith.constant 0 : i32
    %c0_i32_0 = arith.constant 0 : i32
    %c0_i32_1 = arith.constant 0 : i32
    %c0_i32_2 = arith.constant 0 : i32
    return %c0_i32, %c0_i32_0, %c0_i32_1 : i32, i32, i32
  }
  func.func @transform_4(%arg0: i32) -> (i32, i32, i32) {
    %c0_i32 = arith.constant 0 : i32
    %c0_i32_0 = arith.constant 0 : i32
    %c0_i32_1 = arith.constant 0 : i32
    %c0_i32_2 = arith.constant 0 : i32
    return %c0_i32, %c0_i32_0, %c0_i32_1 : i32, i32, i32
  }
  func.func @transform_5(%arg0: i32) -> (i32, i32, i32) {
    %c0_i32 = arith.constant 0 : i32
    %c0_i32_0 = arith.constant 0 : i32
    %c0_i32_1 = arith.constant 0 : i32
    %c0_i32_2 = arith.constant 0 : i32
    return %c0_i32, %c0_i32_0, %c0_i32_1 : i32, i32, i32
  }
  func.func @transform_6(%arg0: i32) -> (i32, i32, i32) {
    %c0_i32 = arith.constant 0 : i32
    %c0_i32_0 = arith.constant 0 : i32
    %c0_i32_1 = arith.constant 0 : i32
    return %arg0, %c0_i32, %c0_i32_0 : i32, i32, i32
  }
}

</mosaic_0001>

<llo_original>
// kernel: custom_block_forward.1
$region0: #{custom_block_forward.1}
  #allocation0 [shape = 'u32[]', space=smem, size = 0x4, offset = 0x4, fixed_abs, tag = 'smem constant byte address 0x4 - core index']
  #allocation1 [shape = 'u32[144,128]{1,0:T(1,128)}', space=vmem, size = 0x12000, scoped, tag = 'internal scratch']
  %s0 = inlined_call_operand.vmem [shape: bf16[2,256,128], index: 0, kind: input, shape index: {}]
  %s1 = inlined_call_operand.vmem [shape: bf16[128,128], index: 1, kind: input, shape index: {}]
  %s2 = inlined_call_operand.vmem [shape: bf16[9,64,64], index: 2, kind: input, shape index: {}]
  %s3 = inlined_call_operand.vmem [shape: bf16[9,128,128], index: 3, kind: input, shape index: {}]
  %s4 = inlined_call_operand.vmem [shape: bf16[9,128,128], index: 4, kind: input, shape index: {}]
  %s5 = inlined_call_operand.vmem [shape: f32[6,1,128], index: 5, kind: input, shape index: {}]
  %s6 = inlined_call_operand.vmem [shape: f32[2,64,128], index: 6, kind: output, shape index: {}]
  %s7 = sld [smem:[#allocation0]]
  $region57: #{custom_block_forward.1} parent=0
    _
  %s9 = ssub.s32 1, %s7
  %s10 = scalar_select 0, %s9, %s7
  loop: start=0, step=1, limit=4
  $region2: #{custom_block_forward.1} parent=0 // loop_pre_header
    _
  $region3: #{custom_block_forward.1} parent=0 // loop_header
    %s12 = sphi 0, %s16
    %p13 = scmp.ge.s32.totalorder %s12, 4
    %s22 = sphi 0, %s24
    %s25 = sphi 0, %s22
    %s26 = sphi 0, %s25
    %s42 = sphi 0, %s26
    %s46 = sphi 0, %s46
    %s48 = sphi 0, %s46
    %s49 = sphi 0, %s48
    %s63 = sphi 0, %s49
    %s67 = sphi 0, %s67
    %s69 = sphi 0, %s67
    %s70 = sphi 0, %s69
    %s84 = sphi 0, %s70
    %s88 = sphi 0, %s88
    %s90 = sphi 0, %s88
    %s91 = sphi 0, %s90
    %s105 = sphi 0, %s91
    %s109 = sphi 0, %s109
    %s111 = sphi 0, %s109
    %s112 = sphi 0, %s111
    %s126 = sphi 0, %s112
    %s130 = sphi 0, %s130
    %s132 = sphi 0, %s130
    %s133 = sphi 0, %s132
    %s147 = sphi 0, %s133
    %s153 = sphi 0, %s155
    %s156 = sphi 0, %s153
    %s157 = sphi 0, %s156
    %s173 = sphi 0, %s157
  $region4: #{custom_block_forward.1} parent=0 // loop_header_branch
    %15 = sbr.rel (%p13) target = $region8
  $region5: #{custom_block_forward.1} parent=0 // loop_body
    %s17 = ssub.s32 %s12, 1
    %s18 = ssub.s32 %s12, 2
    %s19 = sadd.s32 %s12, 1
    %s20 = ssub.s32 %s12, %s19
    %p21 = scmp.eq.s32.totalorder %s20, 0
    %s23 = sadd.s32 %s22, 1
    %s24 = scalar_select %p21, %s22, %s23
    %p27 = pneg %p21
    %p28 = scmp.eq.s32.totalorder %s12, 1
    %p29 = por %p27, %p28
    %p30 = scmp.ne.s32.totalorder %s22, %s25
    %p31 = scmp.eq.s32.totalorder %s12, 0
    %p32 = por %p30, %p31
    %p33 = scmp.ne.s32.totalorder %s22, %s25
    %p34 = scmp.eq.s32.totalorder %s17, 1
    %p35 = por %p33, %p34
    %p36 = scmp.ne.s32.totalorder %s25, %s26
    %p37 = scmp.eq.s32.totalorder %s17, 0
    %p38 = por %p36, %p37
    %p39 = scmp.ne.s32.totalorder %s25, %s26
    %p40 = scmp.eq.s32.totalorder %s18, 1
    %p41 = por %p39, %p40
    %p43 = scmp.ne.s32.totalorder %s26, %s42
    %p44 = scmp.eq.s32.totalorder %s18, 0
    %p45 = por %p43, %p44
    %s47 = sadd.s32 %s46, 1
    %p50 = scmp.eq.s32.totalorder %s12, 1
    %p51 = scmp.ne.s32.totalorder %s46, %s48
    %p52 = scmp.eq.s32.totalorder %s12, 0
    %p53 = por %p51, %p52
    %p54 = scmp.ne.s32.totalorder %s46, %s48
    %p55 = scmp.eq.s32.totalorder %s17, 1
    %p56 = por %p54, %p55
    %p57 = scmp.ne.s32.totalorder %s48, %s49
    %p58 = scmp.eq.s32.totalorder %s17, 0
    %p59 = por %p57, %p58
    %p60 = scmp.ne.s32.totalorder %s48, %s49
    %p61 = scmp.eq.s32.totalorder %s18, 1
    %p62 = por %p60, %p61
    %p64 = scmp.ne.s32.totalorder %s49, %s63
    %p65 = scmp.eq.s32.totalorder %s18, 0
    %p66 = por %p64, %p65
    %s68 = sadd.s32 %s67, 1
    %p71 = scmp.eq.s32.totalorder %s12, 1
    %p72 = scmp.ne.s32.totalorder %s67, %s69
    %p73 = scmp.eq.s32.totalorder %s12, 0
    %p74 = por %p72, %p73
    %p75 = scmp.ne.s32.totalorder %s67, %s69
    %p76 = scmp.eq.s32.totalorder %s17, 1
    %p77 = por %p75, %p76
    %p78 = scmp.ne.s32.totalorder %s69, %s70
    %p79 = scmp.eq.s32.totalorder %s17, 0
    %p80 = por %p78, %p79
    %p81 = scmp.ne.s32.totalorder %s69, %s70
    %p82 = scmp.eq.s32.totalorder %s18, 1
    %p83 = por %p81, %p82
    %p85 = scmp.ne.s32.totalorder %s70, %s84
    %p86 = scmp.eq.s32.totalorder %s18, 0
    %p87 = por %p85, %p86
    %s89 = sadd.s32 %s88, 1
    %p92 = scmp.eq.s32.totalorder %s12, 1
    %p93 = scmp.ne.s32.totalorder %s88, %s90
    %p94 = scmp.eq.s32.totalorder %s12, 0
    %p95 = por %p93, %p94
    %p96 = scmp.ne.s32.totalorder %s88, %s90
    %p97 = scmp.eq.s32.totalorder %s17, 1
    %p98 = por %p96, %p97
    %p99 = scmp.ne.s32.totalorder %s90, %s91
    %p100 = scmp.eq.s32.totalorder %s17, 0
    %p101 = por %p99, %p100
    %p102 = scmp.ne.s32.totalorder %s90, %s91
    %p103 = scmp.eq.s32.totalorder %s18, 1
    %p104 = por %p102, %p103
    %p106 = scmp.ne.s32.totalorder %s91, %s105
    %p107 = scmp.eq.s32.totalorder %s18, 0
    %p108 = por %p106, %p107
    %s110 = sadd.s32 %s109, 1
    %p113 = scmp.eq.s32.totalorder %s12, 1
    %p114 = scmp.ne.s32.totalorder %s109, %s111
    %p115 = scmp.eq.s32.totalorder %s12, 0
    %p116 = por %p114, %p115
    %p117 = scmp.ne.s32.totalorder %s109, %s111
    %p118 = scmp.eq.s32.totalorder %s17, 1
    %p119 = por %p117, %p118
    %p120 = scmp.ne.s32.totalorder %s111, %s112
    %p121 = scmp.eq.s32.totalorder %s17, 0
    %p122 = por %p120, %p121
    %p123 = scmp.ne.s32.totalorder %s111, %s112
    %p124 = scmp.eq.s32.totalorder %s18, 1
    %p125 = por %p123, %p124
    %p127 = scmp.ne.s32.totalorder %s112, %s126
    %p128 = scmp.eq.s32.totalorder %s18, 0
    %p129 = por %p127, %p128
    %s131 = sadd.s32 %s130, 1
    %p134 = scmp.eq.s32.totalorder %s12, 1
    %p135 = scmp.ne.s32.totalorder %s130, %s132
    %p136 = scmp.eq.s32.totalorder %s12, 0
    %p137 = por %p135, %p136
    %p138 = scmp.ne.s32.totalorder %s130, %s132
    %p139 = scmp.eq.s32.totalorder %s17, 1
    %p140 = por %p138, %p139
    %p141 = scmp.ne.s32.totalorder %s132, %s133
    %p142 = scmp.eq.s32.totalorder %s17, 0
    %p143 = por %p141, %p142
    %p144 = scmp.ne.s32.totalorder %s132, %s133
    %p145 = scmp.eq.s32.totalorder %s18, 1
    %p146 = por %p144, %p145
    %p148 = scmp.ne.s32.totalorder %s133, %s147
    %p149 = scmp.eq.s32.totalorder %s18, 0
    %p150 = por %p148, %p149
    %s151 = ssub.s32 %s12, %s19
    %p152 = scmp.eq.s32.totalorder %s151, 0
    %s154 = sadd.s32 %s153, 1
    %s155 = scalar_select %p152, %s153, %s154
    %p158 = pneg %p152
    %p159 = scmp.eq.s32.totalorder %s12, 1
    %p160 = por %p158, %p159
    %p161 = scmp.ne.s32.totalorder %s153, %s156
    %p162 = scmp.eq.s32.totalorder %s12, 0
    %p163 = por %p161, %p162
    %p164 = scmp.ne.s32.totalorder %s153, %s156
    %p165 = scmp.eq.s32.totalorder %s17, 1
    %p166 = por %p164, %p165
    %p167 = scmp.ne.s32.totalorder %s156, %s157
    %p168 = scmp.eq.s32.totalorder %s17, 0
    %p169 = por %p167, %p168
    %p170 = scmp.ne.s32.totalorder %s156, %s157
    %p171 = scmp.eq.s32.totalorder %s18, 1
    %p172 = por %p170, %p171
    %p174 = scmp.ne.s32.totalorder %s157, %s173
    %p175 = scmp.eq.s32.totalorder %s18, 0
    %p176 = por %p174, %p175
    %p177 = scmp.le.s32.totalorder 1, %s12
    %p178 = scmp.lt.s32.totalorder %s12, 3
    %p179 = pnand %p177, %p178
    %p180 = pneg %p179
    // Predicated region
    $region9: #{custom_block_forward.1} parent=5 // pred_check
      _
    $region10: #{custom_block_forward.1} parent=5 // pred_check_branch
      %182 = sbr.rel (%p179) target = $region12
    $region11: #{custom_block_forward.1} parent=5 // pred_region
      %s183 = ssub.s32 %s12, 1
      // Predicated region
      $region13: #{custom_block_forward.1} parent=11 // pred_check
        %p184 = pneg %p59
      $region14: #{custom_block_forward.1} parent=11 // pred_check_branch
        %186 = sbr.rel (%p184) target = $region16
      $region15: #{custom_block_forward.1} parent=11 // pred_region
        _
      $region16: #{custom_block_forward.1} parent=11 // pred_fallthru
        _
      // Predicated region
      $region17: #{custom_block_forward.1} parent=11 // pred_check
        %p187 = pneg %p80
      $region18: #{custom_block_forward.1} parent=11 // pred_check_branch
        %189 = sbr.rel (%p187) target = $region20
      $region19: #{custom_block_forward.1} parent=11 // pred_region
        _
      $region20: #{custom_block_forward.1} parent=11 // pred_fallthru
        _
      // Predicated region
      $region21: #{custom_block_forward.1} parent=11 // pred_check
        %p190 = pneg %p101
      $region22: #{custom_block_forward.1} parent=11 // pred_check_branch
        %192 = sbr.rel (%p190) target = $region24
      $region23: #{custom_block_forward.1} parent=11 // pred_region
        _
      $region24: #{custom_block_forward.1} parent=11 // pred_fallthru
        _
      // Predicated region
      $region25: #{custom_block_forward.1} parent=11 // pred_check
        %p193 = pneg %p122
      $region26: #{custom_block_forward.1} parent=11 // pred_check_branch
        %195 = sbr.rel (%p193) target = $region28
      $region27: #{custom_block_forward.1} parent=11 // pred_region
        _
      $region28: #{custom_block_forward.1} parent=11 // pred_fallthru
        _
      // Predicated region
      $region29: #{custom_block_forward.1} parent=11 // pred_check
        %p196 = pneg %p143
      $region30: #{custom_block_forward.1} parent=11 // pred_check_branch
        %198 = sbr.rel (%p196) target = $region32
      $region31: #{custom_block_forward.1} parent=11 // pred_region
        _
      $region32: #{custom_block_forward.1} parent=11 // pred_fallthru
        _
    $region12: #{custom_block_forward.1} parent=5 // pred_fallthru
      _
    %p199 = scmp.lt.s32.totalorder %s12, 2
    // Predicated region
    $region33: #{custom_block_forward.1} parent=5 // pred_check
      %p200 = pneg %p199
    $region34: #{custom_block_forward.1} parent=5 // pred_check_branch
      %202 = sbr.rel (%p200) target = $region36
    $region35: #{custom_block_forward.1} parent=5 // pred_region
      // Predicated region
      $region37: #{custom_block_forward.1} parent=35 // pred_check
        %p203 = pneg %p32
      $region38: #{custom_block_forward.1} parent=35 // pred_check_branch
        %205 = sbr.rel (%p203) target = $region40
      $region39: #{custom_block_forward.1} parent=35 // pred_region
        %p206 = scmp.lt.s32.totalorder %s12, 1
        %s207 = scalar_select %p206, %s12, 1
        %s208 = smul.addr %s207, 32
        %s209 = smul.addr %s208, 4
        %s210 = scalar_lea.vmem %s0, %s209
      $region40: #{custom_block_forward.1} parent=35 // pred_fallthru
        _
    $region36: #{custom_block_forward.1} parent=5 // pred_fallthru
      _
    %p211 = scmp.le.s32.totalorder 1, %s12
    %p212 = scmp.lt.s32.totalorder %s12, 3
    %p213 = pnand %p211, %p212
    %p214 = pneg %p213
    // Predicated region
    $region41: #{custom_block_forward.1} parent=5 // pred_check
      _
    $region42: #{custom_block_forward.1} parent=5 // pred_check_branch
      %216 = sbr.rel (%p213) target = $region44
    $region43: #{custom_block_forward.1} parent=5 // pred_region
      %s217 = ssub.s32 %s12, 1
      %p218 = scmp.lt.s32.totalorder %s17, 1
      %s219 = scalar_select %p218, %s17, 1
      %s220 = smul.addr %s219, 32
      %s221 = smul.addr %s220, 4
      %s222 = scalar_lea.vmem %s0, %s221
      %p223 = pneg %p38
      %p224 = pneg %p35
      %p225 = pneg %p59
      %p226 = pneg %p56
      %p227 = pneg %p80
      %p228 = pneg %p77
      %p229 = pneg %p101
      %p230 = pneg %p98
      %p231 = pneg %p122
      %p232 = pneg %p119
      %p233 = pneg %p143
      %p234 = pneg %p140
      %p235 = pneg %p169
      %p236 = pneg %p166
      %p237 = scmp.lt.s32.totalorder %s17, 1
      %s238 = scalar_select %p237, %s17, 1
      %s239 = smul.addr %s238, 8
      %s240 = smul.addr %s239, 8
      %s241 = scalar_lea.vmem %s6, %s240
      %p242 = scmp.lt.s32.totalorder %s17, 1
      %s243 = scalar_select %p242, %s17, 1
      %s244 = smul.addr %s243, 32
      %s245 = smul.addr %s244, 4
      %s246 = scalar_lea.vmem %s0, %s245
      %p247 = scmp.lt.s32.totalorder %s17, 1
      %s248 = scalar_select %p247, %s17, 1
      %s249 = smul.addr %s248, 8
      %s250 = smul.addr %s249, 8
      %s251 = scalar_lea.vmem %s6, %s250
      %v253 = vld [vmem:[%s246] sm:$0xf]
      %v254 = vld [vmem:[%s246 + $0x4] sm:$0xf]
      %v255 = vld [vmem:[%s246 + $0x8] sm:$0xf]
      %v256 = vld [vmem:[%s246 + $0xc] sm:$0xf]
      %v257 = vld [vmem:[%s246 + $0x10] sm:$0xf]
      %v258 = vld [vmem:[%s246 + $0x14] sm:$0xf]
      %v259 = vld [vmem:[%s246 + $0x18] sm:$0xf]
      %v260 = vld [vmem:[%s246 + $0x1c] sm:$0xf]
      %v261 = vld [vmem:[%s246 + $0x20] sm:$0xf]
      %v262 = vld [vmem:[%s246 + $0x24] sm:$0xf]
      %v263 = vld [vmem:[%s246 + $0x28] sm:$0xf]
      %v264 = vld [vmem:[%s246 + $0x2c] sm:$0xf]
      %v265 = vld [vmem:[%s246 + $0x30] sm:$0xf]
      %v266 = vld [vmem:[%s246 + $0x34] sm:$0xf]
      %v267 = vld [vmem:[%s246 + $0x38] sm:$0xf]
      %v268 = vld [vmem:[%s246 + $0x3c] sm:$0xf]
      %v269 = vld [vmem:[%s246 + $0x40] sm:$0xf]
      %v270 = vld [vmem:[%s246 + $0x44] sm:$0xf]
      %v271 = vld [vmem:[%s246 + $0x48] sm:$0xf]
      %v272 = vld [vmem:[%s246 + $0x4c] sm:$0xf]
      %v273 = vld [vmem:[%s246 + $0x50] sm:$0xf]
      %v274 = vld [vmem:[%s246 + $0x54] sm:$0xf]
      %v275 = vld [vmem:[%s246 + $0x58] sm:$0xf]
      %v276 = vld [vmem:[%s246 + $0x5c] sm:$0xf]
      %v277 = vld [vmem:[%s246 + $0x60] sm:$0xf]
      %v278 = vld [vmem:[%s246 + $0x64] sm:$0xf]
      %v279 = vld [vmem:[%s246 + $0x68] sm:$0xf]
      %v280 = vld [vmem:[%s246 + $0x6c] sm:$0xf]
      %v281 = vld [vmem:[%s246 + $0x70] sm:$0xf]
      %v282 = vld [vmem:[%s246 + $0x74] sm:$0xf]
      %v283 = vld [vmem:[%s246 + $0x78] sm:$0xf]
      %v284 = vld [vmem:[%s246 + $0x7c] sm:$0xf]
      %v285 = vld [vmem:[%s1] sm:$0xf]
      %v286 = vld [vmem:[%s1 + $0x4] sm:$0xf]
      %v287 = vld [vmem:[%s1 + $0x8] sm:$0xf]
      %v288 = vld [vmem:[%s1 + $0xc] sm:$0xf]
      %v289 = vld [vmem:[%s1 + $0x10] sm:$0xf]
      %v290 = vld [vmem:[%s1 + $0x14] sm:$0xf]
      %v291 = vld [vmem:[%s1 + $0x18] sm:$0xf]
      %v292 = vld [vmem:[%s1 + $0x1c] sm:$0xf]
      %v293 = vld [vmem:[%s1 + $0x20] sm:$0xf]
      %v294 = vld [vmem:[%s1 + $0x24] sm:$0xf]
      %v295 = vld [vmem:[%s1 + $0x28] sm:$0xf]
      %v296 = vld [vmem:[%s1 + $0x2c] sm:$0xf]
      %v297 = vld [vmem:[%s1 + $0x30] sm:$0xf]
      %v298 = vld [vmem:[%s1 + $0x34] sm:$0xf]
      %v299 = vld [vmem:[%s1 + $0x38] sm:$0xf]
      %v300 = vld [vmem:[%s1 + $0x3c] sm:$0xf]
      %v333 = vunpack.c.l.b16 %v253
      %v334 = vunpack.c.l.b16 %v254
      %v335 = vunpack.c.l.b16 %v255
      %v336 = vunpack.c.l.b16 %v256
      %v337 = vunpack.c.l.b16 %v257
      %v338 = vunpack.c.l.b16 %v258
      %v339 = vunpack.c.l.b16 %v259
      %v340 = vunpack.c.l.b16 %v260
      %v341 = vunpack.c.l.b16 %v261
      %v342 = vunpack.c.l.b16 %v262
      %v343 = vunpack.c.l.b16 %v263
      %v344 = vunpack.c.l.b16 %v264
      %v345 = vunpack.c.l.b16 %v265
      %v346 = vunpack.c.l.b16 %v266
      %v347 = vunpack.c.l.b16 %v267
      %v348 = vunpack.c.l.b16 %v268
      %v349 = vunpack.c.l.b16 %v269
      %v350 = vunpack.c.l.b16 %v270
      %v351 = vunpack.c.l.b16 %v271
      %v352 = vunpack.c.l.b16 %v272
      %v353 = vunpack.c.l.b16 %v273
      %v354 = vunpack.c.l.b16 %v274
      %v355 = vunpack.c.l.b16 %v275
      %v356 = vunpack.c.l.b16 %v276
      %v357 = vunpack.c.l.b16 %v277
      %v358 = vunpack.c.l.b16 %v278
      %v359 = vunpack.c.l.b16 %v279
      %v360 = vunpack.c.l.b16 %v280
      %v361 = vunpack.c.l.b16 %v281
      %v362 = vunpack.c.l.b16 %v282
      %v363 = vunpack.c.l.b16 %v283
      %v364 = vunpack.c.l.b16 %v284
      %v365 = vpack.c.b16 %v334, %v333
      %v366 = vpack.c.b16 %v336, %v335
      %v367 = vpack.c.b16 %v338, %v337
      %v368 = vpack.c.b16 %v340, %v339
      %v369 = vpack.c.b16 %v342, %v341
      %v370 = vpack.c.b16 %v344, %v343
      %v371 = vpack.c.b16 %v346, %v345
      %v372 = vpack.c.b16 %v348, %v347
      %v373 = vpack.c.b16 %v350, %v349
      %v374 = vpack.c.b16 %v352, %v351
      %v375 = vpack.c.b16 %v354, %v353
      %v376 = vpack.c.b16 %v356, %v355
      %v377 = vpack.c.b16 %v358, %v357
      %v378 = vpack.c.b16 %v360, %v359
      %v379 = vpack.c.b16 %v362, %v361
      %v380 = vpack.c.b16 %v364, %v363
      %v413 = vunpack.c.l.b16 %v285
      %v414 = vunpack.c.l.b16 %v286
      %v415 = vunpack.c.l.b16 %v287
      %v416 = vunpack.c.l.b16 %v288
      %v417 = vunpack.c.l.b16 %v289
      %v418 = vunpack.c.l.b16 %v290
      %v419 = vunpack.c.l.b16 %v291
      %v420 = vunpack.c.l.b16 %v292
      %v421 = vunpack.c.l.b16 %v293
      %v422 = vunpack.c.l.b16 %v294
      %v423 = vunpack.c.l.b16 %v295
      %v424 = vunpack.c.l.b16 %v296
      %v425 = vunpack.c.l.b16 %v297
      %v426 = vunpack.c.l.b16 %v298
      %v427 = vunpack.c.l.b16 %v299
      %v428 = vunpack.c.l.b16 %v300
      %v429 = vpack.c.b16 %v414, %v413
      %v430 = vpack.c.b16 %v416, %v415
      %v431 = vpack.c.b16 %v418, %v417
      %v432 = vpack.c.b16 %v420, %v419
      %v433 = vpack.c.b16 %v422, %v421
      %v434 = vpack.c.b16 %v424, %v423
      %v435 = vpack.c.b16 %v426, %v425
      %v436 = vpack.c.b16 %v428, %v427
      %445 = vmatprep.subr.bf16.mxu0 0
      %446 = vmatpush1.bf16.msra.mxu0 %v436
      %447 = vmatprep.subr.bf16.mxu0 0
      %448 = vmatpush1.bf16.msra.mxu0 %v435
      %449 = vmatprep.subr.bf16.mxu0 0
      %450 = vmatpush1.bf16.msra.mxu0 %v434
      %451 = vmatprep.subr.bf16.mxu0 0
      %452 = vmatpush1.bf16.msra.mxu0 %v433
      %453 = vmatprep.subr.bf16.mxu0 0
      %454 = vmatpush1.bf16.msra.mxu0 %v432
      %455 = vmatprep.subr.bf16.mxu0 0
      %456 = vmatpush1.bf16.msra.mxu0 %v431
      %457 = vmatprep.subr.bf16.mxu0 0
      %458 = vmatpush1.bf16.msra.mxu0 %v430
      %459 = vmatprep.subr.bf16.mxu0 0
      %460 = vmatpush1.bf16.msra.mxu0 %v429
      %461 = vmatprep.subr.bf16.mxu0 0
      %462 = vmatpush2.bf16.msra.mxu0 0
      %463 = vmatprep.subr.bf16.mxu0 0
      %464 = vmatpush2.bf16.msra.mxu0 0
      %465 = vmatprep.subr.bf16.mxu0 0
      %466 = vmatpush2.bf16.msra.mxu0 0
      %467 = vmatprep.subr.bf16.mxu0 0
      %468 = vmatpush2.bf16.msra.mxu0 0
      %469 = vmatprep.subr.bf16.mxu0 0
      %470 = vmatpush2.bf16.msra.mxu0 0
      %471 = vmatprep.subr.bf16.mxu0 0
      %472 = vmatpush2.bf16.msra.mxu0 0
      %473 = vmatprep.subr.bf16.mxu0 0
      %474 = vmatpush2.bf16.msra.mxu0 0
      %475 = vmatprep.subr.bf16.mxu0 0
      %476 = vmatpush2.bf16.msra.mxu0 0
      %477 = vmatprep.mubr.bf16.mxu0 0
      %478 = vmatmul.mubr.bf16.gmra.mxu0 %v365
      %v479 = vpop.f32.mrf.mxu0
      %v480 = vadd.f32 0.0, %v479
      %v481 = vpop.f32.mrf.mxu0
      %v482 = vpop.f32.mrf.mxu0
      %v483 = vadd.f32 0.0, %v482
      %v484 = vpop.f32.mrf.mxu0
      %485 = vmatprep.mubr.bf16.mxu0 0
      %486 = vmatmul.mubr.bf16.gmra.mxu0 %v366
      %v487 = vpop.f32.mrf.mxu0
      %v488 = vadd.f32 0.0, %v487
      %v489 = vpop.f32.mrf.mxu0
      %v490 = vpop.f32.mrf.mxu0
      %v491 = vadd.f32 0.0, %v490
      %v492 = vpop.f32.mrf.mxu0
      %493 = vmatprep.mubr.bf16.mxu0 0
      %494 = vmatmul.mubr.bf16.gmra.mxu0 %v367
      %v495 = vpop.f32.mrf.mxu0
      %v496 = vadd.f32 0.0, %v495
      %v497 = vpop.f32.mrf.mxu0
      %v498 = vpop.f32.mrf.mxu0
      %v499 = vadd.f32 0.0, %v498
      %v500 = vpop.f32.mrf.mxu0
      %501 = vmatprep.mubr.bf16.mxu0 0
      %502 = vmatmul.mubr.bf16.gmra.mxu0 %v368
      %v503 = vpop.f32.mrf.mxu0
      %v504 = vadd.f32 0.0, %v503
      %v505 = vpop.f32.mrf.mxu0
      %v506 = vpop.f32.mrf.mxu0
      %v507 = vadd.f32 0.0, %v506
      %v508 = vpop.f32.mrf.mxu0
      %509 = vmatprep.mubr.bf16.mxu0 0
      %510 = vmatmul.mubr.bf16.gmra.mxu0 %v369
      %v511 = vpop.f32.mrf.mxu0
      %v512 = vadd.f32 0.0, %v511
      %v513 = vpop.f32.mrf.mxu0
      %v514 = vpop.f32.mrf.mxu0
      %v515 = vadd.f32 0.0, %v514
      %v516 = vpop.f32.mrf.mxu0
      %517 = vmatprep.mubr.bf16.mxu0 0
      %518 = vmatmul.mubr.bf16.gmra.mxu0 %v370
      %v519 = vpop.f32.mrf.mxu0
      %v520 = vadd.f32 0.0, %v519
      %v521 = vpop.f32.mrf.mxu0
      %v522 = vpop.f32.mrf.mxu0
      %v523 = vadd.f32 0.0, %v522
      %v524 = vpop.f32.mrf.mxu0
      %525 = vmatprep.mubr.bf16.mxu0 0
      %526 = vmatmul.mubr.bf16.gmra.mxu0 %v371
      %v527 = vpop.f32.mrf.mxu0
      %v528 = vadd.f32 0.0, %v527
      %v529 = vpop.f32.mrf.mxu0
      %v530 = vpop.f32.mrf.mxu0
      %v531 = vadd.f32 0.0, %v530
      %v532 = vpop.f32.mrf.mxu0
      %533 = vmatprep.mubr.bf16.mxu0 0
      %534 = vmatmul.mubr.bf16.gmra.mxu0 %v372
      %v535 = vpop.f32.mrf.mxu0
      %v536 = vadd.f32 0.0, %v535
      %v537 = vpop.f32.mrf.mxu0
      %v538 = vpop.f32.mrf.mxu0
      %v539 = vadd.f32 0.0, %v538
      %v540 = vpop.f32.mrf.mxu0
      %541 = vmatprep.mubr.bf16.mxu0 0
      %542 = vmatmul.mubr.bf16.gmra.mxu0 %v373
      %v543 = vpop.f32.mrf.mxu0
      %v544 = vadd.f32 0.0, %v543
      %v545 = vpop.f32.mrf.mxu0
      %v546 = vpop.f32.mrf.mxu0
      %v547 = vadd.f32 0.0, %v546
      %v548 = vpop.f32.mrf.mxu0
      %549 = vmatprep.mubr.bf16.mxu0 0
      %550 = vmatmul.mubr.bf16.gmra.mxu0 %v374
      %v551 = vpop.f32.mrf.mxu0
      %v552 = vadd.f32 0.0, %v551
      %v553 = vpop.f32.mrf.mxu0
      %v554 = vpop.f32.mrf.mxu0
      %v555 = vadd.f32 0.0, %v554
      %v556 = vpop.f32.mrf.mxu0
      %557 = vmatprep.mubr.bf16.mxu0 0
      %558 = vmatmul.mubr.bf16.gmra.mxu0 %v375
      %v559 = vpop.f32.mrf.mxu0
      %v560 = vadd.f32 0.0, %v559
      %v561 = vpop.f32.mrf.mxu0
      %v562 = vpop.f32.mrf.mxu0
      %v563 = vadd.f32 0.0, %v562
      %v564 = vpop.f32.mrf.mxu0
      %565 = vmatprep.mubr.bf16.mxu0 0
      %566 = vmatmul.mubr.bf16.gmra.mxu0 %v376
      %v567 = vpop.f32.mrf.mxu0
      %v568 = vadd.f32 0.0, %v567
      %v569 = vpop.f32.mrf.mxu0
      %v570 = vpop.f32.mrf.mxu0
      %v571 = vadd.f32 0.0, %v570
      %v572 = vpop.f32.mrf.mxu0
      %573 = vmatprep.mubr.bf16.mxu0 0
      %574 = vmatmul.mubr.bf16.gmra.mxu0 %v377
      %v575 = vpop.f32.mrf.mxu0
      %v576 = vadd.f32 0.0, %v575
      %v577 = vpop.f32.mrf.mxu0
      %v578 = vpop.f32.mrf.mxu0
      %v579 = vadd.f32 0.0, %v578
      %v580 = vpop.f32.mrf.mxu0
      %581 = vmatprep.mubr.bf16.mxu0 0
      %582 = vmatmul.mubr.bf16.gmra.mxu0 %v378
      %v583 = vpop.f32.mrf.mxu0
      %v584 = vadd.f32 0.0, %v583
      %v585 = vpop.f32.mrf.mxu0
      %v586 = vpop.f32.mrf.mxu0
      %v587 = vadd.f32 0.0, %v586
      %v588 = vpop.f32.mrf.mxu0
      %589 = vmatprep.mubr.bf16.mxu0 0
      %590 = vmatmul.mubr.bf16.gmra.mxu0 %v379
      %v591 = vpop.f32.mrf.mxu0
      %v592 = vadd.f32 0.0, %v591
      %v593 = vpop.f32.mrf.mxu0
      %v594 = vpop.f32.mrf.mxu0
      %v595 = vadd.f32 0.0, %v594
      %v596 = vpop.f32.mrf.mxu0
      %597 = vmatprep.mubr.bf16.mxu0 0
      %598 = vmatmul.mubr.bf16.gmra.mxu0 %v380
      %v599 = vpop.f32.mrf.mxu0
      %v600 = vadd.f32 0.0, %v599
      %v601 = vpop.f32.mrf.mxu0
      %v602 = vpop.f32.mrf.mxu0
      %v603 = vadd.f32 0.0, %v602
      %v604 = vpop.f32.mrf.mxu0
      %605 = vdwg.mxu0
      %v606 = vmax.f32 %v480, %v512
      %v607 = vmax.f32 %v483, %v515
      %v608 = vmax.f32 %v488, %v520
      %v609 = vmax.f32 %v491, %v523
      %v610 = vmax.f32 %v496, %v528
      %v611 = vmax.f32 %v499, %v531
      %v612 = vmax.f32 %v504, %v536
      %v613 = vmax.f32 %v507, %v539
      %v614 = vmax.f32 %v544, %v576
      %v615 = vmax.f32 %v547, %v579
      %v616 = vmax.f32 %v552, %v584
      %v617 = vmax.f32 %v555, %v587
      %v618 = vmax.f32 %v560, %v592
      %v619 = vmax.f32 %v563, %v595
      %v620 = vmax.f32 %v568, %v600
      %v621 = vmax.f32 %v571, %v603
      %v622 = vmax.f32 %v606, %v614
      %v623 = vmax.f32 %v607, %v615
      %v624 = vmax.f32 %v608, %v616
      %v625 = vmax.f32 %v609, %v617
      %v626 = vmax.f32 %v610, %v618
      %v627 = vmax.f32 %v611, %v619
      %v628 = vmax.f32 %v612, %v620
      %v629 = vmax.f32 %v613, %v621
      %v630 = vld [vmem:[%s5] sm:$0x1]
      %v632 = vlaneseq
      %v633 = vshrl.u32 %v632, 7
      %v634 = vsub.s32 0, %v633
      %v635 = vrot.slane %v630, %v634
      %v637 = vmul.f32 %v622, %v635
      %v638 = vmul.f32 %v623, %v635
      %v639 = vmul.f32 %v624, %v635
      %v640 = vmul.f32 %v625, %v635
      %v641 = vmul.f32 %v626, %v635
      %v642 = vmul.f32 %v627, %v635
      %v643 = vmul.f32 %v628, %v635
      %v644 = vmul.f32 %v629, %v635
      %s645 = scalar_lea.vmem %s5, 1
      %v646 = vld [vmem:[%s645] sm:$0x1]
      %v648 = vlaneseq
      %v649 = vshrl.u32 %v648, 7
      %v650 = vsub.s32 0, %v649
      %v651 = vrot.slane %v646, %v650
      %v653 = vadd.f32 %v637, %v651
      %v654 = vadd.f32 %v638, %v651
      %v655 = vadd.f32 %v639, %v651
      %v656 = vadd.f32 %v640, %v651
      %v657 = vadd.f32 %v641, %v651
      %v658 = vadd.f32 %v642, %v651
      %v659 = vadd.f32 %v643, %v651
      %v660 = vadd.f32 %v644, %v651
      %v661 = vmax.f32 %v653, 0.0
      %v662 = vmax.f32 %v654, 0.0
      %v663 = vmax.f32 %v655, 0.0
      %v664 = vmax.f32 %v656, 0.0
      %v665 = vmax.f32 %v657, 0.0
      %v666 = vmax.f32 %v658, 0.0
      %v667 = vmax.f32 %v659, 0.0
      %v668 = vmax.f32 %v660, 0.0
      %v669 = vpack.c.bf16 %v662, %v661
      %v670 = vpack.c.bf16 %v664, %v663
      %v671 = vpack.c.bf16 %v666, %v665
      %v672 = vpack.c.bf16 %v668, %v667
      %v673 = vld [vmem:[%s2] sm:$0xf]
      %v674 = vld [vmem:[%s2 + $0x4] sm:$0xf]
      %v675 = vld [vmem:[%s2 + $0x8] sm:$0xf]
      %v676 = vld [vmem:[%s2 + $0xc] sm:$0xf]
      %v677 = vld [vmem:[%s2 + $0x10] sm:$0xf]
      %v678 = vld [vmem:[%s2 + $0x14] sm:$0xf]
      %v679 = vld [vmem:[%s2 + $0x18] sm:$0xf]
      %v680 = vld [vmem:[%s2 + $0x1c] sm:$0xf]
      %v689 = vunpack.c.l.b16 %v673
      %v690 = vunpack.c.l.b16 %v674
      %v691 = vunpack.c.l.b16 %v675
      %v692 = vunpack.c.l.b16 %v676
      %v693 = vunpack.c.l.b16 %v677
      %v694 = vunpack.c.l.b16 %v678
      %v695 = vunpack.c.l.b16 %v679
      %v696 = vunpack.c.l.b16 %v680
      %v697 = vpack.c.b16 %v690, %v689
      %v698 = vpack.c.b16 %v692, %v691
      %v699 = vpack.c.b16 %v694, %v693
      %v700 = vpack.c.b16 %v696, %v695
      %vm701 = vcmask 523264
      %v703 = vsel %vm701, %v697, 0
      %v706 = vsel %vm701, %v698, 0
      %v709 = vsel %vm701, %v699, 0
      %v712 = vsel %vm701, %v700, 0
      %714 = vmatprep.subr.bf16.mxu0 0
      %715 = vmatpush1.bf16.msra.mxu0 0
      %716 = vmatprep.subr.bf16.mxu0 0
      %717 = vmatpush1.bf16.msra.mxu0 0
      %718 = vmatprep.subr.bf16.mxu0 0
      %719 = vmatpush1.bf16.msra.mxu0 0
      %720 = vmatprep.subr.bf16.mxu0 0
      %721 = vmatpush1.bf16.msra.mxu0 0
      %722 = vmatprep.subr.bf16.mxu0 0
      %723 = vmatpush1.bf16.msra.mxu0 %v672
      %724 = vmatprep.subr.bf16.mxu0 0
      %725 = vmatpush1.bf16.msra.mxu0 %v671
      %726 = vmatprep.subr.bf16.mxu0 0
      %727 = vmatpush1.bf16.msra.mxu0 %v670
      %728 = vmatprep.subr.bf16.mxu0 0
      %729 = vmatpush1.bf16.msra.mxu0 %v669
      %730 = vmatprep.subr.bf16.mxu0 0
      %731 = vmatpush2.bf16.msra.mxu0 0
      %732 = vmatprep.subr.bf16.mxu0 0
      %733 = vmatpush2.bf16.msra.mxu0 0
      %734 = vmatprep.subr.bf16.mxu0 0
      %735 = vmatpush2.bf16.msra.mxu0 0
      %736 = vmatprep.subr.bf16.mxu0 0
      %737 = vmatpush2.bf16.msra.mxu0 0
      %738 = vmatprep.subr.bf16.mxu0 0
      %739 = vmatpush2.bf16.msra.mxu0 0
      %740 = vmatprep.subr.bf16.mxu0 0
      %741 = vmatpush2.bf16.msra.mxu0 0
      %742 = vmatprep.subr.bf16.mxu0 0
      %743 = vmatpush2.bf16.msra.mxu0 0
      %744 = vmatprep.subr.bf16.mxu0 0
      %745 = vmatpush2.bf16.msra.mxu0 0
      %746 = vmatprep.mubr.bf16.mxu0 0
      %747 = vmatmul.mubr.bf16.gmra.mxu0 %v703
      %v748 = vpop.f32.mrf.mxu0
      %v749 = vadd.f32 0.0, %v748
      %v750 = vpop.f32.mrf.mxu0
      %v751 = vpop.f32.mrf.mxu0
      %v752 = vadd.f32 0.0, %v751
      %v753 = vpop.f32.mrf.mxu0
      %754 = vmatprep.mubr.bf16.mxu0 0
      %755 = vmatmul.mubr.bf16.gmra.mxu0 %v706
      %v756 = vpop.f32.mrf.mxu0
      %v757 = vadd.f32 0.0, %v756
      %v758 = vpop.f32.mrf.mxu0
      %v759 = vpop.f32.mrf.mxu0
      %v760 = vadd.f32 0.0, %v759
      %v761 = vpop.f32.mrf.mxu0
      %762 = vmatprep.mubr.bf16.mxu0 0
      %763 = vmatmul.mubr.bf16.gmra.mxu0 %v709
      %v764 = vpop.f32.mrf.mxu0
      %v765 = vadd.f32 0.0, %v764
      %v766 = vpop.f32.mrf.mxu0
      %v767 = vpop.f32.mrf.mxu0
      %v768 = vadd.f32 0.0, %v767
      %v769 = vpop.f32.mrf.mxu0
      %770 = vmatprep.mubr.bf16.mxu0 0
      %771 = vmatmul.mubr.bf16.gmra.mxu0 %v712
      %v772 = vpop.f32.mrf.mxu0
      %v773 = vadd.f32 0.0, %v772
      %v774 = vpop.f32.mrf.mxu0
      %v775 = vpop.f32.mrf.mxu0
      %v776 = vadd.f32 0.0, %v775
      %v777 = vpop.f32.mrf.mxu0
      %778 = vdwg.mxu0
      %v779 = vpack.c.bf16 %v752, %v749
      %v780 = vpack.c.bf16 %v760, %v757
      %v781 = vpack.c.bf16 %v768, %v765
      %v782 = vpack.c.bf16 %v776, %v773
      %v783 = vld [vmem:[%s3] sm:$0xf]
      %v784 = vld [vmem:[%s3 + $0x4] sm:$0xf]
      %v785 = vld [vmem:[%s3 + $0x8] sm:$0xf]
      %v786 = vld [vmem:[%s3 + $0xc] sm:$0xf]
      %v787 = vld [vmem:[%s3 + $0x10] sm:$0xf]
      %v788 = vld [vmem:[%s3 + $0x14] sm:$0xf]
      %v789 = vld [vmem:[%s3 + $0x18] sm:$0xf]
      %v790 = vld [vmem:[%s3 + $0x1c] sm:$0xf]
      %v791 = vld [vmem:[%s3 + $0x20] sm:$0xf]
      %v792 = vld [vmem:[%s3 + $0x24] sm:$0xf]
      %v793 = vld [vmem:[%s3 + $0x28] sm:$0xf]
      %v794 = vld [vmem:[%s3 + $0x2c] sm:$0xf]
      %v795 = vld [vmem:[%s3 + $0x30] sm:$0xf]
      %v796 = vld [vmem:[%s3 + $0x34] sm:$0xf]
      %v797 = vld [vmem:[%s3 + $0x38] sm:$0xf]
      %v798 = vld [vmem:[%s3 + $0x3c] sm:$0xf]
      %s799 = scalar_lea.vmem %s2, 32
      %v800 = vld [vmem:[%s799] sm:$0xf]
      %v801 = vld [vmem:[%s799 + $0x4] sm:$0xf]
      %v802 = vld [vmem:[%s799 + $0x8] sm:$0xf]
      %v803 = vld [vmem:[%s799 + $0xc] sm:$0xf]
      %v804 = vld [vmem:[%s799 + $0x10] sm:$0xf]
      %v805 = vld [vmem:[%s799 + $0x14] sm:$0xf]
      %v806 = vld [vmem:[%s799 + $0x18] sm:$0xf]
      %v807 = vld [vmem:[%s799 + $0x1c] sm:$0xf]
      %v816 = vunpack.c.l.b16 %v800
      %v817 = vunpack.c.l.b16 %v801
      %v818 = vunpack.c.l.b16 %v802
      %v819 = vunpack.c.l.b16 %v803
      %v820 = vunpack.c.l.b16 %v804
      %v821 = vunpack.c.l.b16 %v805
      %v822 = vunpack.c.l.b16 %v806
      %v823 = vunpack.c.l.b16 %v807
      %v824 = vpack.c.b16 %v817, %v816
      %v825 = vpack.c.b16 %v819, %v818
      %v826 = vpack.c.b16 %v821, %v820
      %v827 = vpack.c.b16 %v823, %v822
      %v829 = vsel %vm701, %v824, 0
      %v832 = vsel %vm701, %v825, 0
      %v835 = vsel %vm701, %v826, 0
      %v838 = vsel %vm701, %v827, 0
      %840 = vmatprep.subr.bf16.mxu0 0
      %841 = vmatpush1.bf16.msra.mxu0 0
      %842 = vmatprep.subr.bf16.mxu0 0
      %843 = vmatpush1.bf16.msra.mxu0 0
      %844 = vmatprep.subr.bf16.mxu0 0
      %845 = vmatpush1.bf16.msra.mxu0 0
      %846 = vmatprep.subr.bf16.mxu0 0
      %847 = vmatpush1.bf16.msra.mxu0 0
      %848 = vmatprep.subr.bf16.mxu0 0
      %849 = vmatpush1.bf16.msra.mxu0 %v672
      %850 = vmatprep.subr.bf16.mxu0 0
      %851 = vmatpush1.bf16.msra.mxu0 %v671
      %852 = vmatprep.subr.bf16.mxu0 0
      %853 = vmatpush1.bf16.msra.mxu0 %v670
      %854 = vmatprep.subr.bf16.mxu0 0
      %855 = vmatpush1.bf16.msra.mxu0 %v669
      %856 = vmatprep.subr.bf16.mxu0 0
      %857 = vmatpush2.bf16.msra.mxu0 0
      %858 = vmatprep.subr.bf16.mxu0 0
      %859 = vmatpush2.bf16.msra.mxu0 0
      %860 = vmatprep.subr.bf16.mxu0 0
      %861 = vmatpush2.bf16.msra.mxu0 0
      %862 = vmatprep.subr.bf16.mxu0 0
      %863 = vmatpush2.bf16.msra.mxu0 0
      %864 = vmatprep.subr.bf16.mxu0 0
      %865 = vmatpush2.bf16.msra.mxu0 0
      %866 = vmatprep.subr.bf16.mxu0 0
      %867 = vmatpush2.bf16.msra.mxu0 0
      %868 = vmatprep.subr.bf16.mxu0 0
      %869 = vmatpush2.bf16.msra.mxu0 0
      %870 = vmatprep.subr.bf16.mxu0 0
      %871 = vmatpush2.bf16.msra.mxu0 0
      %872 = vmatprep.mubr.bf16.mxu0 0
      %873 = vmatmul.mubr.bf16.gmra.mxu0 %v829
      %v874 = vpop.f32.mrf.mxu0
      %v875 = vadd.f32 0.0, %v874
      %v876 = vpop.f32.mrf.mxu0
      %v877 = vpop.f32.mrf.mxu0
      %v878 = vadd.f32 0.0, %v877
      %v879 = vpop.f32.mrf.mxu0
      %880 = vmatprep.mubr.bf16.mxu0 0
      %881 = vmatmul.mubr.bf16.gmra.mxu0 %v832
      %v882 = vpop.f32.mrf.mxu0
      %v883 = vadd.f32 0.0, %v882
      %v884 = vpop.f32.mrf.mxu0
      %v885 = vpop.f32.mrf.mxu0
      %v886 = vadd.f32 0.0, %v885
      %v887 = vpop.f32.mrf.mxu0
      %888 = vmatprep.mubr.bf16.mxu0 0
      %889 = vmatmul.mubr.bf16.gmra.mxu0 %v835
      %v890 = vpop.f32.mrf.mxu0
      %v891 = vadd.f32 0.0, %v890
      %v892 = vpop.f32.mrf.mxu0
      %v893 = vpop.f32.mrf.mxu0
      %v894 = vadd.f32 0.0, %v893
      %v895 = vpop.f32.mrf.mxu0
      %896 = vmatprep.mubr.bf16.mxu0 0
      %897 = vmatmul.mubr.bf16.gmra.mxu0 %v838
      %v898 = vpop.f32.mrf.mxu0
      %v899 = vadd.f32 0.0, %v898
      %v900 = vpop.f32.mrf.mxu0
      %v901 = vpop.f32.mrf.mxu0
      %v902 = vadd.f32 0.0, %v901
      %v903 = vpop.f32.mrf.mxu0
      %904 = vdwg.mxu0
      %v905 = vpack.c.bf16 %v878, %v875
      %v906 = vpack.c.bf16 %v886, %v883
      %v907 = vpack.c.bf16 %v894, %v891
      %v908 = vpack.c.bf16 %v902, %v899
      %s909 = scalar_lea.vmem %s3, 64
      %v910 = vld [vmem:[%s909] sm:$0xf]
      %v911 = vld [vmem:[%s909 + $0x4] sm:$0xf]
      %v912 = vld [vmem:[%s909 + $0x8] sm:$0xf]
      %v913 = vld [vmem:[%s909 + $0xc] sm:$0xf]
      %v914 = vld [vmem:[%s909 + $0x10] sm:$0xf]
      %v915 = vld [vmem:[%s909 + $0x14] sm:$0xf]
      %v916 = vld [vmem:[%s909 + $0x18] sm:$0xf]
      %v917 = vld [vmem:[%s909 + $0x1c] sm:$0xf]
      %v918 = vld [vmem:[%s909 + $0x20] sm:$0xf]
      %v919 = vld [vmem:[%s909 + $0x24] sm:$0xf]
      %v920 = vld [vmem:[%s909 + $0x28] sm:$0xf]
      %v921 = vld [vmem:[%s909 + $0x2c] sm:$0xf]
      %v922 = vld [vmem:[%s909 + $0x30] sm:$0xf]
      %v923 = vld [vmem:[%s909 + $0x34] sm:$0xf]
      %v924 = vld [vmem:[%s909 + $0x38] sm:$0xf]
      %v925 = vld [vmem:[%s909 + $0x3c] sm:$0xf]
      %v942 = vunpack.c.l.b16 %v910
      %v943 = vunpack.c.l.b16 %v911
      %v944 = vunpack.c.l.b16 %v912
      %v945 = vunpack.c.l.b16 %v913
      %v946 = vunpack.c.l.b16 %v914
      %v947 = vunpack.c.l.b16 %v915
      %v948 = vunpack.c.l.b16 %v916
      %v949 = vunpack.c.l.b16 %v917
      %v950 = vunpack.c.l.b16 %v918
      %v951 = vunpack.c.l.b16 %v919
      %v952 = vunpack.c.l.b16 %v920
      %v953 = vunpack.c.l.b16 %v921
      %v954 = vunpack.c.l.b16 %v922
      %v955 = vunpack.c.l.b16 %v923
      %v956 = vunpack.c.l.b16 %v924
      %v957 = vunpack.c.l.b16 %v925
      %v958 = vpack.c.b16 %v943, %v942
      %v959 = vpack.c.b16 %v945, %v944
      %v960 = vpack.c.b16 %v947, %v946
      %v961 = vpack.c.b16 %v949, %v948
      %v962 = vpack.c.b16 %v951, %v950
      %v963 = vpack.c.b16 %v953, %v952
      %v964 = vpack.c.b16 %v955, %v954
      %v965 = vpack.c.b16 %v957, %v956
      %974 = vmatprep.subr.bf16.mxu0 0
      %975 = vmatpush1.bf16.msra.mxu0 %v965
      %976 = vmatprep.subr.bf16.mxu0 0
      %977 = vmatpush1.bf16.msra.mxu0 %v964
      %978 = vmatprep.subr.bf16.mxu0 0
      %979 = vmatpush1.bf16.msra.mxu0 %v963
      %980 = vmatprep.subr.bf16.mxu0 0
      %981 = vmatpush1.bf16.msra.mxu0 %v962
      %982 = vmatprep.subr.bf16.mxu0 0
      %983 = vmatpush1.bf16.msra.mxu0 %v961
      %984 = vmatprep.subr.bf16.mxu0 0
      %985 = vmatpush1.bf16.msra.mxu0 %v960
      %986 = vmatprep.subr.bf16.mxu0 0
      %987 = vmatpush1.bf16.msra.mxu0 %v959
      %988 = vmatprep.subr.bf16.mxu0 0
      %989 = vmatpush1.bf16.msra.mxu0 %v958
      %990 = vmatprep.subr.bf16.mxu0 0
      %991 = vmatpush2.bf16.msra.mxu0 0
      %992 = vmatprep.subr.bf16.mxu0 0
      %993 = vmatpush2.bf16.msra.mxu0 0
      %994 = vmatprep.subr.bf16.mxu0 0
      %995 = vmatpush2.bf16.msra.mxu0 0
      %996 = vmatprep.subr.bf16.mxu0 0
      %997 = vmatpush2.bf16.msra.mxu0 0
      %998 = vmatprep.subr.bf16.mxu0 0
      %999 = vmatpush2.bf16.msra.mxu0 0
      %1000 = vmatprep.subr.bf16.mxu0 0
      %1001 = vmatpush2.bf16.msra.mxu0 0
      %1002 = vmatprep.subr.bf16.mxu0 0
      %1003 = vmatpush2.bf16.msra.mxu0 0
      %1004 = vmatprep.subr.bf16.mxu0 0
      %1005 = vmatpush2.bf16.msra.mxu0 0
      %1006 = vmatprep.mubr.bf16.mxu0 0
      %1007 = vmatmul.mubr.bf16.gmra.mxu0 %v905
      %v1008 = vpop.f32.mrf.mxu0
      %v1009 = vadd.f32 0.0, %v1008
      %v1010 = vpop.f32.mrf.mxu0
      %v1011 = vpop.f32.mrf.mxu0
      %v1012 = vadd.f32 0.0, %v1011
      %v1013 = vpop.f32.mrf.mxu0
      %1014 = vmatprep.mubr.bf16.mxu0 0
      %1015 = vmatmul.mubr.bf16.gmra.mxu0 %v906
      %v1016 = vpop.f32.mrf.mxu0
      %v1017 = vadd.f32 0.0, %v1016
      %v1018 = vpop.f32.mrf.mxu0
      %v1019 = vpop.f32.mrf.mxu0
      %v1020 = vadd.f32 0.0, %v1019
      %v1021 = vpop.f32.mrf.mxu0
      %1022 = vmatprep.mubr.bf16.mxu0 0
      %1023 = vmatmul.mubr.bf16.gmra.mxu0 %v907
      %v1024 = vpop.f32.mrf.mxu0
      %v1025 = vadd.f32 0.0, %v1024
      %v1026 = vpop.f32.mrf.mxu0
      %v1027 = vpop.f32.mrf.mxu0
      %v1028 = vadd.f32 0.0, %v1027
      %v1029 = vpop.f32.mrf.mxu0
      %1030 = vmatprep.mubr.bf16.mxu0 0
      %1031 = vmatmul.mubr.bf16.gmra.mxu0 %v908
      %v1032 = vpop.f32.mrf.mxu0
      %v1033 = vadd.f32 0.0, %v1032
      %v1034 = vpop.f32.mrf.mxu0
      %v1035 = vpop.f32.mrf.mxu0
      %v1036 = vadd.f32 0.0, %v1035
      %v1037 = vpop.f32.mrf.mxu0
      %1038 = vdwg.mxu0
      %v1055 = vunpack.c.l.b16 %v783
      %v1056 = vunpack.c.l.b16 %v784
      %v1057 = vunpack.c.l.b16 %v785
      %v1058 = vunpack.c.l.b16 %v786
      %v1059 = vunpack.c.l.b16 %v787
      %v1060 = vunpack.c.l.b16 %v788
      %v1061 = vunpack.c.l.b16 %v789
      %v1062 = vunpack.c.l.b16 %v790
      %v1063 = vunpack.c.l.b16 %v791
      %v1064 = vunpack.c.l.b16 %v792
      %v1065 = vunpack.c.l.b16 %v793
      %v1066 = vunpack.c.l.b16 %v794
      %v1067 = vunpack.c.l.b16 %v795
      %v1068 = vunpack.c.l.b16 %v796
      %v1069 = vunpack.c.l.b16 %v797
      %v1070 = vunpack.c.l.b16 %v798
      %v1071 = vpack.c.b16 %v1056, %v1055
      %v1072 = vpack.c.b16 %v1058, %v1057
      %v1073 = vpack.c.b16 %v1060, %v1059
      %v1074 = vpack.c.b16 %v1062, %v1061
      %v1075 = vpack.c.b16 %v1064, %v1063
      %v1076 = vpack.c.b16 %v1066, %v1065
      %v1077 = vpack.c.b16 %v1068, %v1067
      %v1078 = vpack.c.b16 %v1070, %v1069
      %1087 = vmatprep.subr.bf16.mxu0 0
      %1088 = vmatpush1.bf16.msra.mxu0 %v1078
      %1089 = vmatprep.subr.bf16.mxu0 0
      %1090 = vmatpush1.bf16.msra.mxu0 %v1077
      %1091 = vmatprep.subr.bf16.mxu0 0
      %1092 = vmatpush1.bf16.msra.mxu0 %v1076
      %1093 = vmatprep.subr.bf16.mxu0 0
      %1094 = vmatpush1.bf16.msra.mxu0 %v1075
      %1095 = vmatprep.subr.bf16.mxu0 0
      %1096 = vmatpush1.bf16.msra.mxu0 %v1074
      %1097 = vmatprep.subr.bf16.mxu0 0
      %1098 = vmatpush1.bf16.msra.mxu0 %v1073
      %1099 = vmatprep.subr.bf16.mxu0 0
      %1100 = vmatpush1.bf16.msra.mxu0 %v1072
      %1101 = vmatprep.subr.bf16.mxu0 0
      %1102 = vmatpush1.bf16.msra.mxu0 %v1071
      %1103 = vmatprep.subr.bf16.mxu0 0
      %1104 = vmatpush2.bf16.msra.mxu0 0
      %1105 = vmatprep.subr.bf16.mxu0 0
      %1106 = vmatpush2.bf16.msra.mxu0 0
      %1107 = vmatprep.subr.bf16.mxu0 0
      %1108 = vmatpush2.bf16.msra.mxu0 0
      %1109 = vmatprep.subr.bf16.mxu0 0
      %1110 = vmatpush2.bf16.msra.mxu0 0
      %1111 = vmatprep.subr.bf16.mxu0 0
      %1112 = vmatpush2.bf16.msra.mxu0 0
      %1113 = vmatprep.subr.bf16.mxu0 0
      %1114 = vmatpush2.bf16.msra.mxu0 0
      %1115 = vmatprep.subr.bf16.mxu0 0
      %1116 = vmatpush2.bf16.msra.mxu0 0
      %1117 = vmatprep.subr.bf16.mxu0 0
      %1118 = vmatpush2.bf16.msra.mxu0 0
      %1119 = vmatprep.mubr.bf16.mxu0 0
      %1120 = vmatmul.mubr.bf16.gmra.mxu0 %v779
      %v1121 = vpop.f32.mrf.mxu0
      %v1122 = vadd.f32 %v1009, %v1121
      %v1123 = vpop.f32.mrf.mxu0
      %v1124 = vpop.f32.mrf.mxu0
      %v1125 = vadd.f32 %v1012, %v1124
      %v1126 = vpop.f32.mrf.mxu0
      %1127 = vmatprep.mubr.bf16.mxu0 0
      %1128 = vmatmul.mubr.bf16.gmra.mxu0 %v780
      %v1129 = vpop.f32.mrf.mxu0
      %v1130 = vadd.f32 %v1017, %v1129
      %v1131 = vpop.f32.mrf.mxu0
      %v1132 = vpop.f32.mrf.mxu0
      %v1133 = vadd.f32 %v1020, %v1132
      %v1134 = vpop.f32.mrf.mxu0
      %1135 = vmatprep.mubr.bf16.mxu0 0
      %1136 = vmatmul.mubr.bf16.gmra.mxu0 %v781
      %v1137 = vpop.f32.mrf.mxu0
      %v1138 = vadd.f32 %v1025, %v1137
      %v1139 = vpop.f32.mrf.mxu0
      %v1140 = vpop.f32.mrf.mxu0
      %v1141 = vadd.f32 %v1028, %v1140
      %v1142 = vpop.f32.mrf.mxu0
      %1143 = vmatprep.mubr.bf16.mxu0 0
      %1144 = vmatmul.mubr.bf16.gmra.mxu0 %v782
      %v1145 = vpop.f32.mrf.mxu0
      %v1146 = vadd.f32 %v1033, %v1145
      %v1147 = vpop.f32.mrf.mxu0
      %v1148 = vpop.f32.mrf.mxu0
      %v1149 = vadd.f32 %v1036, %v1148
      %v1150 = vpop.f32.mrf.mxu0
      %1151 = vdwg.mxu0
      %s1152 = scalar_lea.vmem %s2, 64
      %v1153 = vld [vmem:[%s1152] sm:$0xf]
      %v1154 = vld [vmem:[%s1152 + $0x4] sm:$0xf]
      %v1155 = vld [vmem:[%s1152 + $0x8] sm:$0xf]
      %v1156 = vld [vmem:[%s1152 + $0xc] sm:$0xf]
      %v1157 = vld [vmem:[%s1152 + $0x10] sm:$0xf]
      %v1158 = vld [vmem:[%s1152 + $0x14] sm:$0xf]
      %v1159 = vld [vmem:[%s1152 + $0x18] sm:$0xf]
      %v1160 = vld [vmem:[%s1152 + $0x1c] sm:$0xf]
      %v1169 = vunpack.c.l.b16 %v1153
      %v1170 = vunpack.c.l.b16 %v1154
      %v1171 = vunpack.c.l.b16 %v1155
      %v1172 = vunpack.c.l.b16 %v1156
      %v1173 = vunpack.c.l.b16 %v1157
      %v1174 = vunpack.c.l.b16 %v1158
      %v1175 = vunpack.c.l.b16 %v1159
      %v1176 = vunpack.c.l.b16 %v1160
      %v1177 = vpack.c.b16 %v1170, %v1169
      %v1178 = vpack.c.b16 %v1172, %v1171
      %v1179 = vpack.c.b16 %v1174, %v1173
      %v1180 = vpack.c.b16 %v1176, %v1175
      %v1182 = vsel %vm701, %v1177, 0
      %v1185 = vsel %vm701, %v1178, 0
      %v1188 = vsel %vm701, %v1179, 0
      %v1191 = vsel %vm701, %v1180, 0
      %1193 = vmatprep.subr.bf16.mxu0 0
      %1194 = vmatpush1.bf16.msra.mxu0 0
      %1195 = vmatprep.subr.bf16.mxu0 0
      %1196 = vmatpush1.bf16.msra.mxu0 0
      %1197 = vmatprep.subr.bf16.mxu0 0
      %1198 = vmatpush1.bf16.msra.mxu0 0
      %1199 = vmatprep.subr.bf16.mxu0 0
      %1200 = vmatpush1.bf16.msra.mxu0 0
      %1201 = vmatprep.subr.bf16.mxu0 0
      %1202 = vmatpush1.bf16.msra.mxu0 %v672
      %1203 = vmatprep.subr.bf16.mxu0 0
      %1204 = vmatpush1.bf16.msra.mxu0 %v671
      %1205 = vmatprep.subr.bf16.mxu0 0
      %1206 = vmatpush1.bf16.msra.mxu0 %v670
      %1207 = vmatprep.subr.bf16.mxu0 0
      %1208 = vmatpush1.bf16.msra.mxu0 %v669
      %1209 = vmatprep.subr.bf16.mxu0 0
      %1210 = vmatpush2.bf16.msra.mxu0 0
      %1211 = vmatprep.subr.bf16.mxu0 0
      %1212 = vmatpush2.bf16.msra.mxu0 0
      %1213 = vmatprep.subr.bf16.mxu0 0
      %1214 = vmatpush2.bf16.msra.mxu0 0
      %1215 = vmatprep.subr.bf16.mxu0 0
      %1216 = vmatpush2.bf16.msra.mxu0 0
      %1217 = vmatprep.subr.bf16.mxu0 0
      %1218 = vmatpush2.bf16.msra.mxu0 0
      %1219 = vmatprep.subr.bf16.mxu0 0
      %1220 = vmatpush2.bf16.msra.mxu0 0
      %1221 = vmatprep.subr.bf16.mxu0 0
      %1222 = vmatpush2.bf16.msra.mxu0 0
      %1223 = vmatprep.subr.bf16.mxu0 0
      %1224 = vmatpush2.bf16.msra.mxu0 0
      %1225 = vmatprep.mubr.bf16.mxu0 0
      %1226 = vmatmul.mubr.bf16.gmra.mxu0 %v1182
      %v1227 = vpop.f32.mrf.mxu0
      %v1228 = vadd.f32 0.0, %v1227
      %v1229 = vpop.f32.mrf.mxu0
      %v1230 = vpop.f32.mrf.mxu0
      %v1231 = vadd.f32 0.0, %v1230
      %v1232 = vpop.f32.mrf.mxu0
      %1233 = vmatprep.mubr.bf16.mxu0 0
      %1234 = vmatmul.mubr.bf16.gmra.mxu0 %v1185
      %v1235 = vpop.f32.mrf.mxu0
      %v1236 = vadd.f32 0.0, %v1235
      %v1237 = vpop.f32.mrf.mxu0
      %v1238 = vpop.f32.mrf.mxu0
      %v1239 = vadd.f32 0.0, %v1238
      %v1240 = vpop.f32.mrf.mxu0
      %1241 = vmatprep.mubr.bf16.mxu0 0
      %1242 = vmatmul.mubr.bf16.gmra.mxu0 %v1188
      %v1243 = vpop.f32.mrf.mxu0
      %v1244 = vadd.f32 0.0, %v1243
      %v1245 = vpop.f32.mrf.mxu0
      %v1246 = vpop.f32.mrf.mxu0
      %v1247 = vadd.f32 0.0, %v1246
      %v1248 = vpop.f32.mrf.mxu0
      %1249 = vmatprep.mubr.bf16.mxu0 0
      %1250 = vmatmul.mubr.bf16.gmra.mxu0 %v1191
      %v1251 = vpop.f32.mrf.mxu0
      %v1252 = vadd.f32 0.0, %v1251
      %v1253 = vpop.f32.mrf.mxu0
      %v1254 = vpop.f32.mrf.mxu0
      %v1255 = vadd.f32 0.0, %v1254
      %v1256 = vpop.f32.mrf.mxu0
      %1257 = vdwg.mxu0
      %v1258 = vpack.c.bf16 %v1231, %v1228
      %v1259 = vpack.c.bf16 %v1239, %v1236
      %v1260 = vpack.c.bf16 %v1247, %v1244
      %v1261 = vpack.c.bf16 %v1255, %v1252
      %s1262 = scalar_lea.vmem %s3, 128
      %v1263 = vld [vmem:[%s1262] sm:$0xf]
      %v1264 = vld [vmem:[%s1262 + $0x4] sm:$0xf]
      %v1265 = vld [vmem:[%s1262 + $0x8] sm:$0xf]
      %v1266 = vld [vmem:[%s1262 + $0xc] sm:$0xf]
      %v1267 = vld [vmem:[%s1262 + $0x10] sm:$0xf]
      %v1268 = vld [vmem:[%s1262 + $0x14] sm:$0xf]
      %v1269 = vld [vmem:[%s1262 + $0x18] sm:$0xf]
      %v1270 = vld [vmem:[%s1262 + $0x1c] sm:$0xf]
      %v1271 = vld [vmem:[%s1262 + $0x20] sm:$0xf]
      %v1272 = vld [vmem:[%s1262 + $0x24] sm:$0xf]
      %v1273 = vld [vmem:[%s1262 + $0x28] sm:$0xf]
      %v1274 = vld [vmem:[%s1262 + $0x2c] sm:$0xf]
      %v1275 = vld [vmem:[%s1262 + $0x30] sm:$0xf]
      %v1276 = vld [vmem:[%s1262 + $0x34] sm:$0xf]
      %v1277 = vld [vmem:[%s1262 + $0x38] sm:$0xf]
      %v1278 = vld [vmem:[%s1262 + $0x3c] sm:$0xf]
      %v1295 = vunpack.c.l.b16 %v1263
      %v1296 = vunpack.c.l.b16 %v1264
      %v1297 = vunpack.c.l.b16 %v1265
      %v1298 = vunpack.c.l.b16 %v1266
      %v1299 = vunpack.c.l.b16 %v1267
      %v1300 = vunpack.c.l.b16 %v1268
      %v1301 = vunpack.c.l.b16 %v1269
      %v1302 = vunpack.c.l.b16 %v1270
      %v1303 = vunpack.c.l.b16 %v1271
      %v1304 = vunpack.c.l.b16 %v1272
      %v1305 = vunpack.c.l.b16 %v1273
      %v1306 = vunpack.c.l.b16 %v1274
      %v1307 = vunpack.c.l.b16 %v1275
      %v1308 = vunpack.c.l.b16 %v1276
      %v1309 = vunpack.c.l.b16 %v1277
      %v1310 = vunpack.c.l.b16 %v1278
      %v1311 = vpack.c.b16 %v1296, %v1295
      %v1312 = vpack.c.b16 %v1298, %v1297
      %v1313 = vpack.c.b16 %v1300, %v1299
      %v1314 = vpack.c.b16 %v1302, %v1301
      %v1315 = vpack.c.b16 %v1304, %v1303
      %v1316 = vpack.c.b16 %v1306, %v1305
      %v1317 = vpack.c.b16 %v1308, %v1307
      %v1318 = vpack.c.b16 %v1310, %v1309
      %1327 = vmatprep.subr.bf16.mxu0 0
      %1328 = vmatpush1.bf16.msra.mxu0 %v1318
      %1329 = vmatprep.subr.bf16.mxu0 0
      %1330 = vmatpush1.bf16.msra.mxu0 %v1317
      %1331 = vmatprep.subr.bf16.mxu0 0
      %1332 = vmatpush1.bf16.msra.mxu0 %v1316
      %1333 = vmatprep.subr.bf16.mxu0 0
      %1334 = vmatpush1.bf16.msra.mxu0 %v1315
      %1335 = vmatprep.subr.bf16.mxu0 0
      %1336 = vmatpush1.bf16.msra.mxu0 %v1314
      %1337 = vmatprep.subr.bf16.mxu0 0
      %1338 = vmatpush1.bf16.msra.mxu0 %v1313
      %1339 = vmatprep.subr.bf16.mxu0 0
      %1340 = vmatpush1.bf16.msra.mxu0 %v1312
      %1341 = vmatprep.subr.bf16.mxu0 0
      %1342 = vmatpush1.bf16.msra.mxu0 %v1311
      %1343 = vmatprep.subr.bf16.mxu0 0
      %1344 = vmatpush2.bf16.msra.mxu0 0
      %1345 = vmatprep.subr.bf16.mxu0 0
      %1346 = vmatpush2.bf16.msra.mxu0 0
      %1347 = vmatprep.subr.bf16.mxu0 0
      %1348 = vmatpush2.bf16.msra.mxu0 0
      %1349 = vmatprep.subr.bf16.mxu0 0
      %1350 = vmatpush2.bf16.msra.mxu0 0
      %1351 = vmatprep.subr.bf16.mxu0 0
      %1352 = vmatpush2.bf16.msra.mxu0 0
      %1353 = vmatprep.subr.bf16.mxu0 0
      %1354 = vmatpush2.bf16.msra.mxu0 0
      %1355 = vmatprep.subr.bf16.mxu0 0
      %1356 = vmatpush2.bf16.msra.mxu0 0
      %1357 = vmatprep.subr.bf16.mxu0 0
      %1358 = vmatpush2.bf16.msra.mxu0 0
      %1359 = vmatprep.mubr.bf16.mxu0 0
      %1360 = vmatmul.mubr.bf16.gmra.mxu0 %v1258
      %v1361 = vpop.f32.mrf.mxu0
      %v1362 = vadd.f32 0.0, %v1361
      %v1363 = vpop.f32.mrf.mxu0
      %v1364 = vpop.f32.mrf.mxu0
      %v1365 = vadd.f32 0.0, %v1364
      %v1366 = vpop.f32.mrf.mxu0
      %1367 = vmatprep.mubr.bf16.mxu0 0
      %1368 = vmatmul.mubr.bf16.gmra.mxu0 %v1259
      %v1369 = vpop.f32.mrf.mxu0
      %v1370 = vadd.f32 0.0, %v1369
      %v1371 = vpop.f32.mrf.mxu0
      %v1372 = vpop.f32.mrf.mxu0
      %v1373 = vadd.f32 0.0, %v1372
      %v1374 = vpop.f32.mrf.mxu0
      %1375 = vmatprep.mubr.bf16.mxu0 0
      %1376 = vmatmul.mubr.bf16.gmra.mxu0 %v1260
      %v1377 = vpop.f32.mrf.mxu0
      %v1378 = vadd.f32 0.0, %v1377
      %v1379 = vpop.f32.mrf.mxu0
      %v1380 = vpop.f32.mrf.mxu0
      %v1381 = vadd.f32 0.0, %v1380
      %v1382 = vpop.f32.mrf.mxu0
      %1383 = vmatprep.mubr.bf16.mxu0 0
      %1384 = vmatmul.mubr.bf16.gmra.mxu0 %v1261
      %v1385 = vpop.f32.mrf.mxu0
      %v1386 = vadd.f32 0.0, %v1385
      %v1387 = vpop.f32.mrf.mxu0
      %v1388 = vpop.f32.mrf.mxu0
      %v1389 = vadd.f32 0.0, %v1388
      %v1390 = vpop.f32.mrf.mxu0
      %1391 = vdwg.mxu0
      %v1392 = vadd.f32 %v1122, %v1362
      %v1393 = vadd.f32 %v1125, %v1365
      %v1394 = vadd.f32 %v1130, %v1370
      %v1395 = vadd.f32 %v1133, %v1373
      %v1396 = vadd.f32 %v1138, %v1378
      %v1397 = vadd.f32 %v1141, %v1381
      %v1398 = vadd.f32 %v1146, %v1386
      %v1399 = vadd.f32 %v1149, %v1389
      %s1400 = scalar_lea.vmem %s2, 96
      %v1401 = vld [vmem:[%s1400] sm:$0xf]
      %v1402 = vld [vmem:[%s1400 + $0x4] sm:$0xf]
      %v1403 = vld [vmem:[%s1400 + $0x8] sm:$0xf]
      %v1404 = vld [vmem:[%s1400 + $0xc] sm:$0xf]
      %v1405 = vld [vmem:[%s1400 + $0x10] sm:$0xf]
      %v1406 = vld [vmem:[%s1400 + $0x14] sm:$0xf]
      %v1407 = vld [vmem:[%s1400 + $0x18] sm:$0xf]
      %v1408 = vld [vmem:[%s1400 + $0x1c] sm:$0xf]
      %v1417 = vunpack.c.l.b16 %v1401
      %v1418 = vunpack.c.l.b16 %v1402
      %v1419 = vunpack.c.l.b16 %v1403
      %v1420 = vunpack.c.l.b16 %v1404
      %v1421 = vunpack.c.l.b16 %v1405
      %v1422 = vunpack.c.l.b16 %v1406
      %v1423 = vunpack.c.l.b16 %v1407
      %v1424 = vunpack.c.l.b16 %v1408
      %v1425 = vpack.c.b16 %v1418, %v1417
      %v1426 = vpack.c.b16 %v1420, %v1419
      %v1427 = vpack.c.b16 %v1422, %v1421
      %v1428 = vpack.c.b16 %v1424, %v1423
      %v1430 = vsel %vm701, %v1425, 0
      %v1433 = vsel %vm701, %v1426, 0
      %v1436 = vsel %vm701, %v1427, 0
      %v1439 = vsel %vm701, %v1428, 0
      %1441 = vmatprep.subr.bf16.mxu0 0
      %1442 = vmatpush1.bf16.msra.mxu0 0
      %1443 = vmatprep.subr.bf16.mxu0 0
      %1444 = vmatpush1.bf16.msra.mxu0 0
      %1445 = vmatprep.subr.bf16.mxu0 0
      %1446 = vmatpush1.bf16.msra.mxu0 0
      %1447 = vmatprep.subr.bf16.mxu0 0
      %1448 = vmatpush1.bf16.msra.mxu0 0
      %1449 = vmatprep.subr.bf16.mxu0 0
      %1450 = vmatpush1.bf16.msra.mxu0 %v672
      %1451 = vmatprep.subr.bf16.mxu0 0
      %1452 = vmatpush1.bf16.msra.mxu0 %v671
      %1453 = vmatprep.subr.bf16.mxu0 0
      %1454 = vmatpush1.bf16.msra.mxu0 %v670
      %1455 = vmatprep.subr.bf16.mxu0 0
      %1456 = vmatpush1.bf16.msra.mxu0 %v669
      %1457 = vmatprep.subr.bf16.mxu0 0
      %1458 = vmatpush2.bf16.msra.mxu0 0
      %1459 = vmatprep.subr.bf16.mxu0 0
      %1460 = vmatpush2.bf16.msra.mxu0 0
      %1461 = vmatprep.subr.bf16.mxu0 0
      %1462 = vmatpush2.bf16.msra.mxu0 0
      %1463 = vmatprep.subr.bf16.mxu0 0
      %1464 = vmatpush2.bf16.msra.mxu0 0
      %1465 = vmatprep.subr.bf16.mxu0 0
      %1466 = vmatpush2.bf16.msra.mxu0 0
      %1467 = vmatprep.subr.bf16.mxu0 0
      %1468 = vmatpush2.bf16.msra.mxu0 0
      %1469 = vmatprep.subr.bf16.mxu0 0
      %1470 = vmatpush2.bf16.msra.mxu0 0
      %1471 = vmatprep.subr.bf16.mxu0 0
      %1472 = vmatpush2.bf16.msra.mxu0 0
      %1473 = vmatprep.mubr.bf16.mxu0 0
      %1474 = vmatmul.mubr.bf16.gmra.mxu0 %v1430
      %v1475 = vpop.f32.mrf.mxu0
      %v1476 = vadd.f32 0.0, %v1475
      %v1477 = vpop.f32.mrf.mxu0
      %v1478 = vpop.f32.mrf.mxu0
      %v1479 = vadd.f32 0.0, %v1478
      %v1480 = vpop.f32.mrf.mxu0
      %1481 = vmatprep.mubr.bf16.mxu0 0
      %1482 = vmatmul.mubr.bf16.gmra.mxu0 %v1433
      %v1483 = vpop.f32.mrf.mxu0
      %v1484 = vadd.f32 0.0, %v1483
      %v1485 = vpop.f32.mrf.mxu0
      %v1486 = vpop.f32.mrf.mxu0
      %v1487 = vadd.f32 0.0, %v1486
      %v1488 = vpop.f32.mrf.mxu0
      %1489 = vmatprep.mubr.bf16.mxu0 0
      %1490 = vmatmul.mubr.bf16.gmra.mxu0 %v1436
      %v1491 = vpop.f32.mrf.mxu0
      %v1492 = vadd.f32 0.0, %v1491
      %v1493 = vpop.f32.mrf.mxu0
      %v1494 = vpop.f32.mrf.mxu0
      %v1495 = vadd.f32 0.0, %v1494
      %v1496 = vpop.f32.mrf.mxu0
      %1497 = vmatprep.mubr.bf16.mxu0 0
      %1498 = vmatmul.mubr.bf16.gmra.mxu0 %v1439
      %v1499 = vpop.f32.mrf.mxu0
      %v1500 = vadd.f32 0.0, %v1499
      %v1501 = vpop.f32.mrf.mxu0
      %v1502 = vpop.f32.mrf.mxu0
      %v1503 = vadd.f32 0.0, %v1502
      %v1504 = vpop.f32.mrf.mxu0
      %1505 = vdwg.mxu0
      %v1506 = vpack.c.bf16 %v1479, %v1476
      %v1507 = vpack.c.bf16 %v1487, %v1484
      %v1508 = vpack.c.bf16 %v1495, %v1492
      %v1509 = vpack.c.bf16 %v1503, %v1500
      %s1510 = scalar_lea.vmem %s3, 192
      %v1511 = vld [vmem:[%s1510] sm:$0xf]
      %v1512 = vld [vmem:[%s1510 + $0x4] sm:$0xf]
      %v1513 = vld [vmem:[%s1510 + $0x8] sm:$0xf]
      %v1514 = vld [vmem:[%s1510 + $0xc] sm:$0xf]
      %v1515 = vld [vmem:[%s1510 + $0x10] sm:$0xf]
      %v1516 = vld [vmem:[%s1510 + $0x14] sm:$0xf]
      %v1517 = vld [vmem:[%s1510 + $0x18] sm:$0xf]
      %v1518 = vld [vmem:[%s1510 + $0x1c] sm:$0xf]
      %v1519 = vld [vmem:[%s1510 + $0x20] sm:$0xf]
      %v1520 = vld [vmem:[%s1510 + $0x24] sm:$0xf]
      %v1521 = vld [vmem:[%s1510 + $0x28] sm:$0xf]
      %v1522 = vld [vmem:[%s1510 + $0x2c] sm:$0xf]
      %v1523 = vld [vmem:[%s1510 + $0x30] sm:$0xf]
      %v1524 = vld [vmem:[%s1510 + $0x34] sm:$0xf]
      %v1525 = vld [vmem:[%s1510 + $0x38] sm:$0xf]
      %v1526 = vld [vmem:[%s1510 + $0x3c] sm:$0xf]
      %v1543 = vunpack.c.l.b16 %v1511
      %v1544 = vunpack.c.l.b16 %v1512
      %v1545 = vunpack.c.l.b16 %v1513
      %v1546 = vunpack.c.l.b16 %v1514
      %v1547 = vunpack.c.l.b16 %v1515
      %v1548 = vunpack.c.l.b16 %v1516
      %v1549 = vunpack.c.l.b16 %v1517
      %v1550 = vunpack.c.l.b16 %v1518
      %v1551 = vunpack.c.l.b16 %v1519
      %v1552 = vunpack.c.l.b16 %v1520
      %v1553 = vunpack.c.l.b16 %v1521
      %v1554 = vunpack.c.l.b16 %v1522
      %v1555 = vunpack.c.l.b16 %v1523
      %v1556 = vunpack.c.l.b16 %v1524
      %v1557 = vunpack.c.l.b16 %v1525
      %v1558 = vunpack.c.l.b16 %v1526
      %v1559 = vpack.c.b16 %v1544, %v1543
      %v1560 = vpack.c.b16 %v1546, %v1545
      %v1561 = vpack.c.b16 %v1548, %v1547
      %v1562 = vpack.c.b16 %v1550, %v1549
      %v1563 = vpack.c.b16 %v1552, %v1551
      %v1564 = vpack.c.b16 %v1554, %v1553
      %v1565 = vpack.c.b16 %v1556, %v1555
      %v1566 = vpack.c.b16 %v1558, %v1557
      %1575 = vmatprep.subr.bf16.mxu0 0
      %1576 = vmatpush1.bf16.msra.mxu0 %v1566
      %1577 = vmatprep.subr.bf16.mxu0 0
      %1578 = vmatpush1.bf16.msra.mxu0 %v1565
      %1579 = vmatprep.subr.bf16.mxu0 0
      %1580 = vmatpush1.bf16.msra.mxu0 %v1564
      %1581 = vmatprep.subr.bf16.mxu0 0
      %1582 = vmatpush1.bf16.msra.mxu0 %v1563
      %1583 = vmatprep.subr.bf16.mxu0 0
      %1584 = vmatpush1.bf16.msra.mxu0 %v1562
      %1585 = vmatprep.subr.bf16.mxu0 0
      %1586 = vmatpush1.bf16.msra.mxu0 %v1561
      %1587 = vmatprep.subr.bf16.mxu0 0
      %1588 = vmatpush1.bf16.msra.mxu0 %v1560
      %1589 = vmatprep.subr.bf16.mxu0 0
      %1590 = vmatpush1.bf16.msra.mxu0 %v1559
      %1591 = vmatprep.subr.bf16.mxu0 0
      %1592 = vmatpush2.bf16.msra.mxu0 0
      %1593 = vmatprep.subr.bf16.mxu0 0
      %1594 = vmatpush2.bf16.msra.mxu0 0
      %1595 = vmatprep.subr.bf16.mxu0 0
      %1596 = vmatpush2.bf16.msra.mxu0 0
      %1597 = vmatprep.subr.bf16.mxu0 0
      %1598 = vmatpush2.bf16.msra.mxu0 0
      %1599 = vmatprep.subr.bf16.mxu0 0
      %1600 = vmatpush2.bf16.msra.mxu0 0
      %1601 = vmatprep.subr.bf16.mxu0 0
      %1602 = vmatpush2.bf16.msra.mxu0 0
      %1603 = vmatprep.subr.bf16.mxu0 0
      %1604 = vmatpush2.bf16.msra.mxu0 0
      %1605 = vmatprep.subr.bf16.mxu0 0
      %1606 = vmatpush2.bf16.msra.mxu0 0
      %1607 = vmatprep.mubr.bf16.mxu0 0
      %1608 = vmatmul.mubr.bf16.gmra.mxu0 %v1506
      %v1609 = vpop.f32.mrf.mxu0
      %v1610 = vadd.f32 0.0, %v1609
      %v1611 = vpop.f32.mrf.mxu0
      %v1612 = vpop.f32.mrf.mxu0
      %v1613 = vadd.f32 0.0, %v1612
      %v1614 = vpop.f32.mrf.mxu0
      %1615 = vmatprep.mubr.bf16.mxu0 0
      %1616 = vmatmul.mubr.bf16.gmra.mxu0 %v1507
      %v1617 = vpop.f32.mrf.mxu0
      %v1618 = vadd.f32 0.0, %v1617
      %v1619 = vpop.f32.mrf.mxu0
      %v1620 = vpop.f32.mrf.mxu0
      %v1621 = vadd.f32 0.0, %v1620
      %v1622 = vpop.f32.mrf.mxu0
      %1623 = vmatprep.mubr.bf16.mxu0 0
      %1624 = vmatmul.mubr.bf16.gmra.mxu0 %v1508
      %v1625 = vpop.f32.mrf.mxu0
      %v1626 = vadd.f32 0.0, %v1625
      %v1627 = vpop.f32.mrf.mxu0
      %v1628 = vpop.f32.mrf.mxu0
      %v1629 = vadd.f32 0.0, %v1628
      %v1630 = vpop.f32.mrf.mxu0
      %1631 = vmatprep.mubr.bf16.mxu0 0
      %1632 = vmatmul.mubr.bf16.gmra.mxu0 %v1509
      %v1633 = vpop.f32.mrf.mxu0
      %v1634 = vadd.f32 0.0, %v1633
      %v1635 = vpop.f32.mrf.mxu0
      %v1636 = vpop.f32.mrf.mxu0
      %v1637 = vadd.f32 0.0, %v1636
      %v1638 = vpop.f32.mrf.mxu0
      %1639 = vdwg.mxu0
      %v1640 = vadd.f32 %v1392, %v1610
      %v1641 = vadd.f32 %v1393, %v1613
      %v1642 = vadd.f32 %v1394, %v1618
      %v1643 = vadd.f32 %v1395, %v1621
      %v1644 = vadd.f32 %v1396, %v1626
      %v1645 = vadd.f32 %v1397, %v1629
      %v1646 = vadd.f32 %v1398, %v1634
      %v1647 = vadd.f32 %v1399, %v1637
      %s1648 = scalar_lea.vmem %s2, 128
      %v1649 = vld [vmem:[%s1648] sm:$0xf]
      %v1650 = vld [vmem:[%s1648 + $0x4] sm:$0xf]
      %v1651 = vld [vmem:[%s1648 + $0x8] sm:$0xf]
      %v1652 = vld [vmem:[%s1648 + $0xc] sm:$0xf]
      %v1653 = vld [vmem:[%s1648 + $0x10] sm:$0xf]
      %v1654 = vld [vmem:[%s1648 + $0x14] sm:$0xf]
      %v1655 = vld [vmem:[%s1648 + $0x18] sm:$0xf]
      %v1656 = vld [vmem:[%s1648 + $0x1c] sm:$0xf]
      %v1665 = vunpack.c.l.b16 %v1649
      %v1666 = vunpack.c.l.b16 %v1650
      %v1667 = vunpack.c.l.b16 %v1651
      %v1668 = vunpack.c.l.b16 %v1652
      %v1669 = vunpack.c.l.b16 %v1653
      %v1670 = vunpack.c.l.b16 %v1654
      %v1671 = vunpack.c.l.b16 %v1655
      %v1672 = vunpack.c.l.b16 %v1656
      %v1673 = vpack.c.b16 %v1666, %v1665
      %v1674 = vpack.c.b16 %v1668, %v1667
      %v1675 = vpack.c.b16 %v1670, %v1669
      %v1676 = vpack.c.b16 %v1672, %v1671
      %v1678 = vsel %vm701, %v1673, 0
      %v1681 = vsel %vm701, %v1674, 0
      %v1684 = vsel %vm701, %v1675, 0
      %v1687 = vsel %vm701, %v1676, 0
      %1689 = vmatprep.subr.bf16.mxu0 0
      %1690 = vmatpush1.bf16.msra.mxu0 0
      %1691 = vmatprep.subr.bf16.mxu0 0
      %1692 = vmatpush1.bf16.msra.mxu0 0
      %1693 = vmatprep.subr.bf16.mxu0 0
      %1694 = vmatpush1.bf16.msra.mxu0 0
      %1695 = vmatprep.subr.bf16.mxu0 0
      %1696 = vmatpush1.bf16.msra.mxu0 0
      %1697 = vmatprep.subr.bf16.mxu0 0
      %1698 = vmatpush1.bf16.msra.mxu0 %v672
      %1699 = vmatprep.subr.bf16.mxu0 0
      %1700 = vmatpush1.bf16.msra.mxu0 %v671
      %1701 = vmatprep.subr.bf16.mxu0 0
      %1702 = vmatpush1.bf16.msra.mxu0 %v670
      %1703 = vmatprep.subr.bf16.mxu0 0
      %1704 = vmatpush1.bf16.msra.mxu0 %v669
      %1705 = vmatprep.subr.bf16.mxu0 0
      %1706 = vmatpush2.bf16.msra.mxu0 0
      %1707 = vmatprep.subr.bf16.mxu0 0
      %1708 = vmatpush2.bf16.msra.mxu0 0
      %1709 = vmatprep.subr.bf16.mxu0 0
      %1710 = vmatpush2.bf16.msra.mxu0 0
      %1711 = vmatprep.subr.bf16.mxu0 0
      %1712 = vmatpush2.bf16.msra.mxu0 0
      %1713 = vmatprep.subr.bf16.mxu0 0
      %1714 = vmatpush2.bf16.msra.mxu0 0
      %1715 = vmatprep.subr.bf16.mxu0 0
      %1716 = vmatpush2.bf16.msra.mxu0 0
      %1717 = vmatprep.subr.bf16.mxu0 0
      %1718 = vmatpush2.bf16.msra.mxu0 0
      %1719 = vmatprep.subr.bf16.mxu0 0
      %1720 = vmatpush2.bf16.msra.mxu0 0
      %1721 = vmatprep.mubr.bf16.mxu0 0
      %1722 = vmatmul.mubr.bf16.gmra.mxu0 %v1678
      %v1723 = vpop.f32.mrf.mxu0
      %v1724 = vadd.f32 0.0, %v1723
      %v1725 = vpop.f32.mrf.mxu0
      %v1726 = vpop.f32.mrf.mxu0
      %v1727 = vadd.f32 0.0, %v1726
      %v1728 = vpop.f32.mrf.mxu0
      %1729 = vmatprep.mubr.bf16.mxu0 0
      %1730 = vmatmul.mubr.bf16.gmra.mxu0 %v1681
      %v1731 = vpop.f32.mrf.mxu0
      %v1732 = vadd.f32 0.0, %v1731
      %v1733 = vpop.f32.mrf.mxu0
      %v1734 = vpop.f32.mrf.mxu0
      %v1735 = vadd.f32 0.0, %v1734
      %v1736 = vpop.f32.mrf.mxu0
      %1737 = vmatprep.mubr.bf16.mxu0 0
      %1738 = vmatmul.mubr.bf16.gmra.mxu0 %v1684
      %v1739 = vpop.f32.mrf.mxu0
      %v1740 = vadd.f32 0.0, %v1739
      %v1741 = vpop.f32.mrf.mxu0
      %v1742 = vpop.f32.mrf.mxu0
      %v1743 = vadd.f32 0.0, %v1742
      %v1744 = vpop.f32.mrf.mxu0
      %1745 = vmatprep.mubr.bf16.mxu0 0
      %1746 = vmatmul.mubr.bf16.gmra.mxu0 %v1687
      %v1747 = vpop.f32.mrf.mxu0
      %v1748 = vadd.f32 0.0, %v1747
      %v1749 = vpop.f32.mrf.mxu0
      %v1750 = vpop.f32.mrf.mxu0
      %v1751 = vadd.f32 0.0, %v1750
      %v1752 = vpop.f32.mrf.mxu0
      %1753 = vdwg.mxu0
      %v1754 = vpack.c.bf16 %v1727, %v1724
      %v1755 = vpack.c.bf16 %v1735, %v1732
      %v1756 = vpack.c.bf16 %v1743, %v1740
      %v1757 = vpack.c.bf16 %v1751, %v1748
      %s1758 = scalar_lea.vmem %s3, 256
      %v1759 = vld [vmem:[%s1758] sm:$0xf]
      %v1760 = vld [vmem:[%s1758 + $0x4] sm:$0xf]
      %v1761 = vld [vmem:[%s1758 + $0x8] sm:$0xf]
      %v1762 = vld [vmem:[%s1758 + $0xc] sm:$0xf]
      %v1763 = vld [vmem:[%s1758 + $0x10] sm:$0xf]
      %v1764 = vld [vmem:[%s1758 + $0x14] sm:$0xf]
      %v1765 = vld [vmem:[%s1758 + $0x18] sm:$0xf]
      %v1766 = vld [vmem:[%s1758 + $0x1c] sm:$0xf]
      %v1767 = vld [vmem:[%s1758 + $0x20] sm:$0xf]
      %v1768 = vld [vmem:[%s1758 + $0x24] sm:$0xf]
      %v1769 = vld [vmem:[%s1758 + $0x28] sm:$0xf]
      %v1770 = vld [vmem:[%s1758 + $0x2c] sm:$0xf]
      %v1771 = vld [vmem:[%s1758 + $0x30] sm:$0xf]
      %v1772 = vld [vmem:[%s1758 + $0x34] sm:$0xf]
      %v1773 = vld [vmem:[%s1758 + $0x38] sm:$0xf]
      %v1774 = vld [vmem:[%s1758 + $0x3c] sm:$0xf]
      %v1791 = vunpack.c.l.b16 %v1759
      %v1792 = vunpack.c.l.b16 %v1760
      %v1793 = vunpack.c.l.b16 %v1761
      %v1794 = vunpack.c.l.b16 %v1762
      %v1795 = vunpack.c.l.b16 %v1763
      %v1796 = vunpack.c.l.b16 %v1764
      %v1797 = vunpack.c.l.b16 %v1765
      %v1798 = vunpack.c.l.b16 %v1766
      %v1799 = vunpack.c.l.b16 %v1767
      %v1800 = vunpack.c.l.b16 %v1768
      %v1801 = vunpack.c.l.b16 %v1769
      %v1802 = vunpack.c.l.b16 %v1770
      %v1803 = vunpack.c.l.b16 %v1771
      %v1804 = vunpack.c.l.b16 %v1772
      %v1805 = vunpack.c.l.b16 %v1773
      %v1806 = vunpack.c.l.b16 %v1774
      %v1807 = vpack.c.b16 %v1792, %v1791
      %v1808 = vpack.c.b16 %v1794, %v1793
      %v1809 = vpack.c.b16 %v1796, %v1795
      %v1810 = vpack.c.b16 %v1798, %v1797
      %v1811 = vpack.c.b16 %v1800, %v1799
      %v1812 = vpack.c.b16 %v1802, %v1801
      %v1813 = vpack.c.b16 %v1804, %v1803
      %v1814 = vpack.c.b16 %v1806, %v1805
      %1823 = vmatprep.subr.bf16.mxu0 0
      %1824 = vmatpush1.bf16.msra.mxu0 %v1814
      %1825 = vmatprep.subr.bf16.mxu0 0
      %1826 = vmatpush1.bf16.msra.mxu0 %v1813
      %1827 = vmatprep.subr.bf16.mxu0 0
      %1828 = vmatpush1.bf16.msra.mxu0 %v1812
      %1829 = vmatprep.subr.bf16.mxu0 0
      %1830 = vmatpush1.bf16.msra.mxu0 %v1811
      %1831 = vmatprep.subr.bf16.mxu0 0
      %1832 = vmatpush1.bf16.msra.mxu0 %v1810
      %1833 = vmatprep.subr.bf16.mxu0 0
      %1834 = vmatpush1.bf16.msra.mxu0 %v1809
      %1835 = vmatprep.subr.bf16.mxu0 0
      %1836 = vmatpush1.bf16.msra.mxu0 %v1808
      %1837 = vmatprep.subr.bf16.mxu0 0
      %1838 = vmatpush1.bf16.msra.mxu0 %v1807
      %1839 = vmatprep.subr.bf16.mxu0 0
      %1840 = vmatpush2.bf16.msra.mxu0 0
      %1841 = vmatprep.subr.bf16.mxu0 0
      %1842 = vmatpush2.bf16.msra.mxu0 0
      %1843 = vmatprep.subr.bf16.mxu0 0
      %1844 = vmatpush2.bf16.msra.mxu0 0
      %1845 = vmatprep.subr.bf16.mxu0 0
      %1846 = vmatpush2.bf16.msra.mxu0 0
      %1847 = vmatprep.subr.bf16.mxu0 0
      %1848 = vmatpush2.bf16.msra.mxu0 0
      %1849 = vmatprep.subr.bf16.mxu0 0
      %1850 = vmatpush2.bf16.msra.mxu0 0
      %1851 = vmatprep.subr.bf16.mxu0 0
      %1852 = vmatpush2.bf16.msra.mxu0 0
      %1853 = vmatprep.subr.bf16.mxu0 0
      %1854 = vmatpush2.bf16.msra.mxu0 0
      %1855 = vmatprep.mubr.bf16.mxu0 0
      %1856 = vmatmul.mubr.bf16.gmra.mxu0 %v1754
      %v1857 = vpop.f32.mrf.mxu0
      %v1858 = vadd.f32 0.0, %v1857
      %v1859 = vpop.f32.mrf.mxu0
      %v1860 = vpop.f32.mrf.mxu0
      %v1861 = vadd.f32 0.0, %v1860
      %v1862 = vpop.f32.mrf.mxu0
      %1863 = vmatprep.mubr.bf16.mxu0 0
      %1864 = vmatmul.mubr.bf16.gmra.mxu0 %v1755
      %v1865 = vpop.f32.mrf.mxu0
      %v1866 = vadd.f32 0.0, %v1865
      %v1867 = vpop.f32.mrf.mxu0
      %v1868 = vpop.f32.mrf.mxu0
      %v1869 = vadd.f32 0.0, %v1868
      %v1870 = vpop.f32.mrf.mxu0
      %1871 = vmatprep.mubr.bf16.mxu0 0
      %1872 = vmatmul.mubr.bf16.gmra.mxu0 %v1756
      %v1873 = vpop.f32.mrf.mxu0
      %v1874 = vadd.f32 0.0, %v1873
      %v1875 = vpop.f32.mrf.mxu0
      %v1876 = vpop.f32.mrf.mxu0
      %v1877 = vadd.f32 0.0, %v1876
      %v1878 = vpop.f32.mrf.mxu0
      %1879 = vmatprep.mubr.bf16.mxu0 0
      %1880 = vmatmul.mubr.bf16.gmra.mxu0 %v1757
      %v1881 = vpop.f32.mrf.mxu0
      %v1882 = vadd.f32 0.0, %v1881
      %v1883 = vpop.f32.mrf.mxu0
      %v1884 = vpop.f32.mrf.mxu0
      %v1885 = vadd.f32 0.0, %v1884
      %v1886 = vpop.f32.mrf.mxu0
      %1887 = vdwg.mxu0
      %v1888 = vadd.f32 %v1640, %v1858
      %v1889 = vadd.f32 %v1641, %v1861
      %v1890 = vadd.f32 %v1642, %v1866
      %v1891 = vadd.f32 %v1643, %v1869
      %v1892 = vadd.f32 %v1644, %v1874
      %v1893 = vadd.f32 %v1645, %v1877
      %v1894 = vadd.f32 %v1646, %v1882
      %v1895 = vadd.f32 %v1647, %v1885
      %s1896 = scalar_lea.vmem %s2, 160
      %v1897 = vld [vmem:[%s1896] sm:$0xf]
      %v1898 = vld [vmem:[%s1896 + $0x4] sm:$0xf]
      %v1899 = vld [vmem:[%s1896 + $0x8] sm:$0xf]
      %v1900 = vld [vmem:[%s1896 + $0xc] sm:$0xf]
      %v1901 = vld [vmem:[%s1896 + $0x10] sm:$0xf]
      %v1902 = vld [vmem:[%s1896 + $0x14] sm:$0xf]
      %v1903 = vld [vmem:[%s1896 + $0x18] sm:$0xf]
      %v1904 = vld [vmem:[%s1896 + $0x1c] sm:$0xf]
      %v1913 = vunpack.c.l.b16 %v1897
      %v1914 = vunpack.c.l.b16 %v1898
      %v1915 = vunpack.c.l.b16 %v1899
      %v1916 = vunpack.c.l.b16 %v1900
      %v1917 = vunpack.c.l.b16 %v1901
      %v1918 = vunpack.c.l.b16 %v1902
      %v1919 = vunpack.c.l.b16 %v1903
      %v1920 = vunpack.c.l.b16 %v1904
      %v1921 = vpack.c.b16 %v1914, %v1913
      %v1922 = vpack.c.b16 %v1916, %v1915
      %v1923 = vpack.c.b16 %v1918, %v1917
      %v1924 = vpack.c.b16 %v1920, %v1919
      %v1926 = vsel %vm701, %v1921, 0
      %v1929 = vsel %vm701, %v1922, 0
      %v1932 = vsel %vm701, %v1923, 0
      %v1935 = vsel %vm701, %v1924, 0
      %1937 = vmatprep.subr.bf16.mxu0 0
      %1938 = vmatpush1.bf16.msra.mxu0 0
      %1939 = vmatprep.subr.bf16.mxu0 0
      %1940 = vmatpush1.bf16.msra.mxu0 0
      %1941 = vmatprep.subr.bf16.mxu0 0
      %1942 = vmatpush1.bf16.msra.mxu0 0
      %1943 = vmatprep.subr.bf16.mxu0 0
      %1944 = vmatpush1.bf16.msra.mxu0 0
      %1945 = vmatprep.subr.bf16.mxu0 0
      %1946 = vmatpush1.bf16.msra.mxu0 %v672
      %1947 = vmatprep.subr.bf16.mxu0 0
      %1948 = vmatpush1.bf16.msra.mxu0 %v671
      %1949 = vmatprep.subr.bf16.mxu0 0
      %1950 = vmatpush1.bf16.msra.mxu0 %v670
      %1951 = vmatprep.subr.bf16.mxu0 0
      %1952 = vmatpush1.bf16.msra.mxu0 %v669
      %1953 = vmatprep.subr.bf16.mxu0 0
      %1954 = vmatpush2.bf16.msra.mxu0 0
      %1955 = vmatprep.subr.bf16.mxu0 0
      %1956 = vmatpush2.bf16.msra.mxu0 0
      %1957 = vmatprep.subr.bf16.mxu0 0
      %1958 = vmatpush2.bf16.msra.mxu0 0
      %1959 = vmatprep.subr.bf16.mxu0 0
      %1960 = vmatpush2.bf16.msra.mxu0 0
      %1961 = vmatprep.subr.bf16.mxu0 0
      %1962 = vmatpush2.bf16.msra.mxu0 0
      %1963 = vmatprep.subr.bf16.mxu0 0
      %1964 = vmatpush2.bf16.msra.mxu0 0
      %1965 = vmatprep.subr.bf16.mxu0 0
      %1966 = vmatpush2.bf16.msra.mxu0 0
      %1967 = vmatprep.subr.bf16.mxu0 0
      %1968 = vmatpush2.bf16.msra.mxu0 0
      %1969 = vmatprep.mubr.bf16.mxu0 0
      %1970 = vmatmul.mubr.bf16.gmra.mxu0 %v1926
      %v1971 = vpop.f32.mrf.mxu0
      %v1972 = vadd.f32 0.0, %v1971
      %v1973 = vpop.f32.mrf.mxu0
      %v1974 = vpop.f32.mrf.mxu0
      %v1975 = vadd.f32 0.0, %v1974
      %v1976 = vpop.f32.mrf.mxu0
      %1977 = vmatprep.mubr.bf16.mxu0 0
      %1978 = vmatmul.mubr.bf16.gmra.mxu0 %v1929
      %v1979 = vpop.f32.mrf.mxu0
      %v1980 = vadd.f32 0.0, %v1979
      %v1981 = vpop.f32.mrf.mxu0
      %v1982 = vpop.f32.mrf.mxu0
      %v1983 = vadd.f32 0.0, %v1982
      %v1984 = vpop.f32.mrf.mxu0
      %1985 = vmatprep.mubr.bf16.mxu0 0
      %1986 = vmatmul.mubr.bf16.gmra.mxu0 %v1932
      %v1987 = vpop.f32.mrf.mxu0
      %v1988 = vadd.f32 0.0, %v1987
      %v1989 = vpop.f32.mrf.mxu0
      %v1990 = vpop.f32.mrf.mxu0
      %v1991 = vadd.f32 0.0, %v1990
      %v1992 = vpop.f32.mrf.mxu0
      %1993 = vmatprep.mubr.bf16.mxu0 0
      %1994 = vmatmul.mubr.bf16.gmra.mxu0 %v1935
      %v1995 = vpop.f32.mrf.mxu0
      %v1996 = vadd.f32 0.0, %v1995
      %v1997 = vpop.f32.mrf.mxu0
      %v1998 = vpop.f32.mrf.mxu0
      %v1999 = vadd.f32 0.0, %v1998
      %v2000 = vpop.f32.mrf.mxu0
      %2001 = vdwg.mxu0
      %v2002 = vpack.c.bf16 %v1975, %v1972
      %v2003 = vpack.c.bf16 %v1983, %v1980
      %v2004 = vpack.c.bf16 %v1991, %v1988
      %v2005 = vpack.c.bf16 %v1999, %v1996
      %s2006 = scalar_lea.vmem %s3, 320
      %v2007 = vld [vmem:[%s2006] sm:$0xf]
      %v2008 = vld [vmem:[%s2006 + $0x4] sm:$0xf]
      %v2009 = vld [vmem:[%s2006 + $0x8] sm:$0xf]
      %v2010 = vld [vmem:[%s2006 + $0xc] sm:$0xf]
      %v2011 = vld [vmem:[%s2006 + $0x10] sm:$0xf]
      %v2012 = vld [vmem:[%s2006 + $0x14] sm:$0xf]
      %v2013 = vld [vmem:[%s2006 + $0x18] sm:$0xf]
      %v2014 = vld [vmem:[%s2006 + $0x1c] sm:$0xf]
      %v2015 = vld [vmem:[%s2006 + $0x20] sm:$0xf]
      %v2016 = vld [vmem:[%s2006 + $0x24] sm:$0xf]
      %v2017 = vld [vmem:[%s2006 + $0x28] sm:$0xf]
      %v2018 = vld [vmem:[%s2006 + $0x2c] sm:$0xf]
      %v2019 = vld [vmem:[%s2006 + $0x30] sm:$0xf]
      %v2020 = vld [vmem:[%s2006 + $0x34] sm:$0xf]
      %v2021 = vld [vmem:[%s2006 + $0x38] sm:$0xf]
      %v2022 = vld [vmem:[%s2006 + $0x3c] sm:$0xf]
      %v2039 = vunpack.c.l.b16 %v2007
      %v2040 = vunpack.c.l.b16 %v2008
      %v2041 = vunpack.c.l.b16 %v2009
      %v2042 = vunpack.c.l.b16 %v2010
      %v2043 = vunpack.c.l.b16 %v2011
      %v2044 = vunpack.c.l.b16 %v2012
      %v2045 = vunpack.c.l.b16 %v2013
      %v2046 = vunpack.c.l.b16 %v2014
      %v2047 = vunpack.c.l.b16 %v2015
      %v2048 = vunpack.c.l.b16 %v2016
      %v2049 = vunpack.c.l.b16 %v2017
      %v2050 = vunpack.c.l.b16 %v2018
      %v2051 = vunpack.c.l.b16 %v2019
      %v2052 = vunpack.c.l.b16 %v2020
      %v2053 = vunpack.c.l.b16 %v2021
      %v2054 = vunpack.c.l.b16 %v2022
      %v2055 = vpack.c.b16 %v2040, %v2039
      %v2056 = vpack.c.b16 %v2042, %v2041
      %v2057 = vpack.c.b16 %v2044, %v2043
      %v2058 = vpack.c.b16 %v2046, %v2045
      %v2059 = vpack.c.b16 %v2048, %v2047
      %v2060 = vpack.c.b16 %v2050, %v2049
      %v2061 = vpack.c.b16 %v2052, %v2051
      %v2062 = vpack.c.b16 %v2054, %v2053
      %2071 = vmatprep.subr.bf16.mxu0 0
      %2072 = vmatpush1.bf16.msra.mxu0 %v2062
      %2073 = vmatprep.subr.bf16.mxu0 0
      %2074 = vmatpush1.bf16.msra.mxu0 %v2061
      %2075 = vmatprep.subr.bf16.mxu0 0
      %2076 = vmatpush1.bf16.msra.mxu0 %v2060
      %2077 = vmatprep.subr.bf16.mxu0 0
      %2078 = vmatpush1.bf16.msra.mxu0 %v2059
      %2079 = vmatprep.subr.bf16.mxu0 0
      %2080 = vmatpush1.bf16.msra.mxu0 %v2058
      %2081 = vmatprep.subr.bf16.mxu0 0
      %2082 = vmatpush1.bf16.msra.mxu0 %v2057
      %2083 = vmatprep.subr.bf16.mxu0 0
      %2084 = vmatpush1.bf16.msra.mxu0 %v2056
      %2085 = vmatprep.subr.bf16.mxu0 0
      %2086 = vmatpush1.bf16.msra.mxu0 %v2055
      %2087 = vmatprep.subr.bf16.mxu0 0
      %2088 = vmatpush2.bf16.msra.mxu0 0
      %2089 = vmatprep.subr.bf16.mxu0 0
      %2090 = vmatpush2.bf16.msra.mxu0 0
      %2091 = vmatprep.subr.bf16.mxu0 0
      %2092 = vmatpush2.bf16.msra.mxu0 0
      %2093 = vmatprep.subr.bf16.mxu0 0
      %2094 = vmatpush2.bf16.msra.mxu0 0
      %2095 = vmatprep.subr.bf16.mxu0 0
      %2096 = vmatpush2.bf16.msra.mxu0 0
      %2097 = vmatprep.subr.bf16.mxu0 0
      %2098 = vmatpush2.bf16.msra.mxu0 0
      %2099 = vmatprep.subr.bf16.mxu0 0
      %2100 = vmatpush2.bf16.msra.mxu0 0
      %2101 = vmatprep.subr.bf16.mxu0 0
      %2102 = vmatpush2.bf16.msra.mxu0 0
      %2103 = vmatprep.mubr.bf16.mxu0 0
      %2104 = vmatmul.mubr.bf16.gmra.mxu0 %v2002
      %v2105 = vpop.f32.mrf.mxu0
      %v2106 = vadd.f32 0.0, %v2105
      %v2107 = vpop.f32.mrf.mxu0
      %v2108 = vpop.f32.mrf.mxu0
      %v2109 = vadd.f32 0.0, %v2108
      %v2110 = vpop.f32.mrf.mxu0
      %2111 = vmatprep.mubr.bf16.mxu0 0
      %2112 = vmatmul.mubr.bf16.gmra.mxu0 %v2003
      %v2113 = vpop.f32.mrf.mxu0
      %v2114 = vadd.f32 0.0, %v2113
      %v2115 = vpop.f32.mrf.mxu0
      %v2116 = vpop.f32.mrf.mxu0
      %v2117 = vadd.f32 0.0, %v2116
      %v2118 = vpop.f32.mrf.mxu0
      %2119 = vmatprep.mubr.bf16.mxu0 0
      %2120 = vmatmul.mubr.bf16.gmra.mxu0 %v2004
      %v2121 = vpop.f32.mrf.mxu0
      %v2122 = vadd.f32 0.0, %v2121
      %v2123 = vpop.f32.mrf.mxu0
      %v2124 = vpop.f32.mrf.mxu0
      %v2125 = vadd.f32 0.0, %v2124
      %v2126 = vpop.f32.mrf.mxu0
      %2127 = vmatprep.mubr.bf16.mxu0 0
      %2128 = vmatmul.mubr.bf16.gmra.mxu0 %v2005
      %v2129 = vpop.f32.mrf.mxu0
      %v2130 = vadd.f32 0.0, %v2129
      %v2131 = vpop.f32.mrf.mxu0
      %v2132 = vpop.f32.mrf.mxu0
      %v2133 = vadd.f32 0.0, %v2132
      %v2134 = vpop.f32.mrf.mxu0
      %2135 = vdwg.mxu0
      %v2136 = vadd.f32 %v1888, %v2106
      %v2137 = vadd.f32 %v1889, %v2109
      %v2138 = vadd.f32 %v1890, %v2114
      %v2139 = vadd.f32 %v1891, %v2117
      %v2140 = vadd.f32 %v1892, %v2122
      %v2141 = vadd.f32 %v1893, %v2125
      %v2142 = vadd.f32 %v1894, %v2130
      %v2143 = vadd.f32 %v1895, %v2133
      %s2144 = scalar_lea.vmem %s2, 192
      %v2145 = vld [vmem:[%s2144] sm:$0xf]
      %v2146 = vld [vmem:[%s2144 + $0x4] sm:$0xf]
      %v2147 = vld [vmem:[%s2144 + $0x8] sm:$0xf]
      %v2148 = vld [vmem:[%s2144 + $0xc] sm:$0xf]
      %v2149 = vld [vmem:[%s2144 + $0x10] sm:$0xf]
      %v2150 = vld [vmem:[%s2144 + $0x14] sm:$0xf]
      %v2151 = vld [vmem:[%s2144 + $0x18] sm:$0xf]
      %v2152 = vld [vmem:[%s2144 + $0x1c] sm:$0xf]
      %v2161 = vunpack.c.l.b16 %v2145
      %v2162 = vunpack.c.l.b16 %v2146
      %v2163 = vunpack.c.l.b16 %v2147
      %v2164 = vunpack.c.l.b16 %v2148
      %v2165 = vunpack.c.l.b16 %v2149
      %v2166 = vunpack.c.l.b16 %v2150
      %v2167 = vunpack.c.l.b16 %v2151
      %v2168 = vunpack.c.l.b16 %v2152
      %v2169 = vpack.c.b16 %v2162, %v2161
      %v2170 = vpack.c.b16 %v2164, %v2163
      %v2171 = vpack.c.b16 %v2166, %v2165
      %v2172 = vpack.c.b16 %v2168, %v2167
      %v2174 = vsel %vm701, %v2169, 0
      %v2177 = vsel %vm701, %v2170, 0
      %v2180 = vsel %vm701, %v2171, 0
      %v2183 = vsel %vm701, %v2172, 0
      %2185 = vmatprep.subr.bf16.mxu0 0
      %2186 = vmatpush1.bf16.msra.mxu0 0
      %2187 = vmatprep.subr.bf16.mxu0 0
      %2188 = vmatpush1.bf16.msra.mxu0 0
      %2189 = vmatprep.subr.bf16.mxu0 0
      %2190 = vmatpush1.bf16.msra.mxu0 0
      %2191 = vmatprep.subr.bf16.mxu0 0
      %2192 = vmatpush1.bf16.msra.mxu0 0
      %2193 = vmatprep.subr.bf16.mxu0 0
      %2194 = vmatpush1.bf16.msra.mxu0 %v672
      %2195 = vmatprep.subr.bf16.mxu0 0
      %2196 = vmatpush1.bf16.msra.mxu0 %v671
      %2197 = vmatprep.subr.bf16.mxu0 0
      %2198 = vmatpush1.bf16.msra.mxu0 %v670
      %2199 = vmatprep.subr.bf16.mxu0 0
      %2200 = vmatpush1.bf16.msra.mxu0 %v669
      %2201 = vmatprep.subr.bf16.mxu0 0
      %2202 = vmatpush2.bf16.msra.mxu0 0
      %2203 = vmatprep.subr.bf16.mxu0 0
      %2204 = vmatpush2.bf16.msra.mxu0 0
      %2205 = vmatprep.subr.bf16.mxu0 0
      %2206 = vmatpush2.bf16.msra.mxu0 0
      %2207 = vmatprep.subr.bf16.mxu0 0
      %2208 = vmatpush2.bf16.msra.mxu0 0
      %2209 = vmatprep.subr.bf16.mxu0 0
      %2210 = vmatpush2.bf16.msra.mxu0 0
      %2211 = vmatprep.subr.bf16.mxu0 0
      %2212 = vmatpush2.bf16.msra.mxu0 0
      %2213 = vmatprep.subr.bf16.mxu0 0
      %2214 = vmatpush2.bf16.msra.mxu0 0
      %2215 = vmatprep.subr.bf16.mxu0 0
      %2216 = vmatpush2.bf16.msra.mxu0 0
      %2217 = vmatprep.mubr.bf16.mxu0 0
      %2218 = vmatmul.mubr.bf16.gmra.mxu0 %v2174
      %v2219 = vpop.f32.mrf.mxu0
      %v2220 = vadd.f32 0.0, %v2219
      %v2221 = vpop.f32.mrf.mxu0
      %v2222 = vpop.f32.mrf.mxu0
      %v2223 = vadd.f32 0.0, %v2222
      %v2224 = vpop.f32.mrf.mxu0
      %2225 = vmatprep.mubr.bf16.mxu0 0
      %2226 = vmatmul.mubr.bf16.gmra.mxu0 %v2177
      %v2227 = vpop.f32.mrf.mxu0
      %v2228 = vadd.f32 0.0, %v2227
      %v2229 = vpop.f32.mrf.mxu0
      %v2230 = vpop.f32.mrf.mxu0
      %v2231 = vadd.f32 0.0, %v2230
      %v2232 = vpop.f32.mrf.mxu0
      %2233 = vmatprep.mubr.bf16.mxu0 0
      %2234 = vmatmul.mubr.bf16.gmra.mxu0 %v2180
      %v2235 = vpop.f32.mrf.mxu0
      %v2236 = vadd.f32 0.0, %v2235
      %v2237 = vpop.f32.mrf.mxu0
      %v2238 = vpop.f32.mrf.mxu0
      %v2239 = vadd.f32 0.0, %v2238
      %v2240 = vpop.f32.mrf.mxu0
      %2241 = vmatprep.mubr.bf16.mxu0 0
      %2242 = vmatmul.mubr.bf16.gmra.mxu0 %v2183
      %v2243 = vpop.f32.mrf.mxu0
      %v2244 = vadd.f32 0.0, %v2243
      %v2245 = vpop.f32.mrf.mxu0
      %v2246 = vpop.f32.mrf.mxu0
      %v2247 = vadd.f32 0.0, %v2246
      %v2248 = vpop.f32.mrf.mxu0
      %2249 = vdwg.mxu0
      %v2250 = vpack.c.bf16 %v2223, %v2220
      %v2251 = vpack.c.bf16 %v2231, %v2228
      %v2252 = vpack.c.bf16 %v2239, %v2236
      %v2253 = vpack.c.bf16 %v2247, %v2244
      %s2254 = scalar_lea.vmem %s3, 384
      %v2255 = vld [vmem:[%s2254] sm:$0xf]
      %v2256 = vld [vmem:[%s2254 + $0x4] sm:$0xf]
      %v2257 = vld [vmem:[%s2254 + $0x8] sm:$0xf]
      %v2258 = vld [vmem:[%s2254 + $0xc] sm:$0xf]
      %v2259 = vld [vmem:[%s2254 + $0x10] sm:$0xf]
      %v2260 = vld [vmem:[%s2254 + $0x14] sm:$0xf]
      %v2261 = vld [vmem:[%s2254 + $0x18] sm:$0xf]
      %v2262 = vld [vmem:[%s2254 + $0x1c] sm:$0xf]
      %v2263 = vld [vmem:[%s2254 + $0x20] sm:$0xf]
      %v2264 = vld [vmem:[%s2254 + $0x24] sm:$0xf]
      %v2265 = vld [vmem:[%s2254 + $0x28] sm:$0xf]
      %v2266 = vld [vmem:[%s2254 + $0x2c] sm:$0xf]
      %v2267 = vld [vmem:[%s2254 + $0x30] sm:$0xf]
      %v2268 = vld [vmem:[%s2254 + $0x34] sm:$0xf]
      %v2269 = vld [vmem:[%s2254 + $0x38] sm:$0xf]
      %v2270 = vld [vmem:[%s2254 + $0x3c] sm:$0xf]
      %v2287 = vunpack.c.l.b16 %v2255
      %v2288 = vunpack.c.l.b16 %v2256
      %v2289 = vunpack.c.l.b16 %v2257
      %v2290 = vunpack.c.l.b16 %v2258
      %v2291 = vunpack.c.l.b16 %v2259
      %v2292 = vunpack.c.l.b16 %v2260
      %v2293 = vunpack.c.l.b16 %v2261
      %v2294 = vunpack.c.l.b16 %v2262
      %v2295 = vunpack.c.l.b16 %v2263
      %v2296 = vunpack.c.l.b16 %v2264
      %v2297 = vunpack.c.l.b16 %v2265
      %v2298 = vunpack.c.l.b16 %v2266
      %v2299 = vunpack.c.l.b16 %v2267
      %v2300 = vunpack.c.l.b16 %v2268
      %v2301 = vunpack.c.l.b16 %v2269
      %v2302 = vunpack.c.l.b16 %v2270
      %v2303 = vpack.c.b16 %v2288, %v2287
      %v2304 = vpack.c.b16 %v2290, %v2289
      %v2305 = vpack.c.b16 %v2292, %v2291
      %v2306 = vpack.c.b16 %v2294, %v2293
      %v2307 = vpack.c.b16 %v2296, %v2295
      %v2308 = vpack.c.b16 %v2298, %v2297
      %v2309 = vpack.c.b16 %v2300, %v2299
      %v2310 = vpack.c.b16 %v2302, %v2301
      %2319 = vmatprep.subr.bf16.mxu0 0
      %2320 = vmatpush1.bf16.msra.mxu0 %v2310
      %2321 = vmatprep.subr.bf16.mxu0 0
      %2322 = vmatpush1.bf16.msra.mxu0 %v2309
      %2323 = vmatprep.subr.bf16.mxu0 0
      %2324 = vmatpush1.bf16.msra.mxu0 %v2308
      %2325 = vmatprep.subr.bf16.mxu0 0
      %2326 = vmatpush1.bf16.msra.mxu0 %v2307
      %2327 = vmatprep.subr.bf16.mxu0 0
      %2328 = vmatpush1.bf16.msra.mxu0 %v2306
      %2329 = vmatprep.subr.bf16.mxu0 0
      %2330 = vmatpush1.bf16.msra.mxu0 %v2305
      %2331 = vmatprep.subr.bf16.mxu0 0
      %2332 = vmatpush1.bf16.msra.mxu0 %v2304
      %2333 = vmatprep.subr.bf16.mxu0 0
      %2334 = vmatpush1.bf16.msra.mxu0 %v2303
      %2335 = vmatprep.subr.bf16.mxu0 0
      %2336 = vmatpush2.bf16.msra.mxu0 0
      %2337 = vmatprep.subr.bf16.mxu0 0
      %2338 = vmatpush2.bf16.msra.mxu0 0
      %2339 = vmatprep.subr.bf16.mxu0 0
      %2340 = vmatpush2.bf16.msra.mxu0 0
      %2341 = vmatprep.subr.bf16.mxu0 0
      %2342 = vmatpush2.bf16.msra.mxu0 0
      %2343 = vmatprep.subr.bf16.mxu0 0
      %2344 = vmatpush2.bf16.msra.mxu0 0
      %2345 = vmatprep.subr.bf16.mxu0 0
      %2346 = vmatpush2.bf16.msra.mxu0 0
      %2347 = vmatprep.subr.bf16.mxu0 0
      %2348 = vmatpush2.bf16.msra.mxu0 0
      %2349 = vmatprep.subr.bf16.mxu0 0
      %2350 = vmatpush2.bf16.msra.mxu0 0
      %2351 = vmatprep.mubr.bf16.mxu0 0
      %2352 = vmatmul.mubr.bf16.gmra.mxu0 %v2250
      %v2353 = vpop.f32.mrf.mxu0
      %v2354 = vadd.f32 0.0, %v2353
      %v2355 = vpop.f32.mrf.mxu0
      %v2356 = vpop.f32.mrf.mxu0
      %v2357 = vadd.f32 0.0, %v2356
      %v2358 = vpop.f32.mrf.mxu0
      %2359 = vmatprep.mubr.bf16.mxu0 0
      %2360 = vmatmul.mubr.bf16.gmra.mxu0 %v2251
      %v2361 = vpop.f32.mrf.mxu0
      %v2362 = vadd.f32 0.0, %v2361
      %v2363 = vpop.f32.mrf.mxu0
      %v2364 = vpop.f32.mrf.mxu0
      %v2365 = vadd.f32 0.0, %v2364
      %v2366 = vpop.f32.mrf.mxu0
      %2367 = vmatprep.mubr.bf16.mxu0 0
      %2368 = vmatmul.mubr.bf16.gmra.mxu0 %v2252
      %v2369 = vpop.f32.mrf.mxu0
      %v2370 = vadd.f32 0.0, %v2369
      %v2371 = vpop.f32.mrf.mxu0
      %v2372 = vpop.f32.mrf.mxu0
      %v2373 = vadd.f32 0.0, %v2372
      %v2374 = vpop.f32.mrf.mxu0
      %2375 = vmatprep.mubr.bf16.mxu0 0
      %2376 = vmatmul.mubr.bf16.gmra.mxu0 %v2253
      %v2377 = vpop.f32.mrf.mxu0
      %v2378 = vadd.f32 0.0, %v2377
      %v2379 = vpop.f32.mrf.mxu0
      %v2380 = vpop.f32.mrf.mxu0
      %v2381 = vadd.f32 0.0, %v2380
      %v2382 = vpop.f32.mrf.mxu0
      %2383 = vdwg.mxu0
      %v2384 = vadd.f32 %v2136, %v2354
      %v2385 = vadd.f32 %v2137, %v2357
      %v2386 = vadd.f32 %v2138, %v2362
      %v2387 = vadd.f32 %v2139, %v2365
      %v2388 = vadd.f32 %v2140, %v2370
      %v2389 = vadd.f32 %v2141, %v2373
      %v2390 = vadd.f32 %v2142, %v2378
      %v2391 = vadd.f32 %v2143, %v2381
      %s2392 = scalar_lea.vmem %s2, 224
      %v2393 = vld [vmem:[%s2392] sm:$0xf]
      %v2394 = vld [vmem:[%s2392 + $0x4] sm:$0xf]
      %v2395 = vld [vmem:[%s2392 + $0x8] sm:$0xf]
      %v2396 = vld [vmem:[%s2392 + $0xc] sm:$0xf]
      %v2397 = vld [vmem:[%s2392 + $0x10] sm:$0xf]
      %v2398 = vld [vmem:[%s2392 + $0x14] sm:$0xf]
      %v2399 = vld [vmem:[%s2392 + $0x18] sm:$0xf]
      %v2400 = vld [vmem:[%s2392 + $0x1c] sm:$0xf]
      %v2409 = vunpack.c.l.b16 %v2393
      %v2410 = vunpack.c.l.b16 %v2394
      %v2411 = vunpack.c.l.b16 %v2395
      %v2412 = vunpack.c.l.b16 %v2396
      %v2413 = vunpack.c.l.b16 %v2397
      %v2414 = vunpack.c.l.b16 %v2398
      %v2415 = vunpack.c.l.b16 %v2399
      %v2416 = vunpack.c.l.b16 %v2400
      %v2417 = vpack.c.b16 %v2410, %v2409
      %v2418 = vpack.c.b16 %v2412, %v2411
      %v2419 = vpack.c.b16 %v2414, %v2413
      %v2420 = vpack.c.b16 %v2416, %v2415
      %v2422 = vsel %vm701, %v2417, 0
      %v2425 = vsel %vm701, %v2418, 0
      %v2428 = vsel %vm701, %v2419, 0
      %v2431 = vsel %vm701, %v2420, 0
      %2433 = vmatprep.subr.bf16.mxu0 0
      %2434 = vmatpush1.bf16.msra.mxu0 0
      %2435 = vmatprep.subr.bf16.mxu0 0
      %2436 = vmatpush1.bf16.msra.mxu0 0
      %2437 = vmatprep.subr.bf16.mxu0 0
      %2438 = vmatpush1.bf16.msra.mxu0 0
      %2439 = vmatprep.subr.bf16.mxu0 0
      %2440 = vmatpush1.bf16.msra.mxu0 0
      %2441 = vmatprep.subr.bf16.mxu0 0
      %2442 = vmatpush1.bf16.msra.mxu0 %v672
      %2443 = vmatprep.subr.bf16.mxu0 0
      %2444 = vmatpush1.bf16.msra.mxu0 %v671
      %2445 = vmatprep.subr.bf16.mxu0 0
      %2446 = vmatpush1.bf16.msra.mxu0 %v670
      %2447 = vmatprep.subr.bf16.mxu0 0
      %2448 = vmatpush1.bf16.msra.mxu0 %v669
      %2449 = vmatprep.subr.bf16.mxu0 0
      %2450 = vmatpush2.bf16.msra.mxu0 0
      %2451 = vmatprep.subr.bf16.mxu0 0
      %2452 = vmatpush2.bf16.msra.mxu0 0
      %2453 = vmatprep.subr.bf16.mxu0 0
      %2454 = vmatpush2.bf16.msra.mxu0 0
      %2455 = vmatprep.subr.bf16.mxu0 0
      %2456 = vmatpush2.bf16.msra.mxu0 0
      %2457 = vmatprep.subr.bf16.mxu0 0
      %2458 = vmatpush2.bf16.msra.mxu0 0
      %2459 = vmatprep.subr.bf16.mxu0 0
      %2460 = vmatpush2.bf16.msra.mxu0 0
      %2461 = vmatprep.subr.bf16.mxu0 0
      %2462 = vmatpush2.bf16.msra.mxu0 0
      %2463 = vmatprep.subr.bf16.mxu0 0
      %2464 = vmatpush2.bf16.msra.mxu0 0
      %2465 = vmatprep.mubr.bf16.mxu0 0
      %2466 = vmatmul.mubr.bf16.gmra.mxu0 %v2422
      %v2467 = vpop.f32.mrf.mxu0
      %v2468 = vadd.f32 0.0, %v2467
      %v2469 = vpop.f32.mrf.mxu0
      %v2470 = vpop.f32.mrf.mxu0
      %v2471 = vadd.f32 0.0, %v2470
      %v2472 = vpop.f32.mrf.mxu0
      %2473 = vmatprep.mubr.bf16.mxu0 0
      %2474 = vmatmul.mubr.bf16.gmra.mxu0 %v2425
      %v2475 = vpop.f32.mrf.mxu0
      %v2476 = vadd.f32 0.0, %v2475
      %v2477 = vpop.f32.mrf.mxu0
      %v2478 = vpop.f32.mrf.mxu0
      %v2479 = vadd.f32 0.0, %v2478
      %v2480 = vpop.f32.mrf.mxu0
      %2481 = vmatprep.mubr.bf16.mxu0 0
      %2482 = vmatmul.mubr.bf16.gmra.mxu0 %v2428
      %v2483 = vpop.f32.mrf.mxu0
      %v2484 = vadd.f32 0.0, %v2483
      %v2485 = vpop.f32.mrf.mxu0
      %v2486 = vpop.f32.mrf.mxu0
      %v2487 = vadd.f32 0.0, %v2486
      %v2488 = vpop.f32.mrf.mxu0
      %2489 = vmatprep.mubr.bf16.mxu0 0
      %2490 = vmatmul.mubr.bf16.gmra.mxu0 %v2431
      %v2491 = vpop.f32.mrf.mxu0
      %v2492 = vadd.f32 0.0, %v2491
      %v2493 = vpop.f32.mrf.mxu0
      %v2494 = vpop.f32.mrf.mxu0
      %v2495 = vadd.f32 0.0, %v2494
      %v2496 = vpop.f32.mrf.mxu0
      %2497 = vdwg.mxu0
      %v2498 = vpack.c.bf16 %v2471, %v2468
      %v2499 = vpack.c.bf16 %v2479, %v2476
      %v2500 = vpack.c.bf16 %v2487, %v2484
      %v2501 = vpack.c.bf16 %v2495, %v2492
      %s2502 = scalar_lea.vmem %s3, 448
      %v2503 = vld [vmem:[%s2502] sm:$0xf]
      %v2504 = vld [vmem:[%s2502 + $0x4] sm:$0xf]
      %v2505 = vld [vmem:[%s2502 + $0x8] sm:$0xf]
      %v2506 = vld [vmem:[%s2502 + $0xc] sm:$0xf]
      %v2507 = vld [vmem:[%s2502 + $0x10] sm:$0xf]
      %v2508 = vld [vmem:[%s2502 + $0x14] sm:$0xf]
      %v2509 = vld [vmem:[%s2502 + $0x18] sm:$0xf]
      %v2510 = vld [vmem:[%s2502 + $0x1c] sm:$0xf]
      %v2511 = vld [vmem:[%s2502 + $0x20] sm:$0xf]
      %v2512 = vld [vmem:[%s2502 + $0x24] sm:$0xf]
      %v2513 = vld [vmem:[%s2502 + $0x28] sm:$0xf]
      %v2514 = vld [vmem:[%s2502 + $0x2c] sm:$0xf]
      %v2515 = vld [vmem:[%s2502 + $0x30] sm:$0xf]
      %v2516 = vld [vmem:[%s2502 + $0x34] sm:$0xf]
      %v2517 = vld [vmem:[%s2502 + $0x38] sm:$0xf]
      %v2518 = vld [vmem:[%s2502 + $0x3c] sm:$0xf]
      %v2535 = vunpack.c.l.b16 %v2503
      %v2536 = vunpack.c.l.b16 %v2504
      %v2537 = vunpack.c.l.b16 %v2505
      %v2538 = vunpack.c.l.b16 %v2506
      %v2539 = vunpack.c.l.b16 %v2507
      %v2540 = vunpack.c.l.b16 %v2508
      %v2541 = vunpack.c.l.b16 %v2509
      %v2542 = vunpack.c.l.b16 %v2510
      %v2543 = vunpack.c.l.b16 %v2511
      %v2544 = vunpack.c.l.b16 %v2512
      %v2545 = vunpack.c.l.b16 %v2513
      %v2546 = vunpack.c.l.b16 %v2514
      %v2547 = vunpack.c.l.b16 %v2515
      %v2548 = vunpack.c.l.b16 %v2516
      %v2549 = vunpack.c.l.b16 %v2517
      %v2550 = vunpack.c.l.b16 %v2518
      %v2551 = vpack.c.b16 %v2536, %v2535
      %v2552 = vpack.c.b16 %v2538, %v2537
      %v2553 = vpack.c.b16 %v2540, %v2539
      %v2554 = vpack.c.b16 %v2542, %v2541
      %v2555 = vpack.c.b16 %v2544, %v2543
      %v2556 = vpack.c.b16 %v2546, %v2545
      %v2557 = vpack.c.b16 %v2548, %v2547
      %v2558 = vpack.c.b16 %v2550, %v2549
      %2567 = vmatprep.subr.bf16.mxu0 0
      %2568 = vmatpush1.bf16.msra.mxu0 %v2558
      %2569 = vmatprep.subr.bf16.mxu0 0
      %2570 = vmatpush1.bf16.msra.mxu0 %v2557
      %2571 = vmatprep.subr.bf16.mxu0 0
      %2572 = vmatpush1.bf16.msra.mxu0 %v2556
      %2573 = vmatprep.subr.bf16.mxu0 0
      %2574 = vmatpush1.bf16.msra.mxu0 %v2555
      %2575 = vmatprep.subr.bf16.mxu0 0
      %2576 = vmatpush1.bf16.msra.mxu0 %v2554
      %2577 = vmatprep.subr.bf16.mxu0 0
      %2578 = vmatpush1.bf16.msra.mxu0 %v2553
      %2579 = vmatprep.subr.bf16.mxu0 0
      %2580 = vmatpush1.bf16.msra.mxu0 %v2552
      %2581 = vmatprep.subr.bf16.mxu0 0
      %2582 = vmatpush1.bf16.msra.mxu0 %v2551
      %2583 = vmatprep.subr.bf16.mxu0 0
      %2584 = vmatpush2.bf16.msra.mxu0 0
      %2585 = vmatprep.subr.bf16.mxu0 0
      %2586 = vmatpush2.bf16.msra.mxu0 0
      %2587 = vmatprep.subr.bf16.mxu0 0
      %2588 = vmatpush2.bf16.msra.mxu0 0
      %2589 = vmatprep.subr.bf16.mxu0 0
      %2590 = vmatpush2.bf16.msra.mxu0 0
      %2591 = vmatprep.subr.bf16.mxu0 0
      %2592 = vmatpush2.bf16.msra.mxu0 0
      %2593 = vmatprep.subr.bf16.mxu0 0
      %2594 = vmatpush2.bf16.msra.mxu0 0
      %2595 = vmatprep.subr.bf16.mxu0 0
      %2596 = vmatpush2.bf16.msra.mxu0 0
      %2597 = vmatprep.subr.bf16.mxu0 0
      %2598 = vmatpush2.bf16.msra.mxu0 0
      %2599 = vmatprep.mubr.bf16.mxu0 0
      %2600 = vmatmul.mubr.bf16.gmra.mxu0 %v2498
      %v2601 = vpop.f32.mrf.mxu0
      %v2602 = vadd.f32 0.0, %v2601
      %v2603 = vpop.f32.mrf.mxu0
      %v2604 = vpop.f32.mrf.mxu0
      %v2605 = vadd.f32 0.0, %v2604
      %v2606 = vpop.f32.mrf.mxu0
      %2607 = vmatprep.mubr.bf16.mxu0 0
      %2608 = vmatmul.mubr.bf16.gmra.mxu0 %v2499
      %v2609 = vpop.f32.mrf.mxu0
      %v2610 = vadd.f32 0.0, %v2609
      %v2611 = vpop.f32.mrf.mxu0
      %v2612 = vpop.f32.mrf.mxu0
      %v2613 = vadd.f32 0.0, %v2612
      %v2614 = vpop.f32.mrf.mxu0
      %2615 = vmatprep.mubr.bf16.mxu0 0
      %2616 = vmatmul.mubr.bf16.gmra.mxu0 %v2500
      %v2617 = vpop.f32.mrf.mxu0
      %v2618 = vadd.f32 0.0, %v2617
      %v2619 = vpop.f32.mrf.mxu0
      %v2620 = vpop.f32.mrf.mxu0
      %v2621 = vadd.f32 0.0, %v2620
      %v2622 = vpop.f32.mrf.mxu0
      %2623 = vmatprep.mubr.bf16.mxu0 0
      %2624 = vmatmul.mubr.bf16.gmra.mxu0 %v2501
      %v2625 = vpop.f32.mrf.mxu0
      %v2626 = vadd.f32 0.0, %v2625
      %v2627 = vpop.f32.mrf.mxu0
      %v2628 = vpop.f32.mrf.mxu0
      %v2629 = vadd.f32 0.0, %v2628
      %v2630 = vpop.f32.mrf.mxu0
      %2631 = vdwg.mxu0
      %v2632 = vadd.f32 %v2384, %v2602
      %v2633 = vadd.f32 %v2385, %v2605
      %v2634 = vadd.f32 %v2386, %v2610
      %v2635 = vadd.f32 %v2387, %v2613
      %v2636 = vadd.f32 %v2388, %v2618
      %v2637 = vadd.f32 %v2389, %v2621
      %v2638 = vadd.f32 %v2390, %v2626
      %v2639 = vadd.f32 %v2391, %v2629
      %s2640 = scalar_lea.vmem %s2, 256
      %v2641 = vld [vmem:[%s2640] sm:$0xf]
      %v2642 = vld [vmem:[%s2640 + $0x4] sm:$0xf]
      %v2643 = vld [vmem:[%s2640 + $0x8] sm:$0xf]
      %v2644 = vld [vmem:[%s2640 + $0xc] sm:$0xf]
      %v2645 = vld [vmem:[%s2640 + $0x10] sm:$0xf]
      %v2646 = vld [vmem:[%s2640 + $0x14] sm:$0xf]
      %v2647 = vld [vmem:[%s2640 + $0x18] sm:$0xf]
      %v2648 = vld [vmem:[%s2640 + $0x1c] sm:$0xf]
      %v2657 = vunpack.c.l.b16 %v2641
      %v2658 = vunpack.c.l.b16 %v2642
      %v2659 = vunpack.c.l.b16 %v2643
      %v2660 = vunpack.c.l.b16 %v2644
      %v2661 = vunpack.c.l.b16 %v2645
      %v2662 = vunpack.c.l.b16 %v2646
      %v2663 = vunpack.c.l.b16 %v2647
      %v2664 = vunpack.c.l.b16 %v2648
      %v2665 = vpack.c.b16 %v2658, %v2657
      %v2666 = vpack.c.b16 %v2660, %v2659
      %v2667 = vpack.c.b16 %v2662, %v2661
      %v2668 = vpack.c.b16 %v2664, %v2663
      %v2670 = vsel %vm701, %v2665, 0
      %v2673 = vsel %vm701, %v2666, 0
      %v2676 = vsel %vm701, %v2667, 0
      %v2679 = vsel %vm701, %v2668, 0
      %2681 = vmatprep.subr.bf16.mxu0 0
      %2682 = vmatpush1.bf16.msra.mxu0 0
      %2683 = vmatprep.subr.bf16.mxu0 0
      %2684 = vmatpush1.bf16.msra.mxu0 0
      %2685 = vmatprep.subr.bf16.mxu0 0
      %2686 = vmatpush1.bf16.msra.mxu0 0
      %2687 = vmatprep.subr.bf16.mxu0 0
      %2688 = vmatpush1.bf16.msra.mxu0 0
      %2689 = vmatprep.subr.bf16.mxu0 0
      %2690 = vmatpush1.bf16.msra.mxu0 %v672
      %2691 = vmatprep.subr.bf16.mxu0 0
      %2692 = vmatpush1.bf16.msra.mxu0 %v671
      %2693 = vmatprep.subr.bf16.mxu0 0
      %2694 = vmatpush1.bf16.msra.mxu0 %v670
      %2695 = vmatprep.subr.bf16.mxu0 0
      %2696 = vmatpush1.bf16.msra.mxu0 %v669
      %2697 = vmatprep.subr.bf16.mxu0 0
      %2698 = vmatpush2.bf16.msra.mxu0 0
      %2699 = vmatprep.subr.bf16.mxu0 0
      %2700 = vmatpush2.bf16.msra.mxu0 0
      %2701 = vmatprep.subr.bf16.mxu0 0
      %2702 = vmatpush2.bf16.msra.mxu0 0
      %2703 = vmatprep.subr.bf16.mxu0 0
      %2704 = vmatpush2.bf16.msra.mxu0 0
      %2705 = vmatprep.subr.bf16.mxu0 0
      %2706 = vmatpush2.bf16.msra.mxu0 0
      %2707 = vmatprep.subr.bf16.mxu0 0
      %2708 = vmatpush2.bf16.msra.mxu0 0
      %2709 = vmatprep.subr.bf16.mxu0 0
      %2710 = vmatpush2.bf16.msra.mxu0 0
      %2711 = vmatprep.subr.bf16.mxu0 0
      %2712 = vmatpush2.bf16.msra.mxu0 0
      %2713 = vmatprep.mubr.bf16.mxu0 0
      %2714 = vmatmul.mubr.bf16.gmra.mxu0 %v2670
      %v2715 = vpop.f32.mrf.mxu0
      %v2716 = vadd.f32 0.0, %v2715
      %v2717 = vpop.f32.mrf.mxu0
      %v2718 = vpop.f32.mrf.mxu0
      %v2719 = vadd.f32 0.0, %v2718
      %v2720 = vpop.f32.mrf.mxu0
      %2721 = vmatprep.mubr.bf16.mxu0 0
      %2722 = vmatmul.mubr.bf16.gmra.mxu0 %v2673
      %v2723 = vpop.f32.mrf.mxu0
      %v2724 = vadd.f32 0.0, %v2723
      %v2725 = vpop.f32.mrf.mxu0
      %v2726 = vpop.f32.mrf.mxu0
      %v2727 = vadd.f32 0.0, %v2726
      %v2728 = vpop.f32.mrf.mxu0
      %2729 = vmatprep.mubr.bf16.mxu0 0
      %2730 = vmatmul.mubr.bf16.gmra.mxu0 %v2676
      %v2731 = vpop.f32.mrf.mxu0
      %v2732 = vadd.f32 0.0, %v2731
      %v2733 = vpop.f32.mrf.mxu0
      %v2734 = vpop.f32.mrf.mxu0
      %v2735 = vadd.f32 0.0, %v2734
      %v2736 = vpop.f32.mrf.mxu0
      %2737 = vmatprep.mubr.bf16.mxu0 0
      %2738 = vmatmul.mubr.bf16.gmra.mxu0 %v2679
      %v2739 = vpop.f32.mrf.mxu0
      %v2740 = vadd.f32 0.0, %v2739
      %v2741 = vpop.f32.mrf.mxu0
      %v2742 = vpop.f32.mrf.mxu0
      %v2743 = vadd.f32 0.0, %v2742
      %v2744 = vpop.f32.mrf.mxu0
      %2745 = vdwg.mxu0
      %v2746 = vpack.c.bf16 %v2719, %v2716
      %v2747 = vpack.c.bf16 %v2727, %v2724
      %v2748 = vpack.c.bf16 %v2735, %v2732
      %v2749 = vpack.c.bf16 %v2743, %v2740
      %s2750 = scalar_lea.vmem %s3, 512
      %v2751 = vld [vmem:[%s2750] sm:$0xf]
      %v2752 = vld [vmem:[%s2750 + $0x4] sm:$0xf]
      %v2753 = vld [vmem:[%s2750 + $0x8] sm:$0xf]
      %v2754 = vld [vmem:[%s2750 + $0xc] sm:$0xf]
      %v2755 = vld [vmem:[%s2750 + $0x10] sm:$0xf]
      %v2756 = vld [vmem:[%s2750 + $0x14] sm:$0xf]
      %v2757 = vld [vmem:[%s2750 + $0x18] sm:$0xf]
      %v2758 = vld [vmem:[%s2750 + $0x1c] sm:$0xf]
      %v2759 = vld [vmem:[%s2750 + $0x20] sm:$0xf]
      %v2760 = vld [vmem:[%s2750 + $0x24] sm:$0xf]
      %v2761 = vld [vmem:[%s2750 + $0x28] sm:$0xf]
      %v2762 = vld [vmem:[%s2750 + $0x2c] sm:$0xf]
      %v2763 = vld [vmem:[%s2750 + $0x30] sm:$0xf]
      %v2764 = vld [vmem:[%s2750 + $0x34] sm:$0xf]
      %v2765 = vld [vmem:[%s2750 + $0x38] sm:$0xf]
      %v2766 = vld [vmem:[%s2750 + $0x3c] sm:$0xf]
      %v2783 = vunpack.c.l.b16 %v2751
      %v2784 = vunpack.c.l.b16 %v2752
      %v2785 = vunpack.c.l.b16 %v2753
      %v2786 = vunpack.c.l.b16 %v2754
      %v2787 = vunpack.c.l.b16 %v2755
      %v2788 = vunpack.c.l.b16 %v2756
      %v2789 = vunpack.c.l.b16 %v2757
      %v2790 = vunpack.c.l.b16 %v2758
      %v2791 = vunpack.c.l.b16 %v2759
      %v2792 = vunpack.c.l.b16 %v2760
      %v2793 = vunpack.c.l.b16 %v2761
      %v2794 = vunpack.c.l.b16 %v2762
      %v2795 = vunpack.c.l.b16 %v2763
      %v2796 = vunpack.c.l.b16 %v2764
      %v2797 = vunpack.c.l.b16 %v2765
      %v2798 = vunpack.c.l.b16 %v2766
      %v2799 = vpack.c.b16 %v2784, %v2783
      %v2800 = vpack.c.b16 %v2786, %v2785
      %v2801 = vpack.c.b16 %v2788, %v2787
      %v2802 = vpack.c.b16 %v2790, %v2789
      %v2803 = vpack.c.b16 %v2792, %v2791
      %v2804 = vpack.c.b16 %v2794, %v2793
      %v2805 = vpack.c.b16 %v2796, %v2795
      %v2806 = vpack.c.b16 %v2798, %v2797
      %2815 = vmatprep.subr.bf16.mxu0 0
      %2816 = vmatpush1.bf16.msra.mxu0 %v2806
      %2817 = vmatprep.subr.bf16.mxu0 0
      %2818 = vmatpush1.bf16.msra.mxu0 %v2805
      %2819 = vmatprep.subr.bf16.mxu0 0
      %2820 = vmatpush1.bf16.msra.mxu0 %v2804
      %2821 = vmatprep.subr.bf16.mxu0 0
      %2822 = vmatpush1.bf16.msra.mxu0 %v2803
      %2823 = vmatprep.subr.bf16.mxu0 0
      %2824 = vmatpush1.bf16.msra.mxu0 %v2802
      %2825 = vmatprep.subr.bf16.mxu0 0
      %2826 = vmatpush1.bf16.msra.mxu0 %v2801
      %2827 = vmatprep.subr.bf16.mxu0 0
      %2828 = vmatpush1.bf16.msra.mxu0 %v2800
      %2829 = vmatprep.subr.bf16.mxu0 0
      %2830 = vmatpush1.bf16.msra.mxu0 %v2799
      %2831 = vmatprep.subr.bf16.mxu0 0
      %2832 = vmatpush2.bf16.msra.mxu0 0
      %2833 = vmatprep.subr.bf16.mxu0 0
      %2834 = vmatpush2.bf16.msra.mxu0 0
      %2835 = vmatprep.subr.bf16.mxu0 0
      %2836 = vmatpush2.bf16.msra.mxu0 0
      %2837 = vmatprep.subr.bf16.mxu0 0
      %2838 = vmatpush2.bf16.msra.mxu0 0
      %2839 = vmatprep.subr.bf16.mxu0 0
      %2840 = vmatpush2.bf16.msra.mxu0 0
      %2841 = vmatprep.subr.bf16.mxu0 0
      %2842 = vmatpush2.bf16.msra.mxu0 0
      %2843 = vmatprep.subr.bf16.mxu0 0
      %2844 = vmatpush2.bf16.msra.mxu0 0
      %2845 = vmatprep.subr.bf16.mxu0 0
      %2846 = vmatpush2.bf16.msra.mxu0 0
      %2847 = vmatprep.mubr.bf16.mxu0 0
      %2848 = vmatmul.mubr.bf16.gmra.mxu0 %v2746
      %v2849 = vpop.f32.mrf.mxu0
      %v2850 = vadd.f32 0.0, %v2849
      %v2851 = vpop.f32.mrf.mxu0
      %v2852 = vpop.f32.mrf.mxu0
      %v2853 = vadd.f32 0.0, %v2852
      %v2854 = vpop.f32.mrf.mxu0
      %2855 = vmatprep.mubr.bf16.mxu0 0
      %2856 = vmatmul.mubr.bf16.gmra.mxu0 %v2747
      %v2857 = vpop.f32.mrf.mxu0
      %v2858 = vadd.f32 0.0, %v2857
      %v2859 = vpop.f32.mrf.mxu0
      %v2860 = vpop.f32.mrf.mxu0
      %v2861 = vadd.f32 0.0, %v2860
      %v2862 = vpop.f32.mrf.mxu0
      %2863 = vmatprep.mubr.bf16.mxu0 0
      %2864 = vmatmul.mubr.bf16.gmra.mxu0 %v2748
      %v2865 = vpop.f32.mrf.mxu0
      %v2866 = vadd.f32 0.0, %v2865
      %v2867 = vpop.f32.mrf.mxu0
      %v2868 = vpop.f32.mrf.mxu0
      %v2869 = vadd.f32 0.0, %v2868
      %v2870 = vpop.f32.mrf.mxu0
      %2871 = vmatprep.mubr.bf16.mxu0 0
      %2872 = vmatmul.mubr.bf16.gmra.mxu0 %v2749
      %v2873 = vpop.f32.mrf.mxu0
      %v2874 = vadd.f32 0.0, %v2873
      %v2875 = vpop.f32.mrf.mxu0
      %v2876 = vpop.f32.mrf.mxu0
      %v2877 = vadd.f32 0.0, %v2876
      %v2878 = vpop.f32.mrf.mxu0
      %2879 = vdwg.mxu0
      %v2880 = vadd.f32 %v2632, %v2850
      %v2881 = vadd.f32 %v2633, %v2853
      %v2882 = vadd.f32 %v2634, %v2858
      %v2883 = vadd.f32 %v2635, %v2861
      %v2884 = vadd.f32 %v2636, %v2866
      %v2885 = vadd.f32 %v2637, %v2869
      %v2886 = vadd.f32 %v2638, %v2874
      %v2887 = vadd.f32 %v2639, %v2877
      %s2888 = scalar_lea.vmem %s5, 2
      %v2889 = vld [vmem:[%s2888] sm:$0x1]
      %v2891 = vlaneseq
      %v2892 = vshrl.u32 %v2891, 7
      %v2893 = vsub.s32 0, %v2892
      %v2894 = vrot.slane %v2889, %v2893
      %v2896 = vmul.f32 %v2880, %v2894
      %v2897 = vmul.f32 %v2881, %v2894
      %v2898 = vmul.f32 %v2882, %v2894
      %v2899 = vmul.f32 %v2883, %v2894
      %v2900 = vmul.f32 %v2884, %v2894
      %v2901 = vmul.f32 %v2885, %v2894
      %v2902 = vmul.f32 %v2886, %v2894
      %v2903 = vmul.f32 %v2887, %v2894
      %s2904 = scalar_lea.vmem %s5, 3
      %v2905 = vld [vmem:[%s2904] sm:$0x1]
      %v2907 = vlaneseq
      %v2908 = vshrl.u32 %v2907, 7
      %v2909 = vsub.s32 0, %v2908
      %v2910 = vrot.slane %v2905, %v2909
      %v2912 = vadd.f32 %v2896, %v2910
      %v2913 = vadd.f32 %v2897, %v2910
      %v2914 = vadd.f32 %v2898, %v2910
      %v2915 = vadd.f32 %v2899, %v2910
      %v2916 = vadd.f32 %v2900, %v2910
      %v2917 = vadd.f32 %v2901, %v2910
      %v2918 = vadd.f32 %v2902, %v2910
      %v2919 = vadd.f32 %v2903, %v2910
      %v2920 = vmax.f32 %v2912, 0.0
      %v2921 = vmax.f32 %v2913, 0.0
      %v2922 = vmax.f32 %v2914, 0.0
      %v2923 = vmax.f32 %v2915, 0.0
      %v2924 = vmax.f32 %v2916, 0.0
      %v2925 = vmax.f32 %v2917, 0.0
      %v2926 = vmax.f32 %v2918, 0.0
      %v2927 = vmax.f32 %v2919, 0.0
      %v2928 = vpack.c.bf16 %v2921, %v2920
      %v2929 = vpack.c.bf16 %v2923, %v2922
      %v2930 = vpack.c.bf16 %v2925, %v2924
      %v2931 = vpack.c.bf16 %v2927, %v2926
      %2932 = vmatprep.subr.bf16.mxu0 0
      %2933 = vmatpush1.bf16.msra.mxu0 0
      %2934 = vmatprep.subr.bf16.mxu0 0
      %2935 = vmatpush1.bf16.msra.mxu0 0
      %2936 = vmatprep.subr.bf16.mxu0 0
      %2937 = vmatpush1.bf16.msra.mxu0 0
      %2938 = vmatprep.subr.bf16.mxu0 0
      %2939 = vmatpush1.bf16.msra.mxu0 0
      %2940 = vmatprep.subr.bf16.mxu0 0
      %2941 = vmatpush1.bf16.msra.mxu0 %v2931
      %2942 = vmatprep.subr.bf16.mxu0 0
      %2943 = vmatpush1.bf16.msra.mxu0 %v2930
      %2944 = vmatprep.subr.bf16.mxu0 0
      %2945 = vmatpush1.bf16.msra.mxu0 %v2929
      %2946 = vmatprep.subr.bf16.mxu0 0
      %2947 = vmatpush1.bf16.msra.mxu0 %v2928
      %2948 = vmatprep.subr.bf16.mxu0 0
      %2949 = vmatpush2.bf16.msra.mxu0 0
      %2950 = vmatprep.subr.bf16.mxu0 0
      %2951 = vmatpush2.bf16.msra.mxu0 0
      %2952 = vmatprep.subr.bf16.mxu0 0
      %2953 = vmatpush2.bf16.msra.mxu0 0
      %2954 = vmatprep.subr.bf16.mxu0 0
      %2955 = vmatpush2.bf16.msra.mxu0 0
      %2956 = vmatprep.subr.bf16.mxu0 0
      %2957 = vmatpush2.bf16.msra.mxu0 0
      %2958 = vmatprep.subr.bf16.mxu0 0
      %2959 = vmatpush2.bf16.msra.mxu0 0
      %2960 = vmatprep.subr.bf16.mxu0 0
      %2961 = vmatpush2.bf16.msra.mxu0 0
      %2962 = vmatprep.subr.bf16.mxu0 0
      %2963 = vmatpush2.bf16.msra.mxu0 0
      %2964 = vmatprep.mubr.bf16.mxu0 0
      %2965 = vmatmul.mubr.bf16.gmra.mxu0 %v703
      %v2966 = vpop.f32.mrf.mxu0
      %v2967 = vadd.f32 0.0, %v2966
      %v2968 = vpop.f32.mrf.mxu0
      %v2969 = vpop.f32.mrf.mxu0
      %v2970 = vadd.f32 0.0, %v2969
      %v2971 = vpop.f32.mrf.mxu0
      %2972 = vmatprep.mubr.bf16.mxu0 0
      %2973 = vmatmul.mubr.bf16.gmra.mxu0 %v706
      %v2974 = vpop.f32.mrf.mxu0
      %v2975 = vadd.f32 0.0, %v2974
      %v2976 = vpop.f32.mrf.mxu0
      %v2977 = vpop.f32.mrf.mxu0
      %v2978 = vadd.f32 0.0, %v2977
      %v2979 = vpop.f32.mrf.mxu0
      %2980 = vmatprep.mubr.bf16.mxu0 0
      %2981 = vmatmul.mubr.bf16.gmra.mxu0 %v709
      %v2982 = vpop.f32.mrf.mxu0
      %v2983 = vadd.f32 0.0, %v2982
      %v2984 = vpop.f32.mrf.mxu0
      %v2985 = vpop.f32.mrf.mxu0
      %v2986 = vadd.f32 0.0, %v2985
      %v2987 = vpop.f32.mrf.mxu0
      %2988 = vmatprep.mubr.bf16.mxu0 0
      %2989 = vmatmul.mubr.bf16.gmra.mxu0 %v712
      %v2990 = vpop.f32.mrf.mxu0
      %v2991 = vadd.f32 0.0, %v2990
      %v2992 = vpop.f32.mrf.mxu0
      %v2993 = vpop.f32.mrf.mxu0
      %v2994 = vadd.f32 0.0, %v2993
      %v2995 = vpop.f32.mrf.mxu0
      %2996 = vdwg.mxu0
      %v2997 = vpack.c.bf16 %v2970, %v2967
      %v2998 = vpack.c.bf16 %v2978, %v2975
      %v2999 = vpack.c.bf16 %v2986, %v2983
      %v3000 = vpack.c.bf16 %v2994, %v2991
      %v3001 = vld [vmem:[%s4] sm:$0xf]
      %v3002 = vld [vmem:[%s4 + $0x4] sm:$0xf]
      %v3003 = vld [vmem:[%s4 + $0x8] sm:$0xf]
      %v3004 = vld [vmem:[%s4 + $0xc] sm:$0xf]
      %v3005 = vld [vmem:[%s4 + $0x10] sm:$0xf]
      %v3006 = vld [vmem:[%s4 + $0x14] sm:$0xf]
      %v3007 = vld [vmem:[%s4 + $0x18] sm:$0xf]
      %v3008 = vld [vmem:[%s4 + $0x1c] sm:$0xf]
      %v3009 = vld [vmem:[%s4 + $0x20] sm:$0xf]
      %v3010 = vld [vmem:[%s4 + $0x24] sm:$0xf]
      %v3011 = vld [vmem:[%s4 + $0x28] sm:$0xf]
      %v3012 = vld [vmem:[%s4 + $0x2c] sm:$0xf]
      %v3013 = vld [vmem:[%s4 + $0x30] sm:$0xf]
      %v3014 = vld [vmem:[%s4 + $0x34] sm:$0xf]
      %v3015 = vld [vmem:[%s4 + $0x38] sm:$0xf]
      %v3016 = vld [vmem:[%s4 + $0x3c] sm:$0xf]
      %3017 = vmatprep.subr.bf16.mxu0 0
      %3018 = vmatpush1.bf16.msra.mxu0 0
      %3019 = vmatprep.subr.bf16.mxu0 0
      %3020 = vmatpush1.bf16.msra.mxu0 0
      %3021 = vmatprep.subr.bf16.mxu0 0
      %3022 = vmatpush1.bf16.msra.mxu0 0
      %3023 = vmatprep.subr.bf16.mxu0 0
      %3024 = vmatpush1.bf16.msra.mxu0 0
      %3025 = vmatprep.subr.bf16.mxu0 0
      %3026 = vmatpush1.bf16.msra.mxu0 %v2931
      %3027 = vmatprep.subr.bf16.mxu0 0
      %3028 = vmatpush1.bf16.msra.mxu0 %v2930
      %3029 = vmatprep.subr.bf16.mxu0 0
      %3030 = vmatpush1.bf16.msra.mxu0 %v2929
      %3031 = vmatprep.subr.bf16.mxu0 0
      %3032 = vmatpush1.bf16.msra.mxu0 %v2928
      %3033 = vmatprep.subr.bf16.mxu0 0
      %3034 = vmatpush2.bf16.msra.mxu0 0
      %3035 = vmatprep.subr.bf16.mxu0 0
      %3036 = vmatpush2.bf16.msra.mxu0 0
      %3037 = vmatprep.subr.bf16.mxu0 0
      %3038 = vmatpush2.bf16.msra.mxu0 0
      %3039 = vmatprep.subr.bf16.mxu0 0
      %3040 = vmatpush2.bf16.msra.mxu0 0
      %3041 = vmatprep.subr.bf16.mxu0 0
      %3042 = vmatpush2.bf16.msra.mxu0 0
      %3043 = vmatprep.subr.bf16.mxu0 0
      %3044 = vmatpush2.bf16.msra.mxu0 0
      %3045 = vmatprep.subr.bf16.mxu0 0
      %3046 = vmatpush2.bf16.msra.mxu0 0
      %3047 = vmatprep.subr.bf16.mxu0 0
      %3048 = vmatpush2.bf16.msra.mxu0 0
      %3049 = vmatprep.mubr.bf16.mxu0 0
      %3050 = vmatmul.mubr.bf16.gmra.mxu0 %v829
      %v3051 = vpop.f32.mrf.mxu0
      %v3052 = vadd.f32 0.0, %v3051
      %v3053 = vpop.f32.mrf.mxu0
      %v3054 = vpop.f32.mrf.mxu0
      %v3055 = vadd.f32 0.0, %v3054
      %v3056 = vpop.f32.mrf.mxu0
      %3057 = vmatprep.mubr.bf16.mxu0 0
      %3058 = vmatmul.mubr.bf16.gmra.mxu0 %v832
      %v3059 = vpop.f32.mrf.mxu0
      %v3060 = vadd.f32 0.0, %v3059
      %v3061 = vpop.f32.mrf.mxu0
      %v3062 = vpop.f32.mrf.mxu0
      %v3063 = vadd.f32 0.0, %v3062
      %v3064 = vpop.f32.mrf.mxu0
      %3065 = vmatprep.mubr.bf16.mxu0 0
      %3066 = vmatmul.mubr.bf16.gmra.mxu0 %v835
      %v3067 = vpop.f32.mrf.mxu0
      %v3068 = vadd.f32 0.0, %v3067
      %v3069 = vpop.f32.mrf.mxu0
      %v3070 = vpop.f32.mrf.mxu0
      %v3071 = vadd.f32 0.0, %v3070
      %v3072 = vpop.f32.mrf.mxu0
      %3073 = vmatprep.mubr.bf16.mxu0 0
      %3074 = vmatmul.mubr.bf16.gmra.mxu0 %v838
      %v3075 = vpop.f32.mrf.mxu0
      %v3076 = vadd.f32 0.0, %v3075
      %v3077 = vpop.f32.mrf.mxu0
      %v3078 = vpop.f32.mrf.mxu0
      %v3079 = vadd.f32 0.0, %v3078
      %v3080 = vpop.f32.mrf.mxu0
      %3081 = vdwg.mxu0
      %v3082 = vpack.c.bf16 %v3055, %v3052
      %v3083 = vpack.c.bf16 %v3063, %v3060
      %v3084 = vpack.c.bf16 %v3071, %v3068
      %v3085 = vpack.c.bf16 %v3079, %v3076
      %s3086 = scalar_lea.vmem %s4, 64
      %v3087 = vld [vmem:[%s3086] sm:$0xf]
      %v3088 = vld [vmem:[%s3086 + $0x4] sm:$0xf]
      %v3089 = vld [vmem:[%s3086 + $0x8] sm:$0xf]
      %v3090 = vld [vmem:[%s3086 + $0xc] sm:$0xf]
      %v3091 = vld [vmem:[%s3086 + $0x10] sm:$0xf]
      %v3092 = vld [vmem:[%s3086 + $0x14] sm:$0xf]
      %v3093 = vld [vmem:[%s3086 + $0x18] sm:$0xf]
      %v3094 = vld [vmem:[%s3086 + $0x1c] sm:$0xf]
      %v3095 = vld [vmem:[%s3086 + $0x20] sm:$0xf]
      %v3096 = vld [vmem:[%s3086 + $0x24] sm:$0xf]
      %v3097 = vld [vmem:[%s3086 + $0x28] sm:$0xf]
      %v3098 = vld [vmem:[%s3086 + $0x2c] sm:$0xf]
      %v3099 = vld [vmem:[%s3086 + $0x30] sm:$0xf]
      %v3100 = vld [vmem:[%s3086 + $0x34] sm:$0xf]
      %v3101 = vld [vmem:[%s3086 + $0x38] sm:$0xf]
      %v3102 = vld [vmem:[%s3086 + $0x3c] sm:$0xf]
      %v3119 = vunpack.c.l.b16 %v3087
      %v3120 = vunpack.c.l.b16 %v3088
      %v3121 = vunpack.c.l.b16 %v3089
      %v3122 = vunpack.c.l.b16 %v3090
      %v3123 = vunpack.c.l.b16 %v3091
      %v3124 = vunpack.c.l.b16 %v3092
      %v3125 = vunpack.c.l.b16 %v3093
      %v3126 = vunpack.c.l.b16 %v3094
      %v3127 = vunpack.c.l.b16 %v3095
      %v3128 = vunpack.c.l.b16 %v3096
      %v3129 = vunpack.c.l.b16 %v3097
      %v3130 = vunpack.c.l.b16 %v3098
      %v3131 = vunpack.c.l.b16 %v3099
      %v3132 = vunpack.c.l.b16 %v3100
      %v3133 = vunpack.c.l.b16 %v3101
      %v3134 = vunpack.c.l.b16 %v3102
      %v3135 = vpack.c.b16 %v3120, %v3119
      %v3136 = vpack.c.b16 %v3122, %v3121
      %v3137 = vpack.c.b16 %v3124, %v3123
      %v3138 = vpack.c.b16 %v3126, %v3125
      %v3139 = vpack.c.b16 %v3128, %v3127
      %v3140 = vpack.c.b16 %v3130, %v3129
      %v3141 = vpack.c.b16 %v3132, %v3131
      %v3142 = vpack.c.b16 %v3134, %v3133
      %3151 = vmatprep.subr.bf16.mxu0 0
      %3152 = vmatpush1.bf16.msra.mxu0 %v3142
      %3153 = vmatprep.subr.bf16.mxu0 0
      %3154 = vmatpush1.bf16.msra.mxu0 %v3141
      %3155 = vmatprep.subr.bf16.mxu0 0
      %3156 = vmatpush1.bf16.msra.mxu0 %v3140
      %3157 = vmatprep.subr.bf16.mxu0 0
      %3158 = vmatpush1.bf16.msra.mxu0 %v3139
      %3159 = vmatprep.subr.bf16.mxu0 0
      %3160 = vmatpush1.bf16.msra.mxu0 %v3138
      %3161 = vmatprep.subr.bf16.mxu0 0
      %3162 = vmatpush1.bf16.msra.mxu0 %v3137
      %3163 = vmatprep.subr.bf16.mxu0 0
      %3164 = vmatpush1.bf16.msra.mxu0 %v3136
      %3165 = vmatprep.subr.bf16.mxu0 0
      %3166 = vmatpush1.bf16.msra.mxu0 %v3135
      %3167 = vmatprep.subr.bf16.mxu0 0
      %3168 = vmatpush2.bf16.msra.mxu0 0
      %3169 = vmatprep.subr.bf16.mxu0 0
      %3170 = vmatpush2.bf16.msra.mxu0 0
      %3171 = vmatprep.subr.bf16.mxu0 0
      %3172 = vmatpush2.bf16.msra.mxu0 0
      %3173 = vmatprep.subr.bf16.mxu0 0
      %3174 = vmatpush2.bf16.msra.mxu0 0
      %3175 = vmatprep.subr.bf16.mxu0 0
      %3176 = vmatpush2.bf16.msra.mxu0 0
      %3177 = vmatprep.subr.bf16.mxu0 0
      %3178 = vmatpush2.bf16.msra.mxu0 0
      %3179 = vmatprep.subr.bf16.mxu0 0
      %3180 = vmatpush2.bf16.msra.mxu0 0
      %3181 = vmatprep.subr.bf16.mxu0 0
      %3182 = vmatpush2.bf16.msra.mxu0 0
      %3183 = vmatprep.mubr.bf16.mxu0 0
      %3184 = vmatmul.mubr.bf16.gmra.mxu0 %v3082
      %v3185 = vpop.f32.mrf.mxu0
      %v3186 = vadd.f32 0.0, %v3185
      %v3187 = vpop.f32.mrf.mxu0
      %v3188 = vpop.f32.mrf.mxu0
      %v3189 = vadd.f32 0.0, %v3188
      %v3190 = vpop.f32.mrf.mxu0
      %3191 = vmatprep.mubr.bf16.mxu0 0
      %3192 = vmatmul.mubr.bf16.gmra.mxu0 %v3083
      %v3193 = vpop.f32.mrf.mxu0
      %v3194 = vadd.f32 0.0, %v3193
      %v3195 = vpop.f32.mrf.mxu0
      %v3196 = vpop.f32.mrf.mxu0
      %v3197 = vadd.f32 0.0, %v3196
      %v3198 = vpop.f32.mrf.mxu0
      %3199 = vmatprep.mubr.bf16.mxu0 0
      %3200 = vmatmul.mubr.bf16.gmra.mxu0 %v3084
      %v3201 = vpop.f32.mrf.mxu0
      %v3202 = vadd.f32 0.0, %v3201
      %v3203 = vpop.f32.mrf.mxu0
      %v3204 = vpop.f32.mrf.mxu0
      %v3205 = vadd.f32 0.0, %v3204
      %v3206 = vpop.f32.mrf.mxu0
      %3207 = vmatprep.mubr.bf16.mxu0 0
      %3208 = vmatmul.mubr.bf16.gmra.mxu0 %v3085
      %v3209 = vpop.f32.mrf.mxu0
      %v3210 = vadd.f32 0.0, %v3209
      %v3211 = vpop.f32.mrf.mxu0
      %v3212 = vpop.f32.mrf.mxu0
      %v3213 = vadd.f32 0.0, %v3212
      %v3214 = vpop.f32.mrf.mxu0
      %3215 = vdwg.mxu0
      %v3232 = vunpack.c.l.b16 %v3001
      %v3233 = vunpack.c.l.b16 %v3002
      %v3234 = vunpack.c.l.b16 %v3003
      %v3235 = vunpack.c.l.b16 %v3004
      %v3236 = vunpack.c.l.b16 %v3005
      %v3237 = vunpack.c.l.b16 %v3006
      %v3238 = vunpack.c.l.b16 %v3007
      %v3239 = vunpack.c.l.b16 %v3008
      %v3240 = vunpack.c.l.b16 %v3009
      %v3241 = vunpack.c.l.b16 %v3010
      %v3242 = vunpack.c.l.b16 %v3011
      %v3243 = vunpack.c.l.b16 %v3012
      %v3244 = vunpack.c.l.b16 %v3013
      %v3245 = vunpack.c.l.b16 %v3014
      %v3246 = vunpack.c.l.b16 %v3015
      %v3247 = vunpack.c.l.b16 %v3016
      %v3248 = vpack.c.b16 %v3233, %v3232
      %v3249 = vpack.c.b16 %v3235, %v3234
      %v3250 = vpack.c.b16 %v3237, %v3236
      %v3251 = vpack.c.b16 %v3239, %v3238
      %v3252 = vpack.c.b16 %v3241, %v3240
      %v3253 = vpack.c.b16 %v3243, %v3242
      %v3254 = vpack.c.b16 %v3245, %v3244
      %v3255 = vpack.c.b16 %v3247, %v3246
      %3264 = vmatprep.subr.bf16.mxu0 0
      %3265 = vmatpush1.bf16.msra.mxu0 %v3255
      %3266 = vmatprep.subr.bf16.mxu0 0
      %3267 = vmatpush1.bf16.msra.mxu0 %v3254
      %3268 = vmatprep.subr.bf16.mxu0 0
      %3269 = vmatpush1.bf16.msra.mxu0 %v3253
      %3270 = vmatprep.subr.bf16.mxu0 0
      %3271 = vmatpush1.bf16.msra.mxu0 %v3252
      %3272 = vmatprep.subr.bf16.mxu0 0
      %3273 = vmatpush1.bf16.msra.mxu0 %v3251
      %3274 = vmatprep.subr.bf16.mxu0 0
      %3275 = vmatpush1.bf16.msra.mxu0 %v3250
      %3276 = vmatprep.subr.bf16.mxu0 0
      %3277 = vmatpush1.bf16.msra.mxu0 %v3249
      %3278 = vmatprep.subr.bf16.mxu0 0
      %3279 = vmatpush1.bf16.msra.mxu0 %v3248
      %3280 = vmatprep.subr.bf16.mxu0 0
      %3281 = vmatpush2.bf16.msra.mxu0 0
      %3282 = vmatprep.subr.bf16.mxu0 0
      %3283 = vmatpush2.bf16.msra.mxu0 0
      %3284 = vmatprep.subr.bf16.mxu0 0
      %3285 = vmatpush2.bf16.msra.mxu0 0
      %3286 = vmatprep.subr.bf16.mxu0 0
      %3287 = vmatpush2.bf16.msra.mxu0 0
      %3288 = vmatprep.subr.bf16.mxu0 0
      %3289 = vmatpush2.bf16.msra.mxu0 0
      %3290 = vmatprep.subr.bf16.mxu0 0
      %3291 = vmatpush2.bf16.msra.mxu0 0
      %3292 = vmatprep.subr.bf16.mxu0 0
      %3293 = vmatpush2.bf16.msra.mxu0 0
      %3294 = vmatprep.subr.bf16.mxu0 0
      %3295 = vmatpush2.bf16.msra.mxu0 0
      %3296 = vmatprep.mubr.bf16.mxu0 0
      %3297 = vmatmul.mubr.bf16.gmra.mxu0 %v2997
      %v3298 = vpop.f32.mrf.mxu0
      %v3299 = vadd.f32 %v3186, %v3298
      %v3300 = vpop.f32.mrf.mxu0
      %v3301 = vpop.f32.mrf.mxu0
      %v3302 = vadd.f32 %v3189, %v3301
      %v3303 = vpop.f32.mrf.mxu0
      %3304 = vmatprep.mubr.bf16.mxu0 0
      %3305 = vmatmul.mubr.bf16.gmra.mxu0 %v2998
      %v3306 = vpop.f32.mrf.mxu0
      %v3307 = vadd.f32 %v3194, %v3306
      %v3308 = vpop.f32.mrf.mxu0
      %v3309 = vpop.f32.mrf.mxu0
      %v3310 = vadd.f32 %v3197, %v3309
      %v3311 = vpop.f32.mrf.mxu0
      %3312 = vmatprep.mubr.bf16.mxu0 0
      %3313 = vmatmul.mubr.bf16.gmra.mxu0 %v2999
      %v3314 = vpop.f32.mrf.mxu0
      %v3315 = vadd.f32 %v3202, %v3314
      %v3316 = vpop.f32.mrf.mxu0
      %v3317 = vpop.f32.mrf.mxu0
      %v3318 = vadd.f32 %v3205, %v3317
      %v3319 = vpop.f32.mrf.mxu0
      %3320 = vmatprep.mubr.bf16.mxu0 0
      %3321 = vmatmul.mubr.bf16.gmra.mxu0 %v3000
      %v3322 = vpop.f32.mrf.mxu0
      %v3323 = vadd.f32 %v3210, %v3322
      %v3324 = vpop.f32.mrf.mxu0
      %v3325 = vpop.f32.mrf.mxu0
      %v3326 = vadd.f32 %v3213, %v3325
      %v3327 = vpop.f32.mrf.mxu0
      %3328 = vdwg.mxu0
      %3329 = vmatprep.subr.bf16.mxu0 0
      %3330 = vmatpush1.bf16.msra.mxu0 0
      %3331 = vmatprep.subr.bf16.mxu0 0
      %3332 = vmatpush1.bf16.msra.mxu0 0
      %3333 = vmatprep.subr.bf16.mxu0 0
      %3334 = vmatpush1.bf16.msra.mxu0 0
      %3335 = vmatprep.subr.bf16.mxu0 0
      %3336 = vmatpush1.bf16.msra.mxu0 0
      %3337 = vmatprep.subr.bf16.mxu0 0
      %3338 = vmatpush1.bf16.msra.mxu0 %v2931
      %3339 = vmatprep.subr.bf16.mxu0 0
      %3340 = vmatpush1.bf16.msra.mxu0 %v2930
      %3341 = vmatprep.subr.bf16.mxu0 0
      %3342 = vmatpush1.bf16.msra.mxu0 %v2929
      %3343 = vmatprep.subr.bf16.mxu0 0
      %3344 = vmatpush1.bf16.msra.mxu0 %v2928
      %3345 = vmatprep.subr.bf16.mxu0 0
      %3346 = vmatpush2.bf16.msra.mxu0 0
      %3347 = vmatprep.subr.bf16.mxu0 0
      %3348 = vmatpush2.bf16.msra.mxu0 0
      %3349 = vmatprep.subr.bf16.mxu0 0
      %3350 = vmatpush2.bf16.msra.mxu0 0
      %3351 = vmatprep.subr.bf16.mxu0 0
      %3352 = vmatpush2.bf16.msra.mxu0 0
      %3353 = vmatprep.subr.bf16.mxu0 0
      %3354 = vmatpush2.bf16.msra.mxu0 0
      %3355 = vmatprep.subr.bf16.mxu0 0
      %3356 = vmatpush2.bf16.msra.mxu0 0
      %3357 = vmatprep.subr.bf16.mxu0 0
      %3358 = vmatpush2.bf16.msra.mxu0 0
      %3359 = vmatprep.subr.bf16.mxu0 0
      %3360 = vmatpush2.bf16.msra.mxu0 0
      %3361 = vmatprep.mubr.bf16.mxu0 0
      %3362 = vmatmul.mubr.bf16.gmra.mxu0 %v1182
      %v3363 = vpop.f32.mrf.mxu0
      %v3364 = vadd.f32 0.0, %v3363
      %v3365 = vpop.f32.mrf.mxu0
      %v3366 = vpop.f32.mrf.mxu0
      %v3367 = vadd.f32 0.0, %v3366
      %v3368 = vpop.f32.mrf.mxu0
      %3369 = vmatprep.mubr.bf16.mxu0 0
      %3370 = vmatmul.mubr.bf16.gmra.mxu0 %v1185
      %v3371 = vpop.f32.mrf.mxu0
      %v3372 = vadd.f32 0.0, %v3371
      %v3373 = vpop.f32.mrf.mxu0
      %v3374 = vpop.f32.mrf.mxu0
      %v3375 = vadd.f32 0.0, %v3374
      %v3376 = vpop.f32.mrf.mxu0
      %3377 = vmatprep.mubr.bf16.mxu0 0
      %3378 = vmatmul.mubr.bf16.gmra.mxu0 %v1188
      %v3379 = vpop.f32.mrf.mxu0
      %v3380 = vadd.f32 0.0, %v3379
      %v3381 = vpop.f32.mrf.mxu0
      %v3382 = vpop.f32.mrf.mxu0
      %v3383 = vadd.f32 0.0, %v3382
      %v3384 = vpop.f32.mrf.mxu0
      %3385 = vmatprep.mubr.bf16.mxu0 0
      %3386 = vmatmul.mubr.bf16.gmra.mxu0 %v1191
      %v3387 = vpop.f32.mrf.mxu0
      %v3388 = vadd.f32 0.0, %v3387
      %v3389 = vpop.f32.mrf.mxu0
      %v3390 = vpop.f32.mrf.mxu0
      %v3391 = vadd.f32 0.0, %v3390
      %v3392 = vpop.f32.mrf.mxu0
      %3393 = vdwg.mxu0
      %v3394 = vpack.c.bf16 %v3367, %v3364
      %v3395 = vpack.c.bf16 %v3375, %v3372
      %v3396 = vpack.c.bf16 %v3383, %v3380
      %v3397 = vpack.c.bf16 %v3391, %v3388
      %s3398 = scalar_lea.vmem %s4, 128
      %v3399 = vld [vmem:[%s3398] sm:$0xf]
      %v3400 = vld [vmem:[%s3398 + $0x4] sm:$0xf]
      %v3401 = vld [vmem:[%s3398 + $0x8] sm:$0xf]
      %v3402 = vld [vmem:[%s3398 + $0xc] sm:$0xf]
      %v3403 = vld [vmem:[%s3398 + $0x10] sm:$0xf]
      %v3404 = vld [vmem:[%s3398 + $0x14] sm:$0xf]
      %v3405 = vld [vmem:[%s3398 + $0x18] sm:$0xf]
      %v3406 = vld [vmem:[%s3398 + $0x1c] sm:$0xf]
      %v3407 = vld [vmem:[%s3398 + $0x20] sm:$0xf]
      %v3408 = vld [vmem:[%s3398 + $0x24] sm:$0xf]
      %v3409 = vld [vmem:[%s3398 + $0x28] sm:$0xf]
      %v3410 = vld [vmem:[%s3398 + $0x2c] sm:$0xf]
      %v3411 = vld [vmem:[%s3398 + $0x30] sm:$0xf]
      %v3412 = vld [vmem:[%s3398 + $0x34] sm:$0xf]
      %v3413 = vld [vmem:[%s3398 + $0x38] sm:$0xf]
      %v3414 = vld [vmem:[%s3398 + $0x3c] sm:$0xf]
      %v3431 = vunpack.c.l.b16 %v3399
      %v3432 = vunpack.c.l.b16 %v3400
      %v3433 = vunpack.c.l.b16 %v3401
      %v3434 = vunpack.c.l.b16 %v3402
      %v3435 = vunpack.c.l.b16 %v3403
      %v3436 = vunpack.c.l.b16 %v3404
      %v3437 = vunpack.c.l.b16 %v3405
      %v3438 = vunpack.c.l.b16 %v3406
      %v3439 = vunpack.c.l.b16 %v3407
      %v3440 = vunpack.c.l.b16 %v3408
      %v3441 = vunpack.c.l.b16 %v3409
      %v3442 = vunpack.c.l.b16 %v3410
      %v3443 = vunpack.c.l.b16 %v3411
      %v3444 = vunpack.c.l.b16 %v3412
      %v3445 = vunpack.c.l.b16 %v3413
      %v3446 = vunpack.c.l.b16 %v3414
      %v3447 = vpack.c.b16 %v3432, %v3431
      %v3448 = vpack.c.b16 %v3434, %v3433
      %v3449 = vpack.c.b16 %v3436, %v3435
      %v3450 = vpack.c.b16 %v3438, %v3437
      %v3451 = vpack.c.b16 %v3440, %v3439
      %v3452 = vpack.c.b16 %v3442, %v3441
      %v3453 = vpack.c.b16 %v3444, %v3443
      %v3454 = vpack.c.b16 %v3446, %v3445
      %3463 = vmatprep.subr.bf16.mxu0 0
      %3464 = vmatpush1.bf16.msra.mxu0 %v3454
      %3465 = vmatprep.subr.bf16.mxu0 0
      %3466 = vmatpush1.bf16.msra.mxu0 %v3453
      %3467 = vmatprep.subr.bf16.mxu0 0
      %3468 = vmatpush1.bf16.msra.mxu0 %v3452
      %3469 = vmatprep.subr.bf16.mxu0 0
      %3470 = vmatpush1.bf16.msra.mxu0 %v3451
      %3471 = vmatprep.subr.bf16.mxu0 0
      %3472 = vmatpush1.bf16.msra.mxu0 %v3450
      %3473 = vmatprep.subr.bf16.mxu0 0
      %3474 = vmatpush1.bf16.msra.mxu0 %v3449
      %3475 = vmatprep.subr.bf16.mxu0 0
      %3476 = vmatpush1.bf16.msra.mxu0 %v3448
      %3477 = vmatprep.subr.bf16.mxu0 0
      %3478 = vmatpush1.bf16.msra.mxu0 %v3447
      %3479 = vmatprep.subr.bf16.mxu0 0
      %3480 = vmatpush2.bf16.msra.mxu0 0
      %3481 = vmatprep.subr.bf16.mxu0 0
      %3482 = vmatpush2.bf16.msra.mxu0 0
      %3483 = vmatprep.subr.bf16.mxu0 0
      %3484 = vmatpush2.bf16.msra.mxu0 0
      %3485 = vmatprep.subr.bf16.mxu0 0
      %3486 = vmatpush2.bf16.msra.mxu0 0
      %3487 = vmatprep.subr.bf16.mxu0 0
      %3488 = vmatpush2.bf16.msra.mxu0 0
      %3489 = vmatprep.subr.bf16.mxu0 0
      %3490 = vmatpush2.bf16.msra.mxu0 0
      %3491 = vmatprep.subr.bf16.mxu0 0
      %3492 = vmatpush2.bf16.msra.mxu0 0
      %3493 = vmatprep.subr.bf16.mxu0 0
      %3494 = vmatpush2.bf16.msra.mxu0 0
      %3495 = vmatprep.mubr.bf16.mxu0 0
      %3496 = vmatmul.mubr.bf16.gmra.mxu0 %v3394
      %v3497 = vpop.f32.mrf.mxu0
      %v3498 = vadd.f32 0.0, %v3497
      %v3499 = vpop.f32.mrf.mxu0
      %v3500 = vpop.f32.mrf.mxu0
      %v3501 = vadd.f32 0.0, %v3500
      %v3502 = vpop.f32.mrf.mxu0
      %3503 = vmatprep.mubr.bf16.mxu0 0
      %3504 = vmatmul.mubr.bf16.gmra.mxu0 %v3395
      %v3505 = vpop.f32.mrf.mxu0
      %v3506 = vadd.f32 0.0, %v3505
      %v3507 = vpop.f32.mrf.mxu0
      %v3508 = vpop.f32.mrf.mxu0
      %v3509 = vadd.f32 0.0, %v3508
      %v3510 = vpop.f32.mrf.mxu0
      %3511 = vmatprep.mubr.bf16.mxu0 0
      %3512 = vmatmul.mubr.bf16.gmra.mxu0 %v3396
      %v3513 = vpop.f32.mrf.mxu0
      %v3514 = vadd.f32 0.0, %v3513
      %v3515 = vpop.f32.mrf.mxu0
      %v3516 = vpop.f32.mrf.mxu0
      %v3517 = vadd.f32 0.0, %v3516
      %v3518 = vpop.f32.mrf.mxu0
      %3519 = vmatprep.mubr.bf16.mxu0 0
      %3520 = vmatmul.mubr.bf16.gmra.mxu0 %v3397
      %v3521 = vpop.f32.mrf.mxu0
      %v3522 = vadd.f32 0.0, %v3521
      %v3523 = vpop.f32.mrf.mxu0
      %v3524 = vpop.f32.mrf.mxu0
      %v3525 = vadd.f32 0.0, %v3524
      %v3526 = vpop.f32.mrf.mxu0
      %3527 = vdwg.mxu0
      %v3528 = vadd.f32 %v3299, %v3498
      %v3529 = vadd.f32 %v3302, %v3501
      %v3530 = vadd.f32 %v3307, %v3506
      %v3531 = vadd.f32 %v3310, %v3509
      %v3532 = vadd.f32 %v3315, %v3514
      %v3533 = vadd.f32 %v3318, %v3517
      %v3534 = vadd.f32 %v3323, %v3522
      %v3535 = vadd.f32 %v3326, %v3525
      %3536 = vmatprep.subr.bf16.mxu0 0
      %3537 = vmatpush1.bf16.msra.mxu0 0
      %3538 = vmatprep.subr.bf16.mxu0 0
      %3539 = vmatpush1.bf16.msra.mxu0 0
      %3540 = vmatprep.subr.bf16.mxu0 0
      %3541 = vmatpush1.bf16.msra.mxu0 0
      %3542 = vmatprep.subr.bf16.mxu0 0
      %3543 = vmatpush1.bf16.msra.mxu0 0
      %3544 = vmatprep.subr.bf16.mxu0 0
      %3545 = vmatpush1.bf16.msra.mxu0 %v2931
      %3546 = vmatprep.subr.bf16.mxu0 0
      %3547 = vmatpush1.bf16.msra.mxu0 %v2930
      %3548 = vmatprep.subr.bf16.mxu0 0
      %3549 = vmatpush1.bf16.msra.mxu0 %v2929
      %3550 = vmatprep.subr.bf16.mxu0 0
      %3551 = vmatpush1.bf16.msra.mxu0 %v2928
      %3552 = vmatprep.subr.bf16.mxu0 0
      %3553 = vmatpush2.bf16.msra.mxu0 0
      %3554 = vmatprep.subr.bf16.mxu0 0
      %3555 = vmatpush2.bf16.msra.mxu0 0
      %3556 = vmatprep.subr.bf16.mxu0 0
      %3557 = vmatpush2.bf16.msra.mxu0 0
      %3558 = vmatprep.subr.bf16.mxu0 0
      %3559 = vmatpush2.bf16.msra.mxu0 0
      %3560 = vmatprep.subr.bf16.mxu0 0
      %3561 = vmatpush2.bf16.msra.mxu0 0
      %3562 = vmatprep.subr.bf16.mxu0 0
      %3563 = vmatpush2.bf16.msra.mxu0 0
      %3564 = vmatprep.subr.bf16.mxu0 0
      %3565 = vmatpush2.bf16.msra.mxu0 0
      %3566 = vmatprep.subr.bf16.mxu0 0
      %3567 = vmatpush2.bf16.msra.mxu0 0
      %3568 = vmatprep.mubr.bf16.mxu0 0
      %3569 = vmatmul.mubr.bf16.gmra.mxu0 %v1430
      %v3570 = vpop.f32.mrf.mxu0
      %v3571 = vadd.f32 0.0, %v3570
      %v3572 = vpop.f32.mrf.mxu0
      %v3573 = vpop.f32.mrf.mxu0
      %v3574 = vadd.f32 0.0, %v3573
      %v3575 = vpop.f32.mrf.mxu0
      %3576 = vmatprep.mubr.bf16.mxu0 0
      %3577 = vmatmul.mubr.bf16.gmra.mxu0 %v1433
      %v3578 = vpop.f32.mrf.mxu0
      %v3579 = vadd.f32 0.0, %v3578
      %v3580 = vpop.f32.mrf.mxu0
      %v3581 = vpop.f32.mrf.mxu0
      %v3582 = vadd.f32 0.0, %v3581
      %v3583 = vpop.f32.mrf.mxu0
      %3584 = vmatprep.mubr.bf16.mxu0 0
      %3585 = vmatmul.mubr.bf16.gmra.mxu0 %v1436
      %v3586 = vpop.f32.mrf.mxu0
      %v3587 = vadd.f32 0.0, %v3586
      %v3588 = vpop.f32.mrf.mxu0
      %v3589 = vpop.f32.mrf.mxu0
      %v3590 = vadd.f32 0.0, %v3589
      %v3591 = vpop.f32.mrf.mxu0
      %3592 = vmatprep.mubr.bf16.mxu0 0
      %3593 = vmatmul.mubr.bf16.gmra.mxu0 %v1439
      %v3594 = vpop.f32.mrf.mxu0
      %v3595 = vadd.f32 0.0, %v3594
      %v3596 = vpop.f32.mrf.mxu0
      %v3597 = vpop.f32.mrf.mxu0
      %v3598 = vadd.f32 0.0, %v3597
      %v3599 = vpop.f32.mrf.mxu0
      %3600 = vdwg.mxu0
      %v3601 = vpack.c.bf16 %v3574, %v3571
      %v3602 = vpack.c.bf16 %v3582, %v3579
      %v3603 = vpack.c.bf16 %v3590, %v3587
      %v3604 = vpack.c.bf16 %v3598, %v3595
      %s3605 = scalar_lea.vmem %s4, 192
      %v3606 = vld [vmem:[%s3605] sm:$0xf]
      %v3607 = vld [vmem:[%s3605 + $0x4] sm:$0xf]
      %v3608 = vld [vmem:[%s3605 + $0x8] sm:$0xf]
      %v3609 = vld [vmem:[%s3605 + $0xc] sm:$0xf]
      %v3610 = vld [vmem:[%s3605 + $0x10] sm:$0xf]
      %v3611 = vld [vmem:[%s3605 + $0x14] sm:$0xf]
      %v3612 = vld [vmem:[%s3605 + $0x18] sm:$0xf]
      %v3613 = vld [vmem:[%s3605 + $0x1c] sm:$0xf]
      %v3614 = vld [vmem:[%s3605 + $0x20] sm:$0xf]
      %v3615 = vld [vmem:[%s3605 + $0x24] sm:$0xf]
      %v3616 = vld [vmem:[%s3605 + $0x28] sm:$0xf]
      %v3617 = vld [vmem:[%s3605 + $0x2c] sm:$0xf]
      %v3618 = vld [vmem:[%s3605 + $0x30] sm:$0xf]
      %v3619 = vld [vmem:[%s3605 + $0x34] sm:$0xf]
      %v3620 = vld [vmem:[%s3605 + $0x38] sm:$0xf]
      %v3621 = vld [vmem:[%s3605 + $0x3c] sm:$0xf]
      %v3638 = vunpack.c.l.b16 %v3606
      %v3639 = vunpack.c.l.b16 %v3607
      %v3640 = vunpack.c.l.b16 %v3608
      %v3641 = vunpack.c.l.b16 %v3609
      %v3642 = vunpack.c.l.b16 %v3610
      %v3643 = vunpack.c.l.b16 %v3611
      %v3644 = vunpack.c.l.b16 %v3612
      %v3645 = vunpack.c.l.b16 %v3613
      %v3646 = vunpack.c.l.b16 %v3614
      %v3647 = vunpack.c.l.b16 %v3615
      %v3648 = vunpack.c.l.b16 %v3616
      %v3649 = vunpack.c.l.b16 %v3617
      %v3650 = vunpack.c.l.b16 %v3618
      %v3651 = vunpack.c.l.b16 %v3619
      %v3652 = vunpack.c.l.b16 %v3620
      %v3653 = vunpack.c.l.b16 %v3621
      %v3654 = vpack.c.b16 %v3639, %v3638
      %v3655 = vpack.c.b16 %v3641, %v3640
      %v3656 = vpack.c.b16 %v3643, %v3642
      %v3657 = vpack.c.b16 %v3645, %v3644
      %v3658 = vpack.c.b16 %v3647, %v3646
      %v3659 = vpack.c.b16 %v3649, %v3648
      %v3660 = vpack.c.b16 %v3651, %v3650
      %v3661 = vpack.c.b16 %v3653, %v3652
      %3670 = vmatprep.subr.bf16.mxu0 0
      %3671 = vmatpush1.bf16.msra.mxu0 %v3661
      %3672 = vmatprep.subr.bf16.mxu0 0
      %3673 = vmatpush1.bf16.msra.mxu0 %v3660
      %3674 = vmatprep.subr.bf16.mxu0 0
      %3675 = vmatpush1.bf16.msra.mxu0 %v3659
      %3676 = vmatprep.subr.bf16.mxu0 0
      %3677 = vmatpush1.bf16.msra.mxu0 %v3658
      %3678 = vmatprep.subr.bf16.mxu0 0
      %3679 = vmatpush1.bf16.msra.mxu0 %v3657
      %3680 = vmatprep.subr.bf16.mxu0 0
      %3681 = vmatpush1.bf16.msra.mxu0 %v3656
      %3682 = vmatprep.subr.bf16.mxu0 0
      %3683 = vmatpush1.bf16.msra.mxu0 %v3655
      %3684 = vmatprep.subr.bf16.mxu0 0
      %3685 = vmatpush1.bf16.msra.mxu0 %v3654
      %3686 = vmatprep.subr.bf16.mxu0 0
      %3687 = vmatpush2.bf16.msra.mxu0 0
      %3688 = vmatprep.subr.bf16.mxu0 0
      %3689 = vmatpush2.bf16.msra.mxu0 0
      %3690 = vmatprep.subr.bf16.mxu0 0
      %3691 = vmatpush2.bf16.msra.mxu0 0
      %3692 = vmatprep.subr.bf16.mxu0 0
      %3693 = vmatpush2.bf16.msra.mxu0 0
      %3694 = vmatprep.subr.bf16.mxu0 0
      %3695 = vmatpush2.bf16.msra.mxu0 0
      %3696 = vmatprep.subr.bf16.mxu0 0
      %3697 = vmatpush2.bf16.msra.mxu0 0
      %3698 = vmatprep.subr.bf16.mxu0 0
      %3699 = vmatpush2.bf16.msra.mxu0 0
      %3700 = vmatprep.subr.bf16.mxu0 0
      %3701 = vmatpush2.bf16.msra.mxu0 0
      %3702 = vmatprep.mubr.bf16.mxu0 0
      %3703 = vmatmul.mubr.bf16.gmra.mxu0 %v3601
      %v3704 = vpop.f32.mrf.mxu0
      %v3705 = vadd.f32 0.0, %v3704
      %v3706 = vpop.f32.mrf.mxu0
      %v3707 = vpop.f32.mrf.mxu0
      %v3708 = vadd.f32 0.0, %v3707
      %v3709 = vpop.f32.mrf.mxu0
      %3710 = vmatprep.mubr.bf16.mxu0 0
      %3711 = vmatmul.mubr.bf16.gmra.mxu0 %v3602
      %v3712 = vpop.f32.mrf.mxu0
      %v3713 = vadd.f32 0.0, %v3712
      %v3714 = vpop.f32.mrf.mxu0
      %v3715 = vpop.f32.mrf.mxu0
      %v3716 = vadd.f32 0.0, %v3715
      %v3717 = vpop.f32.mrf.mxu0
      %3718 = vmatprep.mubr.bf16.mxu0 0
      %3719 = vmatmul.mubr.bf16.gmra.mxu0 %v3603
      %v3720 = vpop.f32.mrf.mxu0
      %v3721 = vadd.f32 0.0, %v3720
      %v3722 = vpop.f32.mrf.mxu0
      %v3723 = vpop.f32.mrf.mxu0
      %v3724 = vadd.f32 0.0, %v3723
      %v3725 = vpop.f32.mrf.mxu0
      %3726 = vmatprep.mubr.bf16.mxu0 0
      %3727 = vmatmul.mubr.bf16.gmra.mxu0 %v3604
      %v3728 = vpop.f32.mrf.mxu0
      %v3729 = vadd.f32 0.0, %v3728
      %v3730 = vpop.f32.mrf.mxu0
      %v3731 = vpop.f32.mrf.mxu0
      %v3732 = vadd.f32 0.0, %v3731
      %v3733 = vpop.f32.mrf.mxu0
      %3734 = vdwg.mxu0
      %v3735 = vadd.f32 %v3528, %v3705
      %v3736 = vadd.f32 %v3529, %v3708
      %v3737 = vadd.f32 %v3530, %v3713
      %v3738 = vadd.f32 %v3531, %v3716
      %v3739 = vadd.f32 %v3532, %v3721
      %v3740 = vadd.f32 %v3533, %v3724
      %v3741 = vadd.f32 %v3534, %v3729
      %v3742 = vadd.f32 %v3535, %v3732
      %3743 = vmatprep.subr.bf16.mxu0 0
      %3744 = vmatpush1.bf16.msra.mxu0 0
      %3745 = vmatprep.subr.bf16.mxu0 0
      %3746 = vmatpush1.bf16.msra.mxu0 0
      %3747 = vmatprep.subr.bf16.mxu0 0
      %3748 = vmatpush1.bf16.msra.mxu0 0
      %3749 = vmatprep.subr.bf16.mxu0 0
      %3750 = vmatpush1.bf16.msra.mxu0 0
      %3751 = vmatprep.subr.bf16.mxu0 0
      %3752 = vmatpush1.bf16.msra.mxu0 %v2931
      %3753 = vmatprep.subr.bf16.mxu0 0
      %3754 = vmatpush1.bf16.msra.mxu0 %v2930
      %3755 = vmatprep.subr.bf16.mxu0 0
      %3756 = vmatpush1.bf16.msra.mxu0 %v2929
      %3757 = vmatprep.subr.bf16.mxu0 0
      %3758 = vmatpush1.bf16.msra.mxu0 %v2928
      %3759 = vmatprep.subr.bf16.mxu0 0
      %3760 = vmatpush2.bf16.msra.mxu0 0
      %3761 = vmatprep.subr.bf16.mxu0 0
      %3762 = vmatpush2.bf16.msra.mxu0 0
      %3763 = vmatprep.subr.bf16.mxu0 0
      %3764 = vmatpush2.bf16.msra.mxu0 0
      %3765 = vmatprep.subr.bf16.mxu0 0
      %3766 = vmatpush2.bf16.msra.mxu0 0
      %3767 = vmatprep.subr.bf16.mxu0 0
      %3768 = vmatpush2.bf16.msra.mxu0 0
      %3769 = vmatprep.subr.bf16.mxu0 0
      %3770 = vmatpush2.bf16.msra.mxu0 0
      %3771 = vmatprep.subr.bf16.mxu0 0
      %3772 = vmatpush2.bf16.msra.mxu0 0
      %3773 = vmatprep.subr.bf16.mxu0 0
      %3774 = vmatpush2.bf16.msra.mxu0 0
      %3775 = vmatprep.mubr.bf16.mxu0 0
      %3776 = vmatmul.mubr.bf16.gmra.mxu0 %v1678
      %v3777 = vpop.f32.mrf.mxu0
      %v3778 = vadd.f32 0.0, %v3777
      %v3779 = vpop.f32.mrf.mxu0
      %v3780 = vpop.f32.mrf.mxu0
      %v3781 = vadd.f32 0.0, %v3780
      %v3782 = vpop.f32.mrf.mxu0
      %3783 = vmatprep.mubr.bf16.mxu0 0
      %3784 = vmatmul.mubr.bf16.gmra.mxu0 %v1681
      %v3785 = vpop.f32.mrf.mxu0
      %v3786 = vadd.f32 0.0, %v3785
      %v3787 = vpop.f32.mrf.mxu0
      %v3788 = vpop.f32.mrf.mxu0
      %v3789 = vadd.f32 0.0, %v3788
      %v3790 = vpop.f32.mrf.mxu0
      %3791 = vmatprep.mubr.bf16.mxu0 0
      %3792 = vmatmul.mubr.bf16.gmra.mxu0 %v1684
      %v3793 = vpop.f32.mrf.mxu0
      %v3794 = vadd.f32 0.0, %v3793
      %v3795 = vpop.f32.mrf.mxu0
      %v3796 = vpop.f32.mrf.mxu0
      %v3797 = vadd.f32 0.0, %v3796
      %v3798 = vpop.f32.mrf.mxu0
      %3799 = vmatprep.mubr.bf16.mxu0 0
      %3800 = vmatmul.mubr.bf16.gmra.mxu0 %v1687
      %v3801 = vpop.f32.mrf.mxu0
      %v3802 = vadd.f32 0.0, %v3801
      %v3803 = vpop.f32.mrf.mxu0
      %v3804 = vpop.f32.mrf.mxu0
      %v3805 = vadd.f32 0.0, %v3804
      %v3806 = vpop.f32.mrf.mxu0
      %3807 = vdwg.mxu0
      %v3808 = vpack.c.bf16 %v3781, %v3778
      %v3809 = vpack.c.bf16 %v3789, %v3786
      %v3810 = vpack.c.bf16 %v3797, %v3794
      %v3811 = vpack.c.bf16 %v3805, %v3802
      %s3812 = scalar_lea.vmem %s4, 256
      %v3813 = vld [vmem:[%s3812] sm:$0xf]
      %v3814 = vld [vmem:[%s3812 + $0x4] sm:$0xf]
      %v3815 = vld [vmem:[%s3812 + $0x8] sm:$0xf]
      %v3816 = vld [vmem:[%s3812 + $0xc] sm:$0xf]
      %v3817 = vld [vmem:[%s3812 + $0x10] sm:$0xf]
      %v3818 = vld [vmem:[%s3812 + $0x14] sm:$0xf]
      %v3819 = vld [vmem:[%s3812 + $0x18] sm:$0xf]
      %v3820 = vld [vmem:[%s3812 + $0x1c] sm:$0xf]
      %v3821 = vld [vmem:[%s3812 + $0x20] sm:$0xf]
      %v3822 = vld [vmem:[%s3812 + $0x24] sm:$0xf]
      %v3823 = vld [vmem:[%s3812 + $0x28] sm:$0xf]
      %v3824 = vld [vmem:[%s3812 + $0x2c] sm:$0xf]
      %v3825 = vld [vmem:[%s3812 + $0x30] sm:$0xf]
      %v3826 = vld [vmem:[%s3812 + $0x34] sm:$0xf]
      %v3827 = vld [vmem:[%s3812 + $0x38] sm:$0xf]
      %v3828 = vld [vmem:[%s3812 + $0x3c] sm:$0xf]
      %v3845 = vunpack.c.l.b16 %v3813
      %v3846 = vunpack.c.l.b16 %v3814
      %v3847 = vunpack.c.l.b16 %v3815
      %v3848 = vunpack.c.l.b16 %v3816
      %v3849 = vunpack.c.l.b16 %v3817
      %v3850 = vunpack.c.l.b16 %v3818
      %v3851 = vunpack.c.l.b16 %v3819
      %v3852 = vunpack.c.l.b16 %v3820
      %v3853 = vunpack.c.l.b16 %v3821
      %v3854 = vunpack.c.l.b16 %v3822
      %v3855 = vunpack.c.l.b16 %v3823
      %v3856 = vunpack.c.l.b16 %v3824
      %v3857 = vunpack.c.l.b16 %v3825
      %v3858 = vunpack.c.l.b16 %v3826
      %v3859 = vunpack.c.l.b16 %v3827
      %v3860 = vunpack.c.l.b16 %v3828
      %v3861 = vpack.c.b16 %v3846, %v3845
      %v3862 = vpack.c.b16 %v3848, %v3847
      %v3863 = vpack.c.b16 %v3850, %v3849
      %v3864 = vpack.c.b16 %v3852, %v3851
      %v3865 = vpack.c.b16 %v3854, %v3853
      %v3866 = vpack.c.b16 %v3856, %v3855
      %v3867 = vpack.c.b16 %v3858, %v3857
      %v3868 = vpack.c.b16 %v3860, %v3859
      %3877 = vmatprep.subr.bf16.mxu0 0
      %3878 = vmatpush1.bf16.msra.mxu0 %v3868
      %3879 = vmatprep.subr.bf16.mxu0 0
      %3880 = vmatpush1.bf16.msra.mxu0 %v3867
      %3881 = vmatprep.subr.bf16.mxu0 0
      %3882 = vmatpush1.bf16.msra.mxu0 %v3866
      %3883 = vmatprep.subr.bf16.mxu0 0
      %3884 = vmatpush1.bf16.msra.mxu0 %v3865
      %3885 = vmatprep.subr.bf16.mxu0 0
      %3886 = vmatpush1.bf16.msra.mxu0 %v3864
      %3887 = vmatprep.subr.bf16.mxu0 0
      %3888 = vmatpush1.bf16.msra.mxu0 %v3863
      %3889 = vmatprep.subr.bf16.mxu0 0
      %3890 = vmatpush1.bf16.msra.mxu0 %v3862
      %3891 = vmatprep.subr.bf16.mxu0 0
      %3892 = vmatpush1.bf16.msra.mxu0 %v3861
      %3893 = vmatprep.subr.bf16.mxu0 0
      %3894 = vmatpush2.bf16.msra.mxu0 0
      %3895 = vmatprep.subr.bf16.mxu0 0
      %3896 = vmatpush2.bf16.msra.mxu0 0
      %3897 = vmatprep.subr.bf16.mxu0 0
      %3898 = vmatpush2.bf16.msra.mxu0 0
      %3899 = vmatprep.subr.bf16.mxu0 0
      %3900 = vmatpush2.bf16.msra.mxu0 0
      %3901 = vmatprep.subr.bf16.mxu0 0
      %3902 = vmatpush2.bf16.msra.mxu0 0
      %3903 = vmatprep.subr.bf16.mxu0 0
      %3904 = vmatpush2.bf16.msra.mxu0 0
      %3905 = vmatprep.subr.bf16.mxu0 0
      %3906 = vmatpush2.bf16.msra.mxu0 0
      %3907 = vmatprep.subr.bf16.mxu0 0
      %3908 = vmatpush2.bf16.msra.mxu0 0
      %3909 = vmatprep.mubr.bf16.mxu0 0
      %3910 = vmatmul.mubr.bf16.gmra.mxu0 %v3808
      %v3911 = vpop.f32.mrf.mxu0
      %v3912 = vadd.f32 0.0, %v3911
      %v3913 = vpop.f32.mrf.mxu0
      %v3914 = vpop.f32.mrf.mxu0
      %v3915 = vadd.f32 0.0, %v3914
      %v3916 = vpop.f32.mrf.mxu0
      %3917 = vmatprep.mubr.bf16.mxu0 0
      %3918 = vmatmul.mubr.bf16.gmra.mxu0 %v3809
      %v3919 = vpop.f32.mrf.mxu0
      %v3920 = vadd.f32 0.0, %v3919
      %v3921 = vpop.f32.mrf.mxu0
      %v3922 = vpop.f32.mrf.mxu0
      %v3923 = vadd.f32 0.0, %v3922
      %v3924 = vpop.f32.mrf.mxu0
      %3925 = vmatprep.mubr.bf16.mxu0 0
      %3926 = vmatmul.mubr.bf16.gmra.mxu0 %v3810
      %v3927 = vpop.f32.mrf.mxu0
      %v3928 = vadd.f32 0.0, %v3927
      %v3929 = vpop.f32.mrf.mxu0
      %v3930 = vpop.f32.mrf.mxu0
      %v3931 = vadd.f32 0.0, %v3930
      %v3932 = vpop.f32.mrf.mxu0
      %3933 = vmatprep.mubr.bf16.mxu0 0
      %3934 = vmatmul.mubr.bf16.gmra.mxu0 %v3811
      %v3935 = vpop.f32.mrf.mxu0
      %v3936 = vadd.f32 0.0, %v3935
      %v3937 = vpop.f32.mrf.mxu0
      %v3938 = vpop.f32.mrf.mxu0
      %v3939 = vadd.f32 0.0, %v3938
      %v3940 = vpop.f32.mrf.mxu0
      %3941 = vdwg.mxu0
      %v3942 = vadd.f32 %v3735, %v3912
      %v3943 = vadd.f32 %v3736, %v3915
      %v3944 = vadd.f32 %v3737, %v3920
      %v3945 = vadd.f32 %v3738, %v3923
      %v3946 = vadd.f32 %v3739, %v3928
      %v3947 = vadd.f32 %v3740, %v3931
      %v3948 = vadd.f32 %v3741, %v3936
      %v3949 = vadd.f32 %v3742, %v3939
      %3950 = vmatprep.subr.bf16.mxu0 0
      %3951 = vmatpush1.bf16.msra.mxu0 0
      %3952 = vmatprep.subr.bf16.mxu0 0
      %3953 = vmatpush1.bf16.msra.mxu0 0
      %3954 = vmatprep.subr.bf16.mxu0 0
      %3955 = vmatpush1.bf16.msra.mxu0 0
      %3956 = vmatprep.subr.bf16.mxu0 0
      %3957 = vmatpush1.bf16.msra.mxu0 0
      %3958 = vmatprep.subr.bf16.mxu0 0
      %3959 = vmatpush1.bf16.msra.mxu0 %v2931
      %3960 = vmatprep.subr.bf16.mxu0 0
      %3961 = vmatpush1.bf16.msra.mxu0 %v2930
      %3962 = vmatprep.subr.bf16.mxu0 0
      %3963 = vmatpush1.bf16.msra.mxu0 %v2929
      %3964 = vmatprep.subr.bf16.mxu0 0
      %3965 = vmatpush1.bf16.msra.mxu0 %v2928
      %3966 = vmatprep.subr.bf16.mxu0 0
      %3967 = vmatpush2.bf16.msra.mxu0 0
      %3968 = vmatprep.subr.bf16.mxu0 0
      %3969 = vmatpush2.bf16.msra.mxu0 0
      %3970 = vmatprep.subr.bf16.mxu0 0
      %3971 = vmatpush2.bf16.msra.mxu0 0
      %3972 = vmatprep.subr.bf16.mxu0 0
      %3973 = vmatpush2.bf16.msra.mxu0 0
      %3974 = vmatprep.subr.bf16.mxu0 0
      %3975 = vmatpush2.bf16.msra.mxu0 0
      %3976 = vmatprep.subr.bf16.mxu0 0
      %3977 = vmatpush2.bf16.msra.mxu0 0
      %3978 = vmatprep.subr.bf16.mxu0 0
      %3979 = vmatpush2.bf16.msra.mxu0 0
      %3980 = vmatprep.subr.bf16.mxu0 0
      %3981 = vmatpush2.bf16.msra.mxu0 0
      %3982 = vmatprep.mubr.bf16.mxu0 0
      %3983 = vmatmul.mubr.bf16.gmra.mxu0 %v1926
      %v3984 = vpop.f32.mrf.mxu0
      %v3985 = vadd.f32 0.0, %v3984
      %v3986 = vpop.f32.mrf.mxu0
      %v3987 = vpop.f32.mrf.mxu0
      %v3988 = vadd.f32 0.0, %v3987
      %v3989 = vpop.f32.mrf.mxu0
      %3990 = vmatprep.mubr.bf16.mxu0 0
      %3991 = vmatmul.mubr.bf16.gmra.mxu0 %v1929
      %v3992 = vpop.f32.mrf.mxu0
      %v3993 = vadd.f32 0.0, %v3992
      %v3994 = vpop.f32.mrf.mxu0
      %v3995 = vpop.f32.mrf.mxu0
      %v3996 = vadd.f32 0.0, %v3995
      %v3997 = vpop.f32.mrf.mxu0
      %3998 = vmatprep.mubr.bf16.mxu0 0
      %3999 = vmatmul.mubr.bf16.gmra.mxu0 %v1932
      %v4000 = vpop.f32.mrf.mxu0
      %v4001 = vadd.f32 0.0, %v4000
      %v4002 = vpop.f32.mrf.mxu0
      %v4003 = vpop.f32.mrf.mxu0
      %v4004 = vadd.f32 0.0, %v4003
      %v4005 = vpop.f32.mrf.mxu0
      %4006 = vmatprep.mubr.bf16.mxu0 0
      %4007 = vmatmul.mubr.bf16.gmra.mxu0 %v1935
      %v4008 = vpop.f32.mrf.mxu0
      %v4009 = vadd.f32 0.0, %v4008
      %v4010 = vpop.f32.mrf.mxu0
      %v4011 = vpop.f32.mrf.mxu0
      %v4012 = vadd.f32 0.0, %v4011
      %v4013 = vpop.f32.mrf.mxu0
      %4014 = vdwg.mxu0
      %v4015 = vpack.c.bf16 %v3988, %v3985
      %v4016 = vpack.c.bf16 %v3996, %v3993
      %v4017 = vpack.c.bf16 %v4004, %v4001
      %v4018 = vpack.c.bf16 %v4012, %v4009
      %s4019 = scalar_lea.vmem %s4, 320
      %v4020 = vld [vmem:[%s4019] sm:$0xf]
      %v4021 = vld [vmem:[%s4019 + $0x4] sm:$0xf]
      %v4022 = vld [vmem:[%s4019 + $0x8] sm:$0xf]
      %v4023 = vld [vmem:[%s4019 + $0xc] sm:$0xf]
      %v4024 = vld [vmem:[%s4019 + $0x10] sm:$0xf]
      %v4025 = vld [vmem:[%s4019 + $0x14] sm:$0xf]
      %v4026 = vld [vmem:[%s4019 + $0x18] sm:$0xf]
      %v4027 = vld [vmem:[%s4019 + $0x1c] sm:$0xf]
      %v4028 = vld [vmem:[%s4019 + $0x20] sm:$0xf]
      %v4029 = vld [vmem:[%s4019 + $0x24] sm:$0xf]
      %v4030 = vld [vmem:[%s4019 + $0x28] sm:$0xf]
      %v4031 = vld [vmem:[%s4019 + $0x2c] sm:$0xf]
      %v4032 = vld [vmem:[%s4019 + $0x30] sm:$0xf]
      %v4033 = vld [vmem:[%s4019 + $0x34] sm:$0xf]
      %v4034 = vld [vmem:[%s4019 + $0x38] sm:$0xf]
      %v4035 = vld [vmem:[%s4019 + $0x3c] sm:$0xf]
      %v4052 = vunpack.c.l.b16 %v4020
      %v4053 = vunpack.c.l.b16 %v4021
      %v4054 = vunpack.c.l.b16 %v4022
      %v4055 = vunpack.c.l.b16 %v4023
      %v4056 = vunpack.c.l.b16 %v4024
      %v4057 = vunpack.c.l.b16 %v4025
      %v4058 = vunpack.c.l.b16 %v4026
      %v4059 = vunpack.c.l.b16 %v4027
      %v4060 = vunpack.c.l.b16 %v4028
      %v4061 = vunpack.c.l.b16 %v4029
      %v4062 = vunpack.c.l.b16 %v4030
      %v4063 = vunpack.c.l.b16 %v4031
      %v4064 = vunpack.c.l.b16 %v4032
      %v4065 = vunpack.c.l.b16 %v4033
      %v4066 = vunpack.c.l.b16 %v4034
      %v4067 = vunpack.c.l.b16 %v4035
      %v4068 = vpack.c.b16 %v4053, %v4052
      %v4069 = vpack.c.b16 %v4055, %v4054
      %v4070 = vpack.c.b16 %v4057, %v4056
      %v4071 = vpack.c.b16 %v4059, %v4058
      %v4072 = vpack.c.b16 %v4061, %v4060
      %v4073 = vpack.c.b16 %v4063, %v4062
      %v4074 = vpack.c.b16 %v4065, %v4064
      %v4075 = vpack.c.b16 %v4067, %v4066
      %4084 = vmatprep.subr.bf16.mxu0 0
      %4085 = vmatpush1.bf16.msra.mxu0 %v4075
      %4086 = vmatprep.subr.bf16.mxu0 0
      %4087 = vmatpush1.bf16.msra.mxu0 %v4074
      %4088 = vmatprep.subr.bf16.mxu0 0
      %4089 = vmatpush1.bf16.msra.mxu0 %v4073
      %4090 = vmatprep.subr.bf16.mxu0 0
      %4091 = vmatpush1.bf16.msra.mxu0 %v4072
      %4092 = vmatprep.subr.bf16.mxu0 0
      %4093 = vmatpush1.bf16.msra.mxu0 %v4071
      %4094 = vmatprep.subr.bf16.mxu0 0
      %4095 = vmatpush1.bf16.msra.mxu0 %v4070
      %4096 = vmatprep.subr.bf16.mxu0 0
      %4097 = vmatpush1.bf16.msra.mxu0 %v4069
      %4098 = vmatprep.subr.bf16.mxu0 0
      %4099 = vmatpush1.bf16.msra.mxu0 %v4068
      %4100 = vmatprep.subr.bf16.mxu0 0
      %4101 = vmatpush2.bf16.msra.mxu0 0
      %4102 = vmatprep.subr.bf16.mxu0 0
      %4103 = vmatpush2.bf16.msra.mxu0 0
      %4104 = vmatprep.subr.bf16.mxu0 0
      %4105 = vmatpush2.bf16.msra.mxu0 0
      %4106 = vmatprep.subr.bf16.mxu0 0
      %4107 = vmatpush2.bf16.msra.mxu0 0
      %4108 = vmatprep.subr.bf16.mxu0 0
      %4109 = vmatpush2.bf16.msra.mxu0 0
      %4110 = vmatprep.subr.bf16.mxu0 0
      %4111 = vmatpush2.bf16.msra.mxu0 0
      %4112 = vmatprep.subr.bf16.mxu0 0
      %4113 = vmatpush2.bf16.msra.mxu0 0
      %4114 = vmatprep.subr.bf16.mxu0 0
      %4115 = vmatpush2.bf16.msra.mxu0 0
      %4116 = vmatprep.mubr.bf16.mxu0 0
      %4117 = vmatmul.mubr.bf16.gmra.mxu0 %v4015
      %v4118 = vpop.f32.mrf.mxu0
      %v4119 = vadd.f32 0.0, %v4118
      %v4120 = vpop.f32.mrf.mxu0
      %v4121 = vpop.f32.mrf.mxu0
      %v4122 = vadd.f32 0.0, %v4121
      %v4123 = vpop.f32.mrf.mxu0
      %4124 = vmatprep.mubr.bf16.mxu0 0
      %4125 = vmatmul.mubr.bf16.gmra.mxu0 %v4016
      %v4126 = vpop.f32.mrf.mxu0
      %v4127 = vadd.f32 0.0, %v4126
      %v4128 = vpop.f32.mrf.mxu0
      %v4129 = vpop.f32.mrf.mxu0
      %v4130 = vadd.f32 0.0, %v4129
      %v4131 = vpop.f32.mrf.mxu0
      %4132 = vmatprep.mubr.bf16.mxu0 0
      %4133 = vmatmul.mubr.bf16.gmra.mxu0 %v4017
      %v4134 = vpop.f32.mrf.mxu0
      %v4135 = vadd.f32 0.0, %v4134
      %v4136 = vpop.f32.mrf.mxu0
      %v4137 = vpop.f32.mrf.mxu0
      %v4138 = vadd.f32 0.0, %v4137
      %v4139 = vpop.f32.mrf.mxu0
      %4140 = vmatprep.mubr.bf16.mxu0 0
      %4141 = vmatmul.mubr.bf16.gmra.mxu0 %v4018
      %v4142 = vpop.f32.mrf.mxu0
      %v4143 = vadd.f32 0.0, %v4142
      %v4144 = vpop.f32.mrf.mxu0
      %v4145 = vpop.f32.mrf.mxu0
      %v4146 = vadd.f32 0.0, %v4145
      %v4147 = vpop.f32.mrf.mxu0
      %4148 = vdwg.mxu0
      %v4149 = vadd.f32 %v3942, %v4119
      %v4150 = vadd.f32 %v3943, %v4122
      %v4151 = vadd.f32 %v3944, %v4127
      %v4152 = vadd.f32 %v3945, %v4130
      %v4153 = vadd.f32 %v3946, %v4135
      %v4154 = vadd.f32 %v3947, %v4138
      %v4155 = vadd.f32 %v3948, %v4143
      %v4156 = vadd.f32 %v3949, %v4146
      %4157 = vmatprep.subr.bf16.mxu0 0
      %4158 = vmatpush1.bf16.msra.mxu0 0
      %4159 = vmatprep.subr.bf16.mxu0 0
      %4160 = vmatpush1.bf16.msra.mxu0 0
      %4161 = vmatprep.subr.bf16.mxu0 0
      %4162 = vmatpush1.bf16.msra.mxu0 0
      %4163 = vmatprep.subr.bf16.mxu0 0
      %4164 = vmatpush1.bf16.msra.mxu0 0
      %4165 = vmatprep.subr.bf16.mxu0 0
      %4166 = vmatpush1.bf16.msra.mxu0 %v2931
      %4167 = vmatprep.subr.bf16.mxu0 0
      %4168 = vmatpush1.bf16.msra.mxu0 %v2930
      %4169 = vmatprep.subr.bf16.mxu0 0
      %4170 = vmatpush1.bf16.msra.mxu0 %v2929
      %4171 = vmatprep.subr.bf16.mxu0 0
      %4172 = vmatpush1.bf16.msra.mxu0 %v2928
      %4173 = vmatprep.subr.bf16.mxu0 0
      %4174 = vmatpush2.bf16.msra.mxu0 0
      %4175 = vmatprep.subr.bf16.mxu0 0
      %4176 = vmatpush2.bf16.msra.mxu0 0
      %4177 = vmatprep.subr.bf16.mxu0 0
      %4178 = vmatpush2.bf16.msra.mxu0 0
      %4179 = vmatprep.subr.bf16.mxu0 0
      %4180 = vmatpush2.bf16.msra.mxu0 0
      %4181 = vmatprep.subr.bf16.mxu0 0
      %4182 = vmatpush2.bf16.msra.mxu0 0
      %4183 = vmatprep.subr.bf16.mxu0 0
      %4184 = vmatpush2.bf16.msra.mxu0 0
      %4185 = vmatprep.subr.bf16.mxu0 0
      %4186 = vmatpush2.bf16.msra.mxu0 0
      %4187 = vmatprep.subr.bf16.mxu0 0
      %4188 = vmatpush2.bf16.msra.mxu0 0
      %4189 = vmatprep.mubr.bf16.mxu0 0
      %4190 = vmatmul.mubr.bf16.gmra.mxu0 %v2174
      %v4191 = vpop.f32.mrf.mxu0
      %v4192 = vadd.f32 0.0, %v4191
      %v4193 = vpop.f32.mrf.mxu0
      %v4194 = vpop.f32.mrf.mxu0
      %v4195 = vadd.f32 0.0, %v4194
      %v4196 = vpop.f32.mrf.mxu0
      %4197 = vmatprep.mubr.bf16.mxu0 0
      %4198 = vmatmul.mubr.bf16.gmra.mxu0 %v2177
      %v4199 = vpop.f32.mrf.mxu0
      %v4200 = vadd.f32 0.0, %v4199
      %v4201 = vpop.f32.mrf.mxu0
      %v4202 = vpop.f32.mrf.mxu0
      %v4203 = vadd.f32 0.0, %v4202
      %v4204 = vpop.f32.mrf.mxu0
      %4205 = vmatprep.mubr.bf16.mxu0 0
      %4206 = vmatmul.mubr.bf16.gmra.mxu0 %v2180
      %v4207 = vpop.f32.mrf.mxu0
      %v4208 = vadd.f32 0.0, %v4207
      %v4209 = vpop.f32.mrf.mxu0
      %v4210 = vpop.f32.mrf.mxu0
      %v4211 = vadd.f32 0.0, %v4210
      %v4212 = vpop.f32.mrf.mxu0
      %4213 = vmatprep.mubr.bf16.mxu0 0
      %4214 = vmatmul.mubr.bf16.gmra.mxu0 %v2183
      %v4215 = vpop.f32.mrf.mxu0
      %v4216 = vadd.f32 0.0, %v4215
      %v4217 = vpop.f32.mrf.mxu0
      %v4218 = vpop.f32.mrf.mxu0
      %v4219 = vadd.f32 0.0, %v4218
      %v4220 = vpop.f32.mrf.mxu0
      %4221 = vdwg.mxu0
      %v4222 = vpack.c.bf16 %v4195, %v4192
      %v4223 = vpack.c.bf16 %v4203, %v4200
      %v4224 = vpack.c.bf16 %v4211, %v4208
      %v4225 = vpack.c.bf16 %v4219, %v4216
      %s4226 = scalar_lea.vmem %s4, 384
      %v4227 = vld [vmem:[%s4226] sm:$0xf]
      %v4228 = vld [vmem:[%s4226 + $0x4] sm:$0xf]
      %v4229 = vld [vmem:[%s4226 + $0x8] sm:$0xf]
      %v4230 = vld [vmem:[%s4226 + $0xc] sm:$0xf]
      %v4231 = vld [vmem:[%s4226 + $0x10] sm:$0xf]
      %v4232 = vld [vmem:[%s4226 + $0x14] sm:$0xf]
      %v4233 = vld [vmem:[%s4226 + $0x18] sm:$0xf]
      %v4234 = vld [vmem:[%s4226 + $0x1c] sm:$0xf]
      %v4235 = vld [vmem:[%s4226 + $0x20] sm:$0xf]
      %v4236 = vld [vmem:[%s4226 + $0x24] sm:$0xf]
      %v4237 = vld [vmem:[%s4226 + $0x28] sm:$0xf]
      %v4238 = vld [vmem:[%s4226 + $0x2c] sm:$0xf]
      %v4239 = vld [vmem:[%s4226 + $0x30] sm:$0xf]
      %v4240 = vld [vmem:[%s4226 + $0x34] sm:$0xf]
      %v4241 = vld [vmem:[%s4226 + $0x38] sm:$0xf]
      %v4242 = vld [vmem:[%s4226 + $0x3c] sm:$0xf]
      %v4259 = vunpack.c.l.b16 %v4227
      %v4260 = vunpack.c.l.b16 %v4228
      %v4261 = vunpack.c.l.b16 %v4229
      %v4262 = vunpack.c.l.b16 %v4230
      %v4263 = vunpack.c.l.b16 %v4231
      %v4264 = vunpack.c.l.b16 %v4232
      %v4265 = vunpack.c.l.b16 %v4233
      %v4266 = vunpack.c.l.b16 %v4234
      %v4267 = vunpack.c.l.b16 %v4235
      %v4268 = vunpack.c.l.b16 %v4236
      %v4269 = vunpack.c.l.b16 %v4237
      %v4270 = vunpack.c.l.b16 %v4238
      %v4271 = vunpack.c.l.b16 %v4239
      %v4272 = vunpack.c.l.b16 %v4240
      %v4273 = vunpack.c.l.b16 %v4241
      %v4274 = vunpack.c.l.b16 %v4242
      %v4275 = vpack.c.b16 %v4260, %v4259
      %v4276 = vpack.c.b16 %v4262, %v4261
      %v4277 = vpack.c.b16 %v4264, %v4263
      %v4278 = vpack.c.b16 %v4266, %v4265
      %v4279 = vpack.c.b16 %v4268, %v4267
      %v4280 = vpack.c.b16 %v4270, %v4269
      %v4281 = vpack.c.b16 %v4272, %v4271
      %v4282 = vpack.c.b16 %v4274, %v4273
      %4291 = vmatprep.subr.bf16.mxu0 0
      %4292 = vmatpush1.bf16.msra.mxu0 %v4282
      %4293 = vmatprep.subr.bf16.mxu0 0
      %4294 = vmatpush1.bf16.msra.mxu0 %v4281
      %4295 = vmatprep.subr.bf16.mxu0 0
      %4296 = vmatpush1.bf16.msra.mxu0 %v4280
      %4297 = vmatprep.subr.bf16.mxu0 0
      %4298 = vmatpush1.bf16.msra.mxu0 %v4279
      %4299 = vmatprep.subr.bf16.mxu0 0
      %4300 = vmatpush1.bf16.msra.mxu0 %v4278
      %4301 = vmatprep.subr.bf16.mxu0 0
      %4302 = vmatpush1.bf16.msra.mxu0 %v4277
      %4303 = vmatprep.subr.bf16.mxu0 0
      %4304 = vmatpush1.bf16.msra.mxu0 %v4276
      %4305 = vmatprep.subr.bf16.mxu0 0
      %4306 = vmatpush1.bf16.msra.mxu0 %v4275
      %4307 = vmatprep.subr.bf16.mxu0 0
      %4308 = vmatpush2.bf16.msra.mxu0 0
      %4309 = vmatprep.subr.bf16.mxu0 0
      %4310 = vmatpush2.bf16.msra.mxu0 0
      %4311 = vmatprep.subr.bf16.mxu0 0
      %4312 = vmatpush2.bf16.msra.mxu0 0
      %4313 = vmatprep.subr.bf16.mxu0 0
      %4314 = vmatpush2.bf16.msra.mxu0 0
      %4315 = vmatprep.subr.bf16.mxu0 0
      %4316 = vmatpush2.bf16.msra.mxu0 0
      %4317 = vmatprep.subr.bf16.mxu0 0
      %4318 = vmatpush2.bf16.msra.mxu0 0
      %4319 = vmatprep.subr.bf16.mxu0 0
      %4320 = vmatpush2.bf16.msra.mxu0 0
      %4321 = vmatprep.subr.bf16.mxu0 0
      %4322 = vmatpush2.bf16.msra.mxu0 0
      %4323 = vmatprep.mubr.bf16.mxu0 0
      %4324 = vmatmul.mubr.bf16.gmra.mxu0 %v4222
      %v4325 = vpop.f32.mrf.mxu0
      %v4326 = vadd.f32 0.0, %v4325
      %v4327 = vpop.f32.mrf.mxu0
      %v4328 = vpop.f32.mrf.mxu0
      %v4329 = vadd.f32 0.0, %v4328
      %v4330 = vpop.f32.mrf.mxu0
      %4331 = vmatprep.mubr.bf16.mxu0 0
      %4332 = vmatmul.mubr.bf16.gmra.mxu0 %v4223
      %v4333 = vpop.f32.mrf.mxu0
      %v4334 = vadd.f32 0.0, %v4333
      %v4335 = vpop.f32.mrf.mxu0
      %v4336 = vpop.f32.mrf.mxu0
      %v4337 = vadd.f32 0.0, %v4336
      %v4338 = vpop.f32.mrf.mxu0
      %4339 = vmatprep.mubr.bf16.mxu0 0
      %4340 = vmatmul.mubr.bf16.gmra.mxu0 %v4224
      %v4341 = vpop.f32.mrf.mxu0
      %v4342 = vadd.f32 0.0, %v4341
      %v4343 = vpop.f32.mrf.mxu0
      %v4344 = vpop.f32.mrf.mxu0
      %v4345 = vadd.f32 0.0, %v4344
      %v4346 = vpop.f32.mrf.mxu0
      %4347 = vmatprep.mubr.bf16.mxu0 0
      %4348 = vmatmul.mubr.bf16.gmra.mxu0 %v4225
      %v4349 = vpop.f32.mrf.mxu0
      %v4350 = vadd.f32 0.0, %v4349
      %v4351 = vpop.f32.mrf.mxu0
      %v4352 = vpop.f32.mrf.mxu0
      %v4353 = vadd.f32 0.0, %v4352
      %v4354 = vpop.f32.mrf.mxu0
      %4355 = vdwg.mxu0
      %v4356 = vadd.f32 %v4149, %v4326
      %v4357 = vadd.f32 %v4150, %v4329
      %v4358 = vadd.f32 %v4151, %v4334
      %v4359 = vadd.f32 %v4152, %v4337
      %v4360 = vadd.f32 %v4153, %v4342
      %v4361 = vadd.f32 %v4154, %v4345
      %v4362 = vadd.f32 %v4155, %v4350
      %v4363 = vadd.f32 %v4156, %v4353
      %4364 = vmatprep.subr.bf16.mxu0 0
      %4365 = vmatpush1.bf16.msra.mxu0 0
      %4366 = vmatprep.subr.bf16.mxu0 0
      %4367 = vmatpush1.bf16.msra.mxu0 0
      %4368 = vmatprep.subr.bf16.mxu0 0
      %4369 = vmatpush1.bf16.msra.mxu0 0
      %4370 = vmatprep.subr.bf16.mxu0 0
      %4371 = vmatpush1.bf16.msra.mxu0 0
      %4372 = vmatprep.subr.bf16.mxu0 0
      %4373 = vmatpush1.bf16.msra.mxu0 %v2931
      %4374 = vmatprep.subr.bf16.mxu0 0
      %4375 = vmatpush1.bf16.msra.mxu0 %v2930
      %4376 = vmatprep.subr.bf16.mxu0 0
      %4377 = vmatpush1.bf16.msra.mxu0 %v2929
      %4378 = vmatprep.subr.bf16.mxu0 0
      %4379 = vmatpush1.bf16.msra.mxu0 %v2928
      %4380 = vmatprep.subr.bf16.mxu0 0
      %4381 = vmatpush2.bf16.msra.mxu0 0
      %4382 = vmatprep.subr.bf16.mxu0 0
      %4383 = vmatpush2.bf16.msra.mxu0 0
      %4384 = vmatprep.subr.bf16.mxu0 0
      %4385 = vmatpush2.bf16.msra.mxu0 0
      %4386 = vmatprep.subr.bf16.mxu0 0
      %4387 = vmatpush2.bf16.msra.mxu0 0
      %4388 = vmatprep.subr.bf16.mxu0 0
      %4389 = vmatpush2.bf16.msra.mxu0 0
      %4390 = vmatprep.subr.bf16.mxu0 0
      %4391 = vmatpush2.bf16.msra.mxu0 0
      %4392 = vmatprep.subr.bf16.mxu0 0
      %4393 = vmatpush2.bf16.msra.mxu0 0
      %4394 = vmatprep.subr.bf16.mxu0 0
      %4395 = vmatpush2.bf16.msra.mxu0 0
      %4396 = vmatprep.mubr.bf16.mxu0 0
      %4397 = vmatmul.mubr.bf16.gmra.mxu0 %v2422
      %v4398 = vpop.f32.mrf.mxu0
      %v4399 = vadd.f32 0.0, %v4398
      %v4400 = vpop.f32.mrf.mxu0
      %v4401 = vpop.f32.mrf.mxu0
      %v4402 = vadd.f32 0.0, %v4401
      %v4403 = vpop.f32.mrf.mxu0
      %4404 = vmatprep.mubr.bf16.mxu0 0
      %4405 = vmatmul.mubr.bf16.gmra.mxu0 %v2425
      %v4406 = vpop.f32.mrf.mxu0
      %v4407 = vadd.f32 0.0, %v4406
      %v4408 = vpop.f32.mrf.mxu0
      %v4409 = vpop.f32.mrf.mxu0
      %v4410 = vadd.f32 0.0, %v4409
      %v4411 = vpop.f32.mrf.mxu0
      %4412 = vmatprep.mubr.bf16.mxu0 0
      %4413 = vmatmul.mubr.bf16.gmra.mxu0 %v2428
      %v4414 = vpop.f32.mrf.mxu0
      %v4415 = vadd.f32 0.0, %v4414
      %v4416 = vpop.f32.mrf.mxu0
      %v4417 = vpop.f32.mrf.mxu0
      %v4418 = vadd.f32 0.0, %v4417
      %v4419 = vpop.f32.mrf.mxu0
      %4420 = vmatprep.mubr.bf16.mxu0 0
      %4421 = vmatmul.mubr.bf16.gmra.mxu0 %v2431
      %v4422 = vpop.f32.mrf.mxu0
      %v4423 = vadd.f32 0.0, %v4422
      %v4424 = vpop.f32.mrf.mxu0
      %v4425 = vpop.f32.mrf.mxu0
      %v4426 = vadd.f32 0.0, %v4425
      %v4427 = vpop.f32.mrf.mxu0
      %4428 = vdwg.mxu0
      %v4429 = vpack.c.bf16 %v4402, %v4399
      %v4430 = vpack.c.bf16 %v4410, %v4407
      %v4431 = vpack.c.bf16 %v4418, %v4415
      %v4432 = vpack.c.bf16 %v4426, %v4423
      %s4433 = scalar_lea.vmem %s4, 448
      %v4434 = vld [vmem:[%s4433] sm:$0xf]
      %v4435 = vld [vmem:[%s4433 + $0x4] sm:$0xf]
      %v4436 = vld [vmem:[%s4433 + $0x8] sm:$0xf]
      %v4437 = vld [vmem:[%s4433 + $0xc] sm:$0xf]
      %v4438 = vld [vmem:[%s4433 + $0x10] sm:$0xf]
      %v4439 = vld [vmem:[%s4433 + $0x14] sm:$0xf]
      %v4440 = vld [vmem:[%s4433 + $0x18] sm:$0xf]
      %v4441 = vld [vmem:[%s4433 + $0x1c] sm:$0xf]
      %v4442 = vld [vmem:[%s4433 + $0x20] sm:$0xf]
      %v4443 = vld [vmem:[%s4433 + $0x24] sm:$0xf]
      %v4444 = vld [vmem:[%s4433 + $0x28] sm:$0xf]
      %v4445 = vld [vmem:[%s4433 + $0x2c] sm:$0xf]
      %v4446 = vld [vmem:[%s4433 + $0x30] sm:$0xf]
      %v4447 = vld [vmem:[%s4433 + $0x34] sm:$0xf]
      %v4448 = vld [vmem:[%s4433 + $0x38] sm:$0xf]
      %v4449 = vld [vmem:[%s4433 + $0x3c] sm:$0xf]
      %v4466 = vunpack.c.l.b16 %v4434
      %v4467 = vunpack.c.l.b16 %v4435
      %v4468 = vunpack.c.l.b16 %v4436
      %v4469 = vunpack.c.l.b16 %v4437
      %v4470 = vunpack.c.l.b16 %v4438
      %v4471 = vunpack.c.l.b16 %v4439
      %v4472 = vunpack.c.l.b16 %v4440
      %v4473 = vunpack.c.l.b16 %v4441
      %v4474 = vunpack.c.l.b16 %v4442
      %v4475 = vunpack.c.l.b16 %v4443
      %v4476 = vunpack.c.l.b16 %v4444
      %v4477 = vunpack.c.l.b16 %v4445
      %v4478 = vunpack.c.l.b16 %v4446
      %v4479 = vunpack.c.l.b16 %v4447
      %v4480 = vunpack.c.l.b16 %v4448
      %v4481 = vunpack.c.l.b16 %v4449
      %v4482 = vpack.c.b16 %v4467, %v4466
      %v4483 = vpack.c.b16 %v4469, %v4468
      %v4484 = vpack.c.b16 %v4471, %v4470
      %v4485 = vpack.c.b16 %v4473, %v4472
      %v4486 = vpack.c.b16 %v4475, %v4474
      %v4487 = vpack.c.b16 %v4477, %v4476
      %v4488 = vpack.c.b16 %v4479, %v4478
      %v4489 = vpack.c.b16 %v4481, %v4480
      %4498 = vmatprep.subr.bf16.mxu0 0
      %4499 = vmatpush1.bf16.msra.mxu0 %v4489
      %4500 = vmatprep.subr.bf16.mxu0 0
      %4501 = vmatpush1.bf16.msra.mxu0 %v4488
      %4502 = vmatprep.subr.bf16.mxu0 0
      %4503 = vmatpush1.bf16.msra.mxu0 %v4487
      %4504 = vmatprep.subr.bf16.mxu0 0
      %4505 = vmatpush1.bf16.msra.mxu0 %v4486
      %4506 = vmatprep.subr.bf16.mxu0 0
      %4507 = vmatpush1.bf16.msra.mxu0 %v4485
      %4508 = vmatprep.subr.bf16.mxu0 0
      %4509 = vmatpush1.bf16.msra.mxu0 %v4484
      %4510 = vmatprep.subr.bf16.mxu0 0
      %4511 = vmatpush1.bf16.msra.mxu0 %v4483
      %4512 = vmatprep.subr.bf16.mxu0 0
      %4513 = vmatpush1.bf16.msra.mxu0 %v4482
      %4514 = vmatprep.subr.bf16.mxu0 0
      %4515 = vmatpush2.bf16.msra.mxu0 0
      %4516 = vmatprep.subr.bf16.mxu0 0
      %4517 = vmatpush2.bf16.msra.mxu0 0
      %4518 = vmatprep.subr.bf16.mxu0 0
      %4519 = vmatpush2.bf16.msra.mxu0 0
      %4520 = vmatprep.subr.bf16.mxu0 0
      %4521 = vmatpush2.bf16.msra.mxu0 0
      %4522 = vmatprep.subr.bf16.mxu0 0
      %4523 = vmatpush2.bf16.msra.mxu0 0
      %4524 = vmatprep.subr.bf16.mxu0 0
      %4525 = vmatpush2.bf16.msra.mxu0 0
      %4526 = vmatprep.subr.bf16.mxu0 0
      %4527 = vmatpush2.bf16.msra.mxu0 0
      %4528 = vmatprep.subr.bf16.mxu0 0
      %4529 = vmatpush2.bf16.msra.mxu0 0
      %4530 = vmatprep.mubr.bf16.mxu0 0
      %4531 = vmatmul.mubr.bf16.gmra.mxu0 %v4429
      %v4532 = vpop.f32.mrf.mxu0
      %v4533 = vadd.f32 0.0, %v4532
      %v4534 = vpop.f32.mrf.mxu0
      %v4535 = vpop.f32.mrf.mxu0
      %v4536 = vadd.f32 0.0, %v4535
      %v4537 = vpop.f32.mrf.mxu0
      %4538 = vmatprep.mubr.bf16.mxu0 0
      %4539 = vmatmul.mubr.bf16.gmra.mxu0 %v4430
      %v4540 = vpop.f32.mrf.mxu0
      %v4541 = vadd.f32 0.0, %v4540
      %v4542 = vpop.f32.mrf.mxu0
      %v4543 = vpop.f32.mrf.mxu0
      %v4544 = vadd.f32 0.0, %v4543
      %v4545 = vpop.f32.mrf.mxu0
      %4546 = vmatprep.mubr.bf16.mxu0 0
      %4547 = vmatmul.mubr.bf16.gmra.mxu0 %v4431
      %v4548 = vpop.f32.mrf.mxu0
      %v4549 = vadd.f32 0.0, %v4548
      %v4550 = vpop.f32.mrf.mxu0
      %v4551 = vpop.f32.mrf.mxu0
      %v4552 = vadd.f32 0.0, %v4551
      %v4553 = vpop.f32.mrf.mxu0
      %4554 = vmatprep.mubr.bf16.mxu0 0
      %4555 = vmatmul.mubr.bf16.gmra.mxu0 %v4432
      %v4556 = vpop.f32.mrf.mxu0
      %v4557 = vadd.f32 0.0, %v4556
      %v4558 = vpop.f32.mrf.mxu0
      %v4559 = vpop.f32.mrf.mxu0
      %v4560 = vadd.f32 0.0, %v4559
      %v4561 = vpop.f32.mrf.mxu0
      %4562 = vdwg.mxu0
      %v4563 = vadd.f32 %v4356, %v4533
      %v4564 = vadd.f32 %v4357, %v4536
      %v4565 = vadd.f32 %v4358, %v4541
      %v4566 = vadd.f32 %v4359, %v4544
      %v4567 = vadd.f32 %v4360, %v4549
      %v4568 = vadd.f32 %v4361, %v4552
      %v4569 = vadd.f32 %v4362, %v4557
      %v4570 = vadd.f32 %v4363, %v4560
      %4571 = vmatprep.subr.bf16.mxu0 0
      %4572 = vmatpush1.bf16.msra.mxu0 0
      %4573 = vmatprep.subr.bf16.mxu0 0
      %4574 = vmatpush1.bf16.msra.mxu0 0
      %4575 = vmatprep.subr.bf16.mxu0 0
      %4576 = vmatpush1.bf16.msra.mxu0 0
      %4577 = vmatprep.subr.bf16.mxu0 0
      %4578 = vmatpush1.bf16.msra.mxu0 0
      %4579 = vmatprep.subr.bf16.mxu0 0
      %4580 = vmatpush1.bf16.msra.mxu0 %v2931
      %4581 = vmatprep.subr.bf16.mxu0 0
      %4582 = vmatpush1.bf16.msra.mxu0 %v2930
      %4583 = vmatprep.subr.bf16.mxu0 0
      %4584 = vmatpush1.bf16.msra.mxu0 %v2929
      %4585 = vmatprep.subr.bf16.mxu0 0
      %4586 = vmatpush1.bf16.msra.mxu0 %v2928
      %4587 = vmatprep.subr.bf16.mxu0 0
      %4588 = vmatpush2.bf16.msra.mxu0 0
      %4589 = vmatprep.subr.bf16.mxu0 0
      %4590 = vmatpush2.bf16.msra.mxu0 0
      %4591 = vmatprep.subr.bf16.mxu0 0
      %4592 = vmatpush2.bf16.msra.mxu0 0
      %4593 = vmatprep.subr.bf16.mxu0 0
      %4594 = vmatpush2.bf16.msra.mxu0 0
      %4595 = vmatprep.subr.bf16.mxu0 0
      %4596 = vmatpush2.bf16.msra.mxu0 0
      %4597 = vmatprep.subr.bf16.mxu0 0
      %4598 = vmatpush2.bf16.msra.mxu0 0
      %4599 = vmatprep.subr.bf16.mxu0 0
      %4600 = vmatpush2.bf16.msra.mxu0 0
      %4601 = vmatprep.subr.bf16.mxu0 0
      %4602 = vmatpush2.bf16.msra.mxu0 0
      %4603 = vmatprep.mubr.bf16.mxu0 0
      %4604 = vmatmul.mubr.bf16.gmra.mxu0 %v2670
      %v4605 = vpop.f32.mrf.mxu0
      %v4606 = vadd.f32 0.0, %v4605
      %v4607 = vpop.f32.mrf.mxu0
      %v4608 = vpop.f32.mrf.mxu0
      %v4609 = vadd.f32 0.0, %v4608
      %v4610 = vpop.f32.mrf.mxu0
      %4611 = vmatprep.mubr.bf16.mxu0 0
      %4612 = vmatmul.mubr.bf16.gmra.mxu0 %v2673
      %v4613 = vpop.f32.mrf.mxu0
      %v4614 = vadd.f32 0.0, %v4613
      %v4615 = vpop.f32.mrf.mxu0
      %v4616 = vpop.f32.mrf.mxu0
      %v4617 = vadd.f32 0.0, %v4616
      %v4618 = vpop.f32.mrf.mxu0
      %4619 = vmatprep.mubr.bf16.mxu0 0
      %4620 = vmatmul.mubr.bf16.gmra.mxu0 %v2676
      %v4621 = vpop.f32.mrf.mxu0
      %v4622 = vadd.f32 0.0, %v4621
      %v4623 = vpop.f32.mrf.mxu0
      %v4624 = vpop.f32.mrf.mxu0
      %v4625 = vadd.f32 0.0, %v4624
      %v4626 = vpop.f32.mrf.mxu0
      %4627 = vmatprep.mubr.bf16.mxu0 0
      %4628 = vmatmul.mubr.bf16.gmra.mxu0 %v2679
      %v4629 = vpop.f32.mrf.mxu0
      %v4630 = vadd.f32 0.0, %v4629
      %v4631 = vpop.f32.mrf.mxu0
      %v4632 = vpop.f32.mrf.mxu0
      %v4633 = vadd.f32 0.0, %v4632
      %v4634 = vpop.f32.mrf.mxu0
      %4635 = vdwg.mxu0
      %v4636 = vpack.c.bf16 %v4609, %v4606
      %v4637 = vpack.c.bf16 %v4617, %v4614
      %v4638 = vpack.c.bf16 %v4625, %v4622
      %v4639 = vpack.c.bf16 %v4633, %v4630
      %s4640 = scalar_lea.vmem %s4, 512
      %v4641 = vld [vmem:[%s4640] sm:$0xf]
      %v4642 = vld [vmem:[%s4640 + $0x4] sm:$0xf]
      %v4643 = vld [vmem:[%s4640 + $0x8] sm:$0xf]
      %v4644 = vld [vmem:[%s4640 + $0xc] sm:$0xf]
      %v4645 = vld [vmem:[%s4640 + $0x10] sm:$0xf]
      %v4646 = vld [vmem:[%s4640 + $0x14] sm:$0xf]
      %v4647 = vld [vmem:[%s4640 + $0x18] sm:$0xf]
      %v4648 = vld [vmem:[%s4640 + $0x1c] sm:$0xf]
      %v4649 = vld [vmem:[%s4640 + $0x20] sm:$0xf]
      %v4650 = vld [vmem:[%s4640 + $0x24] sm:$0xf]
      %v4651 = vld [vmem:[%s4640 + $0x28] sm:$0xf]
      %v4652 = vld [vmem:[%s4640 + $0x2c] sm:$0xf]
      %v4653 = vld [vmem:[%s4640 + $0x30] sm:$0xf]
      %v4654 = vld [vmem:[%s4640 + $0x34] sm:$0xf]
      %v4655 = vld [vmem:[%s4640 + $0x38] sm:$0xf]
      %v4656 = vld [vmem:[%s4640 + $0x3c] sm:$0xf]
      %v4673 = vunpack.c.l.b16 %v4641
      %v4674 = vunpack.c.l.b16 %v4642
      %v4675 = vunpack.c.l.b16 %v4643
      %v4676 = vunpack.c.l.b16 %v4644
      %v4677 = vunpack.c.l.b16 %v4645
      %v4678 = vunpack.c.l.b16 %v4646
      %v4679 = vunpack.c.l.b16 %v4647
      %v4680 = vunpack.c.l.b16 %v4648
      %v4681 = vunpack.c.l.b16 %v4649
      %v4682 = vunpack.c.l.b16 %v4650
      %v4683 = vunpack.c.l.b16 %v4651
      %v4684 = vunpack.c.l.b16 %v4652
      %v4685 = vunpack.c.l.b16 %v4653
      %v4686 = vunpack.c.l.b16 %v4654
      %v4687 = vunpack.c.l.b16 %v4655
      %v4688 = vunpack.c.l.b16 %v4656
      %v4689 = vpack.c.b16 %v4674, %v4673
      %v4690 = vpack.c.b16 %v4676, %v4675
      %v4691 = vpack.c.b16 %v4678, %v4677
      %v4692 = vpack.c.b16 %v4680, %v4679
      %v4693 = vpack.c.b16 %v4682, %v4681
      %v4694 = vpack.c.b16 %v4684, %v4683
      %v4695 = vpack.c.b16 %v4686, %v4685
      %v4696 = vpack.c.b16 %v4688, %v4687
      %4705 = vmatprep.subr.bf16.mxu0 0
      %4706 = vmatpush1.bf16.msra.mxu0 %v4696
      %4707 = vmatprep.subr.bf16.mxu0 0
      %4708 = vmatpush1.bf16.msra.mxu0 %v4695
      %4709 = vmatprep.subr.bf16.mxu0 0
      %4710 = vmatpush1.bf16.msra.mxu0 %v4694
      %4711 = vmatprep.subr.bf16.mxu0 0
      %4712 = vmatpush1.bf16.msra.mxu0 %v4693
      %4713 = vmatprep.subr.bf16.mxu0 0
      %4714 = vmatpush1.bf16.msra.mxu0 %v4692
      %4715 = vmatprep.subr.bf16.mxu0 0
      %4716 = vmatpush1.bf16.msra.mxu0 %v4691
      %4717 = vmatprep.subr.bf16.mxu0 0
      %4718 = vmatpush1.bf16.msra.mxu0 %v4690
      %4719 = vmatprep.subr.bf16.mxu0 0
      %4720 = vmatpush1.bf16.msra.mxu0 %v4689
      %4721 = vmatprep.subr.bf16.mxu0 0
      %4722 = vmatpush2.bf16.msra.mxu0 0
      %4723 = vmatprep.subr.bf16.mxu0 0
      %4724 = vmatpush2.bf16.msra.mxu0 0
      %4725 = vmatprep.subr.bf16.mxu0 0
      %4726 = vmatpush2.bf16.msra.mxu0 0
      %4727 = vmatprep.subr.bf16.mxu0 0
      %4728 = vmatpush2.bf16.msra.mxu0 0
      %4729 = vmatprep.subr.bf16.mxu0 0
      %4730 = vmatpush2.bf16.msra.mxu0 0
      %4731 = vmatprep.subr.bf16.mxu0 0
      %4732 = vmatpush2.bf16.msra.mxu0 0
      %4733 = vmatprep.subr.bf16.mxu0 0
      %4734 = vmatpush2.bf16.msra.mxu0 0
      %4735 = vmatprep.subr.bf16.mxu0 0
      %4736 = vmatpush2.bf16.msra.mxu0 0
      %4737 = vmatprep.mubr.bf16.mxu0 0
      %4738 = vmatmul.mubr.bf16.gmra.mxu0 %v4636
      %v4739 = vpop.f32.mrf.mxu0
      %v4740 = vadd.f32 0.0, %v4739
      %v4741 = vpop.f32.mrf.mxu0
      %v4742 = vpop.f32.mrf.mxu0
      %v4743 = vadd.f32 0.0, %v4742
      %v4744 = vpop.f32.mrf.mxu0
      %4745 = vmatprep.mubr.bf16.mxu0 0
      %4746 = vmatmul.mubr.bf16.gmra.mxu0 %v4637
      %v4747 = vpop.f32.mrf.mxu0
      %v4748 = vadd.f32 0.0, %v4747
      %v4749 = vpop.f32.mrf.mxu0
      %v4750 = vpop.f32.mrf.mxu0
      %v4751 = vadd.f32 0.0, %v4750
      %v4752 = vpop.f32.mrf.mxu0
      %4753 = vmatprep.mubr.bf16.mxu0 0
      %4754 = vmatmul.mubr.bf16.gmra.mxu0 %v4638
      %v4755 = vpop.f32.mrf.mxu0
      %v4756 = vadd.f32 0.0, %v4755
      %v4757 = vpop.f32.mrf.mxu0
      %v4758 = vpop.f32.mrf.mxu0
      %v4759 = vadd.f32 0.0, %v4758
      %v4760 = vpop.f32.mrf.mxu0
      %4761 = vmatprep.mubr.bf16.mxu0 0
      %4762 = vmatmul.mubr.bf16.gmra.mxu0 %v4639
      %v4763 = vpop.f32.mrf.mxu0
      %v4764 = vadd.f32 0.0, %v4763
      %v4765 = vpop.f32.mrf.mxu0
      %v4766 = vpop.f32.mrf.mxu0
      %v4767 = vadd.f32 0.0, %v4766
      %v4768 = vpop.f32.mrf.mxu0
      %4769 = vdwg.mxu0
      %v4770 = vadd.f32 %v4563, %v4740
      %v4771 = vadd.f32 %v4564, %v4743
      %v4772 = vadd.f32 %v4565, %v4748
      %v4773 = vadd.f32 %v4566, %v4751
      %v4774 = vadd.f32 %v4567, %v4756
      %v4775 = vadd.f32 %v4568, %v4759
      %v4776 = vadd.f32 %v4569, %v4764
      %v4777 = vadd.f32 %v4570, %v4767
      %s4778 = scalar_lea.vmem %s5, 4
      %v4779 = vld [vmem:[%s4778] sm:$0x1]
      %v4781 = vlaneseq
      %v4782 = vshrl.u32 %v4781, 7
      %v4783 = vsub.s32 0, %v4782
      %v4784 = vrot.slane %v4779, %v4783
      %v4786 = vmul.f32 %v4770, %v4784
      %v4787 = vmul.f32 %v4771, %v4784
      %v4788 = vmul.f32 %v4772, %v4784
      %v4789 = vmul.f32 %v4773, %v4784
      %v4790 = vmul.f32 %v4774, %v4784
      %v4791 = vmul.f32 %v4775, %v4784
      %v4792 = vmul.f32 %v4776, %v4784
      %v4793 = vmul.f32 %v4777, %v4784
      %s4794 = scalar_lea.vmem %s5, 5
      %v4795 = vld [vmem:[%s4794] sm:$0x1]
      %v4797 = vlaneseq
      %v4798 = vshrl.u32 %v4797, 7
      %v4799 = vsub.s32 0, %v4798
      %v4800 = vrot.slane %v4795, %v4799
      %v4802 = vadd.f32 %v4786, %v4800
      %v4803 = vadd.f32 %v4787, %v4800
      %v4804 = vadd.f32 %v4788, %v4800
      %v4805 = vadd.f32 %v4789, %v4800
      %v4806 = vadd.f32 %v4790, %v4800
      %v4807 = vadd.f32 %v4791, %v4800
      %v4808 = vadd.f32 %v4792, %v4800
      %v4809 = vadd.f32 %v4793, %v4800
      %v4810 = vadd.f32 %v4802, %v661
      %v4811 = vadd.f32 %v4803, %v662
      %v4812 = vadd.f32 %v4804, %v663
      %v4813 = vadd.f32 %v4805, %v664
      %v4814 = vadd.f32 %v4806, %v665
      %v4815 = vadd.f32 %v4807, %v666
      %v4816 = vadd.f32 %v4808, %v667
      %v4817 = vadd.f32 %v4809, %v668
      %v4818 = vmax.f32 %v4810, 0.0
      %v4819 = vmax.f32 %v4811, 0.0
      %v4820 = vmax.f32 %v4812, 0.0
      %v4821 = vmax.f32 %v4813, 0.0
      %v4822 = vmax.f32 %v4814, 0.0
      %v4823 = vmax.f32 %v4815, 0.0
      %v4824 = vmax.f32 %v4816, 0.0
      %v4825 = vmax.f32 %v4817, 0.0
      %v4826 = vadd.f32 %v661, %v4818
      %v4827 = vadd.f32 %v662, %v4819
      %v4828 = vadd.f32 %v663, %v4820
      %v4829 = vadd.f32 %v664, %v4821
      %v4830 = vadd.f32 %v665, %v4822
      %v4831 = vadd.f32 %v666, %v4823
      %v4832 = vadd.f32 %v667, %v4824
      %v4833 = vadd.f32 %v668, %v4825
      %4834 = vst [vmem:[%s251] sm:$0xff] %v4826
      %4835 = vst [vmem:[%s251 + $0x8] sm:$0xff] %v4827
      %4836 = vst [vmem:[%s251 + $0x10] sm:$0xff] %v4828
      %4837 = vst [vmem:[%s251 + $0x18] sm:$0xff] %v4829
      %4838 = vst [vmem:[%s251 + $0x20] sm:$0xff] %v4830
      %4839 = vst [vmem:[%s251 + $0x28] sm:$0xff] %v4831
      %4840 = vst [vmem:[%s251 + $0x30] sm:$0xff] %v4832
      %4841 = vst [vmem:[%s251 + $0x38] sm:$0xff] %v4833
      %p4842 = scmp.lt.s32.totalorder %s17, 1
      %s4843 = scalar_select %p4842, %s17, 1
      %s4844 = smul.addr %s4843, 8
      %s4845 = smul.addr %s4844, 8
      %s4846 = scalar_lea.vmem %s6, %s4845
      // Predicated region
      $region45: #{custom_block_forward.1} parent=43 // pred_check
        %p4847 = pneg %p166
      $region46: #{custom_block_forward.1} parent=43 // pred_check_branch
        %4849 = sbr.rel (%p4847) target = $region48
      $region47: #{custom_block_forward.1} parent=43 // pred_region
        _
      $region48: #{custom_block_forward.1} parent=43 // pred_fallthru
        _
    $region44: #{custom_block_forward.1} parent=5 // pred_fallthru
      _
    %p4850 = scmp.le.s32.totalorder 2, %s12
    // Predicated region
    $region49: #{custom_block_forward.1} parent=5 // pred_check
      %p4851 = pneg %p4850
    $region50: #{custom_block_forward.1} parent=5 // pred_check_branch
      %4853 = sbr.rel (%p4851) target = $region52
    $region51: #{custom_block_forward.1} parent=5 // pred_region
      %s4854 = ssub.s32 %s12, 2
      // Predicated region
      $region53: #{custom_block_forward.1} parent=51 // pred_check
        %p4855 = pneg %p172
      $region54: #{custom_block_forward.1} parent=51 // pred_check_branch
        %4857 = sbr.rel (%p4855) target = $region56
      $region55: #{custom_block_forward.1} parent=51 // pred_region
        %p4858 = scmp.lt.s32.totalorder %s18, 1
        %s4859 = scalar_select %p4858, %s18, 1
        %s4860 = smul.addr %s4859, 8
        %s4861 = smul.addr %s4860, 8
        %s4862 = scalar_lea.vmem %s6, %s4861
      $region56: #{custom_block_forward.1} parent=51 // pred_fallthru
        _
    $region52: #{custom_block_forward.1} parent=5 // pred_fallthru
      _
  $region6: #{custom_block_forward.1} parent=0 // loop_footer
    %s16 = sadd.s32 1, %s12
  $region7: #{custom_block_forward.1} parent=0 // loop_footer_branch
    %11 = sbr.rel target = $region3
  $region8: #{custom_block_forward.1} parent=0 // loop_exit
    _

</llo_original>
